<compile_context>
chip_gen: v5e
topology: v5e:2x2
jax: 0.10.0
libtpu: 0.0.40
codegen_flags: <defaults>
</compile_context>

<pallas_src>
import jax
import jax.numpy as jnp
from jax.experimental import pallas as pl
from jax.experimental.pallas import tpu as pltpu

IMG_FEATS = 784          # 1 * 28 * 28
EMB_FEATS = 10
EMB_PAD = 128            # label-embedding columns padded to one lane tile
HID = 512
LRELU_SLOPE = 0.2


def _round_up(x, m):
    return (x + m - 1) // m * m


def _epilogue_dtype():
    """bf16 epilogue on chips with a bf16 VPU (v6e / v7x); f32 on v5e & older."""
    try:
        kind = jax.devices()[0].device_kind.lower()
    except Exception:
        return jnp.float32
    for old in ("v2", "v3", "v4", "v5"):
        if old in kind:
            return jnp.float32
    return jnp.bfloat16


def make_discriminator_kernel(tb, num_subtiles, ep_dtype):
    """Kernel factory: tile size / sub-tile split / epilogue dtype are static."""
    sub = tb // num_subtiles

    def kernel(img_ref, emb_ref,
               w1a_ref, w1b_ref, b1_ref,
               w2_ref, b2_ref,
               w3_ref, b3_ref,
               w4_ref, b4_ref,
               w5_ref, b5_ref,
               out_ref):
        # Hoist resident weights/biases once per grid step (reused by both
        # sub-chains; JAX does not CSE broadcasts inside loops).
        w1a = w1a_ref[...]                               # (784, 512) bf16
        w1b = w1b_ref[...]                               # (128, 512) bf16
        b1 = b1_ref[...].astype(ep_dtype)                # (1, 512)
        w2 = w2_ref[...]; b2 = b2_ref[...].astype(ep_dtype)
        w3 = w3_ref[...]; b3 = b3_ref[...].astype(ep_dtype)
        w4 = w4_ref[...]; b4 = b4_ref[...].astype(ep_dtype)
        w5 = w5_ref[...]                                 # (1, 512) f32
        b5 = b5_ref[...]                                 # (1, 1)   f32

        def act(acc_f32, b):
            # bias + LeakyReLU(0.2); max-form (2 VALU ops) instead of where (3).
            h = acc_f32.astype(ep_dtype) + b
            return jnp.maximum(h, LRELU_SLOPE * h)

        # Static unroll: independent sub-tile chains in one basic block so the
        # scheduler can overlap MXU pushes of one chain with the VPU epilogue
        # of the other.
        for s in range(num_subtiles):
            r = pl.ds(s * sub, sub)
            x_img = img_ref[r, :].astype(jnp.bfloat16)   # (sub, 784)
            x_emb = emb_ref[r, :].astype(jnp.bfloat16)   # (sub, 128)

            # Linear(794 -> 512) split as img-part + padded-embedding-part.
            a1 = jnp.dot(x_img, w1a, preferred_element_type=jnp.float32)
            a1 = a1 + jnp.dot(x_emb, w1b, preferred_element_type=jnp.float32)
            h = act(a1, b1)

            # Linear(512, 512) + [Dropout eval] + LeakyReLU(0.2)  x3
            h = act(jnp.dot(h.astype(jnp.bfloat16), w2,
                            preferred_element_type=jnp.float32), b2)
            h = act(jnp.dot(h.astype(jnp.bfloat16), w3,
                            preferred_element_type=jnp.float32), b3)
            h = act(jnp.dot(h.astype(jnp.bfloat16), w4,
                            preferred_element_type=jnp.float32), b4)

            # Linear(512, 1): VPU multiply + lane reduction (skip N=1 MXU matmul).
            v = jnp.sum(h.astype(jnp.float32) * w5, axis=-1, keepdims=True) + b5
            out_ref[r, :] = v.astype(out_ref.dtype)

    return kernel


def make_params(key):
    """Deterministic f32 parameters (shapes match Discriminator.__init__)."""
    ks = jax.random.split(key, 11)

    def lin(kw, kb, fan_in, fan_out):
        # PyTorch nn.Linear default: U(-1/sqrt(fan_in), 1/sqrt(fan_in))
        bound = 1.0 / jnp.sqrt(float(fan_in))
        w = jax.random.uniform(kw, (fan_in, fan_out), jnp.float32, -bound, bound)
        b = jax.random.uniform(kb, (1, fan_out), jnp.float32, -bound, bound)
        return w, b

    emb = jax.random.normal(ks[0], (10, 10), jnp.float32)   # nn.Embedding(10,10)
    w1, b1 = lin(ks[1], ks[2], IMG_FEATS + EMB_FEATS, HID)
    w2, b2 = lin(ks[3], ks[4], HID, HID)
    w3, b3 = lin(ks[5], ks[6], HID, HID)
    w4, b4 = lin(ks[7], ks[8], HID, 1 * HID)
    w5, b5 = lin(ks[9], ks[10], HID, 1)
    return dict(emb=emb, w1=w1, b1=b1, w2=w2, b2=b2, w3=w3, b3=b3,
                w4=w4, b4=b4, w5=w5, b5=b5)


def prepare_kernel_params(params):
    """Split/pad w1, cast weights to bf16; biases stay f32 (cast in-kernel)."""
    kp = dict(emb=params["emb"])
    w1 = params["w1"]                                        # (794, 512) f32
    kp["w1_img"] = w1[:IMG_FEATS].astype(jnp.bfloat16)       # (784, 512)
    kp["w1_emb"] = jnp.pad(w1[IMG_FEATS:],                   # (128, 512), rows 10.. zero
                           ((0, EMB_PAD - EMB_FEATS), (0, 0))).astype(jnp.bfloat16)
    kp["b1"] = params["b1"]
    for i in (2, 3, 4):
        kp[f"w{i}"] = params[f"w{i}"].astype(jnp.bfloat16)
        kp[f"b{i}"] = params[f"b{i}"]
    kp["w5_row"] = params["w5"].T          # (1, 512) f32
    kp["b5"] = params["b5"]                # (1, 1)   f32
    return kp


@jax.jit
def discriminator_forward(img, labels, kparams):
    B = img.shape[0]

    # Glue kept minimal: free reshape of the NCHW image; tiny embedding gather
    # padded to one lane tile.  No (B, 896) concat round-trip through HBM.
    img2d = img.reshape(B, IMG_FEATS).astype(jnp.float32)           # (B, 784)
    emb = jnp.take(kparams["emb"], labels, axis=0)                  # (B, 10)
    emb = jnp.pad(emb, ((0, 0), (0, EMB_PAD - EMB_FEATS)))          # (B, 128)

    # Batch tile: amortize per-grid-step overhead at large B while keeping the
    # grid >= 2 steps whenever B >= 256 (both v7x TensorCores busy).
    if B >= 1024:
        TB = 512
    elif B >= 512:
        TB = 256
    elif B >= 256:
        TB = 128
    else:
        TB = _round_up(B, 8)
    Bp = _round_up(B, TB)
    if Bp != B:
        img2d = jnp.pad(img2d, ((0, Bp - B), (0, 0)))
        emb = jnp.pad(emb, ((0, Bp - B), (0, 0)))

    num_subtiles = 2 if TB >= 256 else 1
    ep_dtype = _epilogue_dtype()
    kernel = make_discriminator_kernel(TB, num_subtiles, ep_dtype)

    grid = (Bp // TB,)

    # Resident (index_map -> (0,0)) weight/bias specs: loaded into VMEM once,
    # reused across all batch tiles.
    def resident(shape):
        return pl.BlockSpec(shape, lambda i: (0, 0))

    in_specs = [
        pl.BlockSpec((TB, IMG_FEATS), lambda i: (i, 0)),     # image rows (f32)
        pl.BlockSpec((TB, EMB_PAD), lambda i: (i, 0)),       # padded label embedding
        resident((IMG_FEATS, HID)),                          # w1_img
        resident((EMB_PAD, HID)),                            # w1_emb
        resident((1, HID)),                                  # b1
        resident((HID, HID)), resident((1, HID)),            # w2, b2
        resident((HID, HID)), resident((1, HID)),            # w3, b3
        resident((HID, HID)), resident((1, HID)),            # w4, b4
        resident((1, HID)), resident((1, 1)),                # w5_row, b5
    ]
    out_spec = pl.BlockSpec((TB, 1), lambda i: (i, 0))

    validity = pl.pallas_call(
        kernel,
        out_shape=jax.ShapeDtypeStruct((Bp, 1), jnp.float32),
        grid=grid,
        in_specs=in_specs,
        out_specs=out_spec,
        compiler_params=pltpu.CompilerParams(
            dimension_semantics=("parallel",),   # megacore-shards batch tiles on v7x
            vmem_limit_bytes=32 * 1024 * 1024,   # headroom for TB=512 on v5e defaults
        ),
    )(img2d, emb,
      kparams["w1_img"], kparams["w1_emb"], kparams["b1"],
      kparams["w2"], kparams["b2"],
      kparams["w3"], kparams["b3"],
      kparams["w4"], kparams["b4"],
      kparams["w5_row"], kparams["b5"])

    return validity[:B]


def reference_forward(img, labels, params):
    """Plain-JAX f32 reference for a sanity check."""
    def lrelu(x):
        return jnp.where(x > 0, x, LRELU_SLOPE * x)
    B = img.shape[0]
    x = jnp.concatenate([img.reshape(B, -1).astype(jnp.float32),
                         jnp.take(params["emb"], labels, axis=0)], axis=-1)
    h = lrelu(x @ params["w1"] + params["b1"])
    h = lrelu(h @ params["w2"] + params["b2"])
    h = lrelu(h @ params["w3"] + params["b3"])
    h = lrelu(h @ params["w4"] + params["b4"])
    return h @ params["w5"] + params["b5"]


if __name__ == "__main__":
    key = jax.random.PRNGKey(0)
    k_img, k_lbl, k_par = jax.random.split(key, 3)

    B = 8
    img = jax.random.normal(k_img, (B, 1, 28, 28), jnp.float32)   # NCHW like PyTorch
    labels = jax.random.randint(k_lbl, (B,), 0, 10, jnp.int32)
    params = make_params(k_par)
    kparams = prepare_kernel_params(params)

    out = discriminator_forward(img, labels, kparams)
    out = jax.block_until_ready(out)

    ref = reference_forward(img, labels, params)
    assert out.shape == (B, 1)
    # bf16 matmul inputs / (possibly) bf16 epilogue with f32 accumulation ->
    # loosened tolerance vs the f32 reference.
    assert jnp.allclose(out, ref, atol=5e-2, rtol=5e-2), "mismatch vs reference"

    print("KERNEL_OK")
</pallas_src>

<mosaic_0001>
module attributes {stable_mosaic.version = 11 : i64} {
  func.func @kernel(%arg0: i32, %arg1: memref<8x784xf32, #tpu.memory_space<vmem>>, %arg2: memref<8x128xf32, #tpu.memory_space<vmem>>, %arg3: memref<784x512xbf16, #tpu.memory_space<vmem>>, %arg4: memref<128x512xbf16, #tpu.memory_space<vmem>>, %arg5: memref<1x512xf32, #tpu.memory_space<vmem>>, %arg6: memref<512x512xbf16, #tpu.memory_space<vmem>>, %arg7: memref<1x512xf32, #tpu.memory_space<vmem>>, %arg8: memref<512x512xbf16, #tpu.memory_space<vmem>>, %arg9: memref<1x512xf32, #tpu.memory_space<vmem>>, %arg10: memref<512x512xbf16, #tpu.memory_space<vmem>>, %arg11: memref<1x512xf32, #tpu.memory_space<vmem>>, %arg12: memref<1x512xf32, #tpu.memory_space<vmem>>, %arg13: memref<1x1xf32, #tpu.memory_space<vmem>>, %arg14: memref<8x1xf32, #tpu.memory_space<vmem>>) attributes {dimension_semantics = [#tpu.dimension_semantics<parallel>], iteration_bounds = array<i64: 1>, scalar_prefetch = 0 : i64, scratch_operands = 0 : i64, tpu.core_type = #tpu.core_type<tc>, window_params = [{transform_indices = @transform_0, window_bounds = array<i64: 8, 784>}, {transform_indices = @transform_1, window_bounds = array<i64: 8, 128>}, {pipeline_mode = #tpu.pipeline_mode<synchronous>, transform_indices = @transform_2, window_bounds = array<i64: 784, 512>}, {pipeline_mode = #tpu.pipeline_mode<synchronous>, transform_indices = @transform_3, window_bounds = array<i64: 128, 512>}, {pipeline_mode = #tpu.pipeline_mode<synchronous>, transform_indices = @transform_4, window_bounds = array<i64: 1, 512>}, {pipeline_mode = #tpu.pipeline_mode<synchronous>, transform_indices = @transform_5, window_bounds = array<i64: 512, 512>}, {pipeline_mode = #tpu.pipeline_mode<synchronous>, transform_indices = @transform_6, window_bounds = array<i64: 1, 512>}, {pipeline_mode = #tpu.pipeline_mode<synchronous>, transform_indices = @transform_7, window_bounds = array<i64: 512, 512>}, {pipeline_mode = #tpu.pipeline_mode<synchronous>, transform_indices = @transform_8, window_bounds = array<i64: 1, 512>}, {pipeline_mode = #tpu.pipeline_mode<synchronous>, transform_indices = @transform_9, window_bounds = array<i64: 512, 512>}, {pipeline_mode = #tpu.pipeline_mode<synchronous>, transform_indices = @transform_10, window_bounds = array<i64: 1, 512>}, {pipeline_mode = #tpu.pipeline_mode<synchronous>, transform_indices = @transform_11, window_bounds = array<i64: 1, 512>}, {pipeline_mode = #tpu.pipeline_mode<synchronous>, transform_indices = @transform_12, window_bounds = array<i64: 1, 1>}, {transform_indices = @transform_13, window_bounds = array<i64: 8, 1>}]} {
    %c0 = arith.constant 0 : index
    %c0_0 = arith.constant 0 : index
    %0 = vector.load %arg3[%c0, %c0_0] : memref<784x512xbf16, #tpu.memory_space<vmem>>, vector<784x512xbf16>
    %c0_1 = arith.constant 0 : index
    %c0_2 = arith.constant 0 : index
    %1 = vector.load %arg4[%c0_1, %c0_2] : memref<128x512xbf16, #tpu.memory_space<vmem>>, vector<128x512xbf16>
    %c0_3 = arith.constant 0 : index
    %c0_4 = arith.constant 0 : index
    %2 = vector.load %arg5[%c0_3, %c0_4] : memref<1x512xf32, #tpu.memory_space<vmem>>, vector<1x512xf32>
    %3 = arith.truncf %2 : vector<1x512xf32> to vector<1x512xbf16>
    %c0_5 = arith.constant 0 : index
    %c0_6 = arith.constant 0 : index
    %4 = vector.load %arg6[%c0_5, %c0_6] : memref<512x512xbf16, #tpu.memory_space<vmem>>, vector<512x512xbf16>
    %c0_7 = arith.constant 0 : index
    %c0_8 = arith.constant 0 : index
    %5 = vector.load %arg7[%c0_7, %c0_8] : memref<1x512xf32, #tpu.memory_space<vmem>>, vector<1x512xf32>
    %6 = arith.truncf %5 : vector<1x512xf32> to vector<1x512xbf16>
    %c0_9 = arith.constant 0 : index
    %c0_10 = arith.constant 0 : index
    %7 = vector.load %arg8[%c0_9, %c0_10] : memref<512x512xbf16, #tpu.memory_space<vmem>>, vector<512x512xbf16>
    %c0_11 = arith.constant 0 : index
    %c0_12 = arith.constant 0 : index
    %8 = vector.load %arg9[%c0_11, %c0_12] : memref<1x512xf32, #tpu.memory_space<vmem>>, vector<1x512xf32>
    %9 = arith.truncf %8 : vector<1x512xf32> to vector<1x512xbf16>
    %c0_13 = arith.constant 0 : index
    %c0_14 = arith.constant 0 : index
    %10 = vector.load %arg10[%c0_13, %c0_14] : memref<512x512xbf16, #tpu.memory_space<vmem>>, vector<512x512xbf16>
    %c0_15 = arith.constant 0 : index
    %c0_16 = arith.constant 0 : index
    %11 = vector.load %arg11[%c0_15, %c0_16] : memref<1x512xf32, #tpu.memory_space<vmem>>, vector<1x512xf32>
    %12 = arith.truncf %11 : vector<1x512xf32> to vector<1x512xbf16>
    %c0_17 = arith.constant 0 : index
    %c0_18 = arith.constant 0 : index
    %13 = vector.load %arg12[%c0_17, %c0_18] : memref<1x512xf32, #tpu.memory_space<vmem>>, vector<1x512xf32>
    %c0_19 = arith.constant 0 : index
    %c0_20 = arith.constant 0 : index
    %14 = vector.load %arg13[%c0_19, %c0_20] : memref<1x1xf32, #tpu.memory_space<vmem>>, vector<1x1xf32>
    %c0_21 = arith.constant 0 : index
    %c0_22 = arith.constant 0 : index
    %15 = vector.load %arg1[%c0_21, %c0_22] : memref<8x784xf32, #tpu.memory_space<vmem>>, vector<8x784xf32>
    %16 = arith.truncf %15 : vector<8x784xf32> to vector<8x784xbf16>
    %c0_23 = arith.constant 0 : index
    %c0_24 = arith.constant 0 : index
    %17 = vector.load %arg2[%c0_23, %c0_24] : memref<8x128xf32, #tpu.memory_space<vmem>>, vector<8x128xf32>
    %18 = arith.truncf %17 : vector<8x128xf32> to vector<8x128xbf16>
    %cst = arith.constant dense<0.000000e+00> : vector<8x512xf32>
    %19 = tpu.matmul %16, %0, %cst {dimension_numbers = #tpu.dot_dimension_numbers<[1], [0], [0], [1], [0, 0, 1, 1], [], []>} : vector<8x784xbf16>, vector<784x512xbf16>, vector<8x512xf32> -> vector<8x512xf32>
    %cst_25 = arith.constant dense<0.000000e+00> : vector<8x512xf32>
    %20 = tpu.matmul %18, %1, %cst_25 {dimension_numbers = #tpu.dot_dimension_numbers<[1], [0], [0], [1], [0, 0, 1, 1], [], []>} : vector<8x128xbf16>, vector<128x512xbf16>, vector<8x512xf32> -> vector<8x512xf32>
    %21 = arith.addf %19, %20 : vector<8x512xf32>
    %22 = arith.truncf %21 : vector<8x512xf32> to vector<8x512xbf16>
    %23 = vector.broadcast %3 : vector<1x512xbf16> to vector<8x512xbf16>
    %24 = arith.addf %22, %23 : vector<8x512xbf16>
    %cst_26 = arith.constant 2.001950e-01 : bf16
    %25 = vector.broadcast %cst_26 : bf16 to vector<8x512xbf16>
    %26 = arith.mulf %25, %24 : vector<8x512xbf16>
    %27 = arith.maximumf %24, %26 : vector<8x512xbf16>
    %cst_27 = arith.constant dense<0.000000e+00> : vector<8x512xf32>
    %28 = tpu.matmul %27, %4, %cst_27 {dimension_numbers = #tpu.dot_dimension_numbers<[1], [0], [0], [1], [0, 0, 1, 1], [], []>} : vector<8x512xbf16>, vector<512x512xbf16>, vector<8x512xf32> -> vector<8x512xf32>
    %29 = arith.truncf %28 : vector<8x512xf32> to vector<8x512xbf16>
    %30 = vector.broadcast %6 : vector<1x512xbf16> to vector<8x512xbf16>
    %31 = arith.addf %29, %30 : vector<8x512xbf16>
    %cst_28 = arith.constant 2.001950e-01 : bf16
    %32 = vector.broadcast %cst_28 : bf16 to vector<8x512xbf16>
    %33 = arith.mulf %32, %31 : vector<8x512xbf16>
    %34 = arith.maximumf %31, %33 : vector<8x512xbf16>
    %cst_29 = arith.constant dense<0.000000e+00> : vector<8x512xf32>
    %35 = tpu.matmul %34, %7, %cst_29 {dimension_numbers = #tpu.dot_dimension_numbers<[1], [0], [0], [1], [0, 0, 1, 1], [], []>} : vector<8x512xbf16>, vector<512x512xbf16>, vector<8x512xf32> -> vector<8x512xf32>
    %36 = arith.truncf %35 : vector<8x512xf32> to vector<8x512xbf16>
    %37 = vector.broadcast %9 : vector<1x512xbf16> to vector<8x512xbf16>
    %38 = arith.addf %36, %37 : vector<8x512xbf16>
    %cst_30 = arith.constant 2.001950e-01 : bf16
    %39 = vector.broadcast %cst_30 : bf16 to vector<8x512xbf16>
    %40 = arith.mulf %39, %38 : vector<8x512xbf16>
    %41 = arith.maximumf %38, %40 : vector<8x512xbf16>
    %cst_31 = arith.constant dense<0.000000e+00> : vector<8x512xf32>
    %42 = tpu.matmul %41, %10, %cst_31 {dimension_numbers = #tpu.dot_dimension_numbers<[1], [0], [0], [1], [0, 0, 1, 1], [], []>} : vector<8x512xbf16>, vector<512x512xbf16>, vector<8x512xf32> -> vector<8x512xf32>
    %43 = arith.truncf %42 : vector<8x512xf32> to vector<8x512xbf16>
    %44 = vector.broadcast %12 : vector<1x512xbf16> to vector<8x512xbf16>
    %45 = arith.addf %43, %44 : vector<8x512xbf16>
    %cst_32 = arith.constant 2.001950e-01 : bf16
    %46 = vector.broadcast %cst_32 : bf16 to vector<8x512xbf16>
    %47 = arith.mulf %46, %45 : vector<8x512xbf16>
    %48 = arith.maximumf %45, %47 : vector<8x512xbf16>
    %49 = arith.extf %48 : vector<8x512xbf16> to vector<8x512xf32>
    %50 = vector.broadcast %13 : vector<1x512xf32> to vector<8x512xf32>
    %51 = arith.mulf %49, %50 : vector<8x512xf32>
    %cst_33 = arith.constant dense<0.000000e+00> : vector<8xf32>
    %52 = vector.multi_reduction <add>, %51, %cst_33 [1] : vector<8x512xf32> to vector<8xf32>
    %53 = vector.shape_cast %52 : vector<8xf32> to vector<8x1xf32>
    %54 = vector.broadcast %14 : vector<1x1xf32> to vector<8x1xf32>
    %55 = arith.addf %53, %54 : vector<8x1xf32>
    %c0_34 = arith.constant 0 : index
    %c0_35 = arith.constant 0 : index
    %56 = vector.load %arg14[%c0_34, %c0_35] : memref<8x1xf32, #tpu.memory_space<vmem>>, vector<8x1xf32>
    tpu.vector_store %arg14[%c0_34, %c0_35], %55 {strides = array<i32>} : memref<8x1xf32, #tpu.memory_space<vmem>>, vector<8x1xf32>,
    return
  }
  func.func @transform_0(%arg0: i32) -> (i32, i32) {
    %c0_i32 = arith.constant 0 : i32
    %c0_i32_0 = arith.constant 0 : i32
    return %arg0, %c0_i32 : i32, i32
  }
  func.func @transform_1(%arg0: i32) -> (i32, i32) {
    %c0_i32 = arith.constant 0 : i32
    %c0_i32_0 = arith.constant 0 : i32
    return %arg0, %c0_i32 : i32, i32
  }
  func.func @transform_2(%arg0: i32) -> (i32, i32) {
    %c0_i32 = arith.constant 0 : i32
    %c0_i32_0 = arith.constant 0 : i32
    %c0_i32_1 = arith.constant 0 : i32
    return %c0_i32, %c0_i32_0 : i32, i32
  }
  func.func @transform_3(%arg0: i32) -> (i32, i32) {
    %c0_i32 = arith.constant 0 : i32
    %c0_i32_0 = arith.constant 0 : i32
    %c0_i32_1 = arith.constant 0 : i32
    return %c0_i32, %c0_i32_0 : i32, i32
  }
  func.func @transform_4(%arg0: i32) -> (i32, i32) {
    %c0_i32 = arith.constant 0 : i32
    %c0_i32_0 = arith.constant 0 : i32
    %c0_i32_1 = arith.constant 0 : i32
    return %c0_i32, %c0_i32_0 : i32, i32
  }
  func.func @transform_5(%arg0: i32) -> (i32, i32) {
    %c0_i32 = arith.constant 0 : i32
    %c0_i32_0 = arith.constant 0 : i32
    %c0_i32_1 = arith.constant 0 : i32
    return %c0_i32, %c0_i32_0 : i32, i32
  }
  func.func @transform_6(%arg0: i32) -> (i32, i32) {
    %c0_i32 = arith.constant 0 : i32
    %c0_i32_0 = arith.constant 0 : i32
    %c0_i32_1 = arith.constant 0 : i32
    return %c0_i32, %c0_i32_0 : i32, i32
  }
  func.func @transform_7(%arg0: i32) -> (i32, i32) {
    %c0_i32 = arith.constant 0 : i32
    %c0_i32_0 = arith.constant 0 : i32
    %c0_i32_1 = arith.constant 0 : i32
    return %c0_i32, %c0_i32_0 : i32, i32
  }
  func.func @transform_8(%arg0: i32) -> (i32, i32) {
    %c0_i32 = arith.constant 0 : i32
    %c0_i32_0 = arith.constant 0 : i32
    %c0_i32_1 = arith.constant 0 : i32
    return %c0_i32, %c0_i32_0 : i32, i32
  }
  func.func @transform_9(%arg0: i32) -> (i32, i32) {
    %c0_i32 = arith.constant 0 : i32
    %c0_i32_0 = arith.constant 0 : i32
    %c0_i32_1 = arith.constant 0 : i32
    return %c0_i32, %c0_i32_0 : i32, i32
  }
  func.func @transform_10(%arg0: i32) -> (i32, i32) {
    %c0_i32 = arith.constant 0 : i32
    %c0_i32_0 = arith.constant 0 : i32
    %c0_i32_1 = arith.constant 0 : i32
    return %c0_i32, %c0_i32_0 : i32, i32
  }
  func.func @transform_11(%arg0: i32) -> (i32, i32) {
    %c0_i32 = arith.constant 0 : i32
    %c0_i32_0 = arith.constant 0 : i32
    %c0_i32_1 = arith.constant 0 : i32
    return %c0_i32, %c0_i32_0 : i32, i32
  }
  func.func @transform_12(%arg0: i32) -> (i32, i32) {
    %c0_i32 = arith.constant 0 : i32
    %c0_i32_0 = arith.constant 0 : i32
    %c0_i32_1 = arith.constant 0 : i32
    return %c0_i32, %c0_i32_0 : i32, i32
  }
  func.func @transform_13(%arg0: i32) -> (i32, i32) {
    %c0_i32 = arith.constant 0 : i32
    %c0_i32_0 = arith.constant 0 : i32
    return %arg0, %c0_i32 : i32, i32
  }
}

</mosaic_0001>

<llo_original>
// kernel: discriminator_forward.1
$region0: #{discriminator_forward.1}
  #allocation0 [shape = 'u32[]', space=smem, size = 0x4, offset = 0x4, fixed_abs, tag = 'smem constant byte address 0x4 - core index']
  #allocation1 [shape = 'u32[72,128]{1,0:T(1,128)}', space=vmem, size = 0x9000, scoped, tag = 'internal scratch']
  #allocation2 [shape = 'f32[1,1]{1,0:T(1,128)S(1)}', space=vmem, size = 0x200, scoped, tag = 'scoped memory for discriminator_forward.1']
  %s0 = inlined_call_operand.vmem [shape: f32[8,784], index: 0, kind: input, shape index: {}]
  %s1 = inlined_call_operand.vmem [shape: f32[8,128], index: 1, kind: input, shape index: {}]
  %s2 = inlined_call_operand.hbm [shape: bf16[784,512], index: 2, kind: input, shape index: {}]
  %s3 = inlined_call_operand.vmem [shape: bf16[128,512], index: 3, kind: input, shape index: {}]
  %s4 = inlined_call_operand.vmem [shape: f32[1,512], index: 4, kind: input, shape index: {}]
  %s5 = inlined_call_operand.hbm [shape: bf16[512,512], index: 5, kind: input, shape index: {}]
  %s6 = inlined_call_operand.vmem [shape: f32[1,512], index: 6, kind: input, shape index: {}]
  %s7 = inlined_call_operand.hbm [shape: bf16[512,512], index: 7, kind: input, shape index: {}]
  %s8 = inlined_call_operand.vmem [shape: f32[1,512], index: 8, kind: input, shape index: {}]
  %s9 = inlined_call_operand.hbm [shape: bf16[512,512], index: 9, kind: input, shape index: {}]
  %s10 = inlined_call_operand.vmem [shape: f32[1,512], index: 10, kind: input, shape index: {}]
  %s11 = inlined_call_operand.vmem [shape: f32[1,512], index: 11, kind: input, shape index: {}]
  %s12 = inlined_call_operand.<no memory space> [shape: f32[1,1], index: 12, kind: input, shape index: {}]
  %s13 = inlined_call_operand.vmem [shape: f32[8,1], index: 13, kind: output, shape index: {}]
  %s14 = sld [smem:[#allocation0]]
  $region78: #{discriminator_forward.1} parent=0
    _
  %s16 = ssub.s32 1, %s14
  %s17 = scalar_select 0, %s16, %s14
  %v18 = vstv %s12
  %19 = vst [vmem:[#allocation2] sm:$0x1] %v18
  $region1: #{discriminator_forward.1} parent=0
    #allocation3 [shape = 'u8[802816]{0}', space=vmem, size = 0xc4000, scoped, tag = 'input window, operand 2, single buffered']
    #allocation4 [shape = 's32[1]{0}', space=sflag, size = 0x4, scoped, tag = 'scoped memory for discriminator_forward.1']
    #allocation5 [shape = 'u8[524288]{0}', space=vmem, size = 0x80000, scoped, tag = 'input window, operand 5, single buffered']
    #allocation6 [shape = 's32[1]{0}', space=sflag, size = 0x4, scoped, tag = 'scoped memory for discriminator_forward.1']
    #allocation7 [shape = 'u8[524288]{0}', space=vmem, size = 0x80000, scoped, tag = 'input window, operand 7, single buffered']
    #allocation8 [shape = 'u8[524288]{0}', space=vmem, size = 0x80000, scoped, tag = 'input window, operand 9, single buffered']
    #allocation9 [shape = 's32[1]{0}', space=sflag, size = 0x4, scoped, tag = 'scoped memory for discriminator_forward.1']
    %20 = vsyncpa [#allocation4], 0
    %21 = vsyncpa [#allocation6], 0
    %22 = vsyncpa [#allocation9], 0
    // Predicated region
    $region2: #{discriminator_forward.1} parent=1 // pred_check
      _
    $region3: #{discriminator_forward.1} parent=1 // pred_check_branch
      %24 = sbr.rel (0) target = $region5
    $region4: #{discriminator_forward.1} parent=1 // pred_region
      _
    $region5: #{discriminator_forward.1} parent=1 // pred_fallthru
      _
    // Predicated region
    $region6: #{discriminator_forward.1} parent=1 // pred_check
      _
    $region7: #{discriminator_forward.1} parent=1 // pred_check_branch
      %26 = sbr.rel (0) target = $region9
    $region8: #{discriminator_forward.1} parent=1 // pred_region
      _
    $region9: #{discriminator_forward.1} parent=1 // pred_fallthru
      _
    // Predicated region
    $region10: #{discriminator_forward.1} parent=1 // pred_check
      _
    $region11: #{discriminator_forward.1} parent=1 // pred_check_branch
      %28 = sbr.rel (0) target = $region13
    $region12: #{discriminator_forward.1} parent=1 // pred_region
      %30 = vsyncadd [#allocation4], 0
      %s31 = sshll.u32 %s2, 4
      %s32 = int_to_ptr.hbm [resolvable:$true] %s31
      %s33 = sshll.u32 [#allocation3], 4
      %s34 = int_to_ptr.vmem [resolvable:$true] %s33
      %39 = dma.hbm_to_vmem [thread:$0]  %s32, 25088, %s34, [#allocation4], 256, 256, 16
    $region13: #{discriminator_forward.1} parent=1 // pred_fallthru
      _
    // Predicated region
    $region14: #{discriminator_forward.1} parent=1 // pred_check
      _
    $region15: #{discriminator_forward.1} parent=1 // pred_check_branch
      %41 = sbr.rel (0) target = $region17
    $region16: #{discriminator_forward.1} parent=1 // pred_region
      _
    $region17: #{discriminator_forward.1} parent=1 // pred_fallthru
      _
    // Predicated region
    $region18: #{discriminator_forward.1} parent=1 // pred_check
      _
    $region19: #{discriminator_forward.1} parent=1 // pred_check_branch
      %43 = sbr.rel (0) target = $region21
    $region20: #{discriminator_forward.1} parent=1 // pred_region
      _
    $region21: #{discriminator_forward.1} parent=1 // pred_fallthru
      _
    // Predicated region
    $region22: #{discriminator_forward.1} parent=1 // pred_check
      _
    $region23: #{discriminator_forward.1} parent=1 // pred_check_branch
      %45 = sbr.rel (0) target = $region25
    $region24: #{discriminator_forward.1} parent=1 // pred_region
      %47 = vsyncadd [#allocation6], 0
      %s48 = sshll.u32 %s5, 4
      %s49 = int_to_ptr.hbm [resolvable:$true] %s48
      %s50 = sshll.u32 [#allocation5], 4
      %s51 = int_to_ptr.vmem [resolvable:$true] %s50
      %56 = dma.hbm_to_vmem [thread:$0]  %s49, 16384, %s51, [#allocation6], 256, 256, 16
    $region25: #{discriminator_forward.1} parent=1 // pred_fallthru
      _
    // Predicated region
    $region26: #{discriminator_forward.1} parent=1 // pred_check
      _
    $region27: #{discriminator_forward.1} parent=1 // pred_check_branch
      %58 = sbr.rel (0) target = $region29
    $region28: #{discriminator_forward.1} parent=1 // pred_region
      _
    $region29: #{discriminator_forward.1} parent=1 // pred_fallthru
      _
    // Predicated region
    $region30: #{discriminator_forward.1} parent=1 // pred_check
      _
    $region31: #{discriminator_forward.1} parent=1 // pred_check_branch
      %60 = sbr.rel (0) target = $region33
    $region32: #{discriminator_forward.1} parent=1 // pred_region
      %62 = vsyncadd [#allocation6], 0
      %s63 = sshll.u32 %s7, 4
      %s64 = int_to_ptr.hbm [resolvable:$true] %s63
      %s65 = sshll.u32 [#allocation7], 4
      %s66 = int_to_ptr.vmem [resolvable:$true] %s65
      %71 = dma.hbm_to_vmem [thread:$0]  %s64, 16384, %s66, [#allocation6], 256, 256, 16
    $region33: #{discriminator_forward.1} parent=1 // pred_fallthru
      _
    // Predicated region
    $region34: #{discriminator_forward.1} parent=1 // pred_check
      _
    $region35: #{discriminator_forward.1} parent=1 // pred_check_branch
      %73 = sbr.rel (0) target = $region37
    $region36: #{discriminator_forward.1} parent=1 // pred_region
      _
    $region37: #{discriminator_forward.1} parent=1 // pred_fallthru
      _
    // Predicated region
    $region38: #{discriminator_forward.1} parent=1 // pred_check
      _
    $region39: #{discriminator_forward.1} parent=1 // pred_check_branch
      %75 = sbr.rel (0) target = $region41
    $region40: #{discriminator_forward.1} parent=1 // pred_region
      %77 = vsyncadd [#allocation9], 0
      %s78 = sshll.u32 %s9, 4
      %s79 = int_to_ptr.hbm [resolvable:$true] %s78
      %s80 = sshll.u32 [#allocation8], 4
      %s81 = int_to_ptr.vmem [resolvable:$true] %s80
      %86 = dma.hbm_to_vmem [thread:$0]  %s79, 16384, %s81, [#allocation9], 256, 256, 16
    $region41: #{discriminator_forward.1} parent=1 // pred_fallthru
      _
    // Predicated region
    $region42: #{discriminator_forward.1} parent=1 // pred_check
      _
    $region43: #{discriminator_forward.1} parent=1 // pred_check_branch
      %88 = sbr.rel (0) target = $region45
    $region44: #{discriminator_forward.1} parent=1 // pred_region
      _
    $region45: #{discriminator_forward.1} parent=1 // pred_fallthru
      _
    // Predicated region
    $region46: #{discriminator_forward.1} parent=1 // pred_check
      _
    $region47: #{discriminator_forward.1} parent=1 // pred_check_branch
      %90 = sbr.rel (0) target = $region49
    $region48: #{discriminator_forward.1} parent=1 // pred_region
      _
    $region49: #{discriminator_forward.1} parent=1 // pred_fallthru
      _
    // Predicated region
    $region50: #{discriminator_forward.1} parent=1 // pred_check
      _
    $region51: #{discriminator_forward.1} parent=1 // pred_check_branch
      %92 = sbr.rel (0) target = $region53
    $region52: #{discriminator_forward.1} parent=1 // pred_region
      _
    $region53: #{discriminator_forward.1} parent=1 // pred_fallthru
      _
    // Predicated region
    $region54: #{discriminator_forward.1} parent=1 // pred_check
      _
    $region55: #{discriminator_forward.1} parent=1 // pred_check_branch
      %94 = sbr.rel (0) target = $region57
    $region56: #{discriminator_forward.1} parent=1 // pred_region
      %96 = dma.done [#allocation4], 25088
    $region57: #{discriminator_forward.1} parent=1 // pred_fallthru
      _
    // Predicated region
    $region58: #{discriminator_forward.1} parent=1 // pred_check
      _
    $region59: #{discriminator_forward.1} parent=1 // pred_check_branch
      %98 = sbr.rel (0) target = $region61
    $region60: #{discriminator_forward.1} parent=1 // pred_region
      %100 = dma.done [#allocation6], 16384
    $region61: #{discriminator_forward.1} parent=1 // pred_fallthru
      _
    // Predicated region
    $region62: #{discriminator_forward.1} parent=1 // pred_check
      _
    $region63: #{discriminator_forward.1} parent=1 // pred_check_branch
      %102 = sbr.rel (0) target = $region65
    $region64: #{discriminator_forward.1} parent=1 // pred_region
      %104 = dma.done [#allocation6], 16384
    $region65: #{discriminator_forward.1} parent=1 // pred_fallthru
      _
    // Predicated region
    $region66: #{discriminator_forward.1} parent=1 // pred_check
      _
    $region67: #{discriminator_forward.1} parent=1 // pred_check_branch
      %106 = sbr.rel (0) target = $region69
    $region68: #{discriminator_forward.1} parent=1 // pred_region
      %108 = dma.done [#allocation9], 16384
    $region69: #{discriminator_forward.1} parent=1 // pred_fallthru
      _
    %v110 = vld [vmem:[#allocation3] sm:$0xff]
    %v111 = vld [vmem:[#allocation3 + $0x8] sm:$0xff]
    %v112 = vld [vmem:[#allocation3 + $0x10] sm:$0xff]
    %v113 = vld [vmem:[#allocation3 + $0x18] sm:$0xff]
    %v114 = vld [vmem:[#allocation3 + $0x20] sm:$0xff]
    %v115 = vld [vmem:[#allocation3 + $0x28] sm:$0xff]
    %v116 = vld [vmem:[#allocation3 + $0x30] sm:$0xff]
    %v117 = vld [vmem:[#allocation3 + $0x38] sm:$0xff]
    %v118 = vld [vmem:[#allocation3 + $0x40] sm:$0xff]
    %v119 = vld [vmem:[#allocation3 + $0x48] sm:$0xff]
    %v120 = vld [vmem:[#allocation3 + $0x50] sm:$0xff]
    %v121 = vld [vmem:[#allocation3 + $0x58] sm:$0xff]
    %v122 = vld [vmem:[#allocation3 + $0x60] sm:$0xff]
    %v123 = vld [vmem:[#allocation3 + $0x68] sm:$0xff]
    %v124 = vld [vmem:[#allocation3 + $0x70] sm:$0xff]
    %v125 = vld [vmem:[#allocation3 + $0x78] sm:$0xff]
    %v126 = vld [vmem:[#allocation3 + $0x80] sm:$0xff]
    %v127 = vld [vmem:[#allocation3 + $0x88] sm:$0xff]
    %v128 = vld [vmem:[#allocation3 + $0x90] sm:$0xff]
    %v129 = vld [vmem:[#allocation3 + $0x98] sm:$0xff]
    %v130 = vld [vmem:[#allocation3 + $0xa0] sm:$0xff]
    %v131 = vld [vmem:[#allocation3 + $0xa8] sm:$0xff]
    %v132 = vld [vmem:[#allocation3 + $0xb0] sm:$0xff]
    %v133 = vld [vmem:[#allocation3 + $0xb8] sm:$0xff]
    %v134 = vld [vmem:[#allocation3 + $0xc0] sm:$0xff]
    %v135 = vld [vmem:[#allocation3 + $0xc8] sm:$0xff]
    %v136 = vld [vmem:[#allocation3 + $0xd0] sm:$0xff]
    %v137 = vld [vmem:[#allocation3 + $0xd8] sm:$0xff]
    %v138 = vld [vmem:[#allocation3 + $0xe0] sm:$0xff]
    %v139 = vld [vmem:[#allocation3 + $0xe8] sm:$0xff]
    %v140 = vld [vmem:[#allocation3 + $0xf0] sm:$0xff]
    %v141 = vld [vmem:[#allocation3 + $0xf8] sm:$0xff]
    %v142 = vld [vmem:[#allocation3 + $0x100] sm:$0xff]
    %v143 = vld [vmem:[#allocation3 + $0x108] sm:$0xff]
    %v144 = vld [vmem:[#allocation3 + $0x110] sm:$0xff]
    %v145 = vld [vmem:[#allocation3 + $0x118] sm:$0xff]
    %v146 = vld [vmem:[#allocation3 + $0x120] sm:$0xff]
    %v147 = vld [vmem:[#allocation3 + $0x128] sm:$0xff]
    %v148 = vld [vmem:[#allocation3 + $0x130] sm:$0xff]
    %v149 = vld [vmem:[#allocation3 + $0x138] sm:$0xff]
    %v150 = vld [vmem:[#allocation3 + $0x140] sm:$0xff]
    %v151 = vld [vmem:[#allocation3 + $0x148] sm:$0xff]
    %v152 = vld [vmem:[#allocation3 + $0x150] sm:$0xff]
    %v153 = vld [vmem:[#allocation3 + $0x158] sm:$0xff]
    %v154 = vld [vmem:[#allocation3 + $0x160] sm:$0xff]
    %v155 = vld [vmem:[#allocation3 + $0x168] sm:$0xff]
    %v156 = vld [vmem:[#allocation3 + $0x170] sm:$0xff]
    %v157 = vld [vmem:[#allocation3 + $0x178] sm:$0xff]
    %v158 = vld [vmem:[#allocation3 + $0x180] sm:$0xff]
    %v159 = vld [vmem:[#allocation3 + $0x188] sm:$0xff]
    %v160 = vld [vmem:[#allocation3 + $0x190] sm:$0xff]
    %v161 = vld [vmem:[#allocation3 + $0x198] sm:$0xff]
    %v162 = vld [vmem:[#allocation3 + $0x1a0] sm:$0xff]
    %v163 = vld [vmem:[#allocation3 + $0x1a8] sm:$0xff]
    %v164 = vld [vmem:[#allocation3 + $0x1b0] sm:$0xff]
    %v165 = vld [vmem:[#allocation3 + $0x1b8] sm:$0xff]
    %v166 = vld [vmem:[#allocation3 + $0x1c0] sm:$0xff]
    %v167 = vld [vmem:[#allocation3 + $0x1c8] sm:$0xff]
    %v168 = vld [vmem:[#allocation3 + $0x1d0] sm:$0xff]
    %v169 = vld [vmem:[#allocation3 + $0x1d8] sm:$0xff]
    %v170 = vld [vmem:[#allocation3 + $0x1e0] sm:$0xff]
    %v171 = vld [vmem:[#allocation3 + $0x1e8] sm:$0xff]
    %v172 = vld [vmem:[#allocation3 + $0x1f0] sm:$0xff]
    %v173 = vld [vmem:[#allocation3 + $0x1f8] sm:$0xff]
    %v174 = vld [vmem:[#allocation3 + $0x200] sm:$0xff]
    %v175 = vld [vmem:[#allocation3 + $0x208] sm:$0xff]
    %v176 = vld [vmem:[#allocation3 + $0x210] sm:$0xff]
    %v177 = vld [vmem:[#allocation3 + $0x218] sm:$0xff]
    %v178 = vld [vmem:[#allocation3 + $0x220] sm:$0xff]
    %v179 = vld [vmem:[#allocation3 + $0x228] sm:$0xff]
    %v180 = vld [vmem:[#allocation3 + $0x230] sm:$0xff]
    %v181 = vld [vmem:[#allocation3 + $0x238] sm:$0xff]
    %v182 = vld [vmem:[#allocation3 + $0x240] sm:$0xff]
    %v183 = vld [vmem:[#allocation3 + $0x248] sm:$0xff]
    %v184 = vld [vmem:[#allocation3 + $0x250] sm:$0xff]
    %v185 = vld [vmem:[#allocation3 + $0x258] sm:$0xff]
    %v186 = vld [vmem:[#allocation3 + $0x260] sm:$0xff]
    %v187 = vld [vmem:[#allocation3 + $0x268] sm:$0xff]
    %v188 = vld [vmem:[#allocation3 + $0x270] sm:$0xff]
    %v189 = vld [vmem:[#allocation3 + $0x278] sm:$0xff]
    %v190 = vld [vmem:[#allocation3 + $0x280] sm:$0xff]
    %v191 = vld [vmem:[#allocation3 + $0x288] sm:$0xff]
    %v192 = vld [vmem:[#allocation3 + $0x290] sm:$0xff]
    %v193 = vld [vmem:[#allocation3 + $0x298] sm:$0xff]
    %v194 = vld [vmem:[#allocation3 + $0x2a0] sm:$0xff]
    %v195 = vld [vmem:[#allocation3 + $0x2a8] sm:$0xff]
    %v196 = vld [vmem:[#allocation3 + $0x2b0] sm:$0xff]
    %v197 = vld [vmem:[#allocation3 + $0x2b8] sm:$0xff]
    %v198 = vld [vmem:[#allocation3 + $0x2c0] sm:$0xff]
    %v199 = vld [vmem:[#allocation3 + $0x2c8] sm:$0xff]
    %v200 = vld [vmem:[#allocation3 + $0x2d0] sm:$0xff]
    %v201 = vld [vmem:[#allocation3 + $0x2d8] sm:$0xff]
    %v202 = vld [vmem:[#allocation3 + $0x2e0] sm:$0xff]
    %v203 = vld [vmem:[#allocation3 + $0x2e8] sm:$0xff]
    %v204 = vld [vmem:[#allocation3 + $0x2f0] sm:$0xff]
    %v205 = vld [vmem:[#allocation3 + $0x2f8] sm:$0xff]
    %v206 = vld [vmem:[#allocation3 + $0x300] sm:$0xff]
    %v207 = vld [vmem:[#allocation3 + $0x308] sm:$0xff]
    %v208 = vld [vmem:[#allocation3 + $0x310] sm:$0xff]
    %v209 = vld [vmem:[#allocation3 + $0x318] sm:$0xff]
    %v210 = vld [vmem:[#allocation3 + $0x320] sm:$0xff]
    %v211 = vld [vmem:[#allocation3 + $0x328] sm:$0xff]
    %v212 = vld [vmem:[#allocation3 + $0x330] sm:$0xff]
    %v213 = vld [vmem:[#allocation3 + $0x338] sm:$0xff]
    %v214 = vld [vmem:[#allocation3 + $0x340] sm:$0xff]
    %v215 = vld [vmem:[#allocation3 + $0x348] sm:$0xff]
    %v216 = vld [vmem:[#allocation3 + $0x350] sm:$0xff]
    %v217 = vld [vmem:[#allocation3 + $0x358] sm:$0xff]
    %v218 = vld [vmem:[#allocation3 + $0x360] sm:$0xff]
    %v219 = vld [vmem:[#allocation3 + $0x368] sm:$0xff]
    %v220 = vld [vmem:[#allocation3 + $0x370] sm:$0xff]
    %v221 = vld [vmem:[#allocation3 + $0x378] sm:$0xff]
    %v222 = vld [vmem:[#allocation3 + $0x380] sm:$0xff]
    %v223 = vld [vmem:[#allocation3 + $0x388] sm:$0xff]
    %v224 = vld [vmem:[#allocation3 + $0x390] sm:$0xff]
    %v225 = vld [vmem:[#allocation3 + $0x398] sm:$0xff]
    %v226 = vld [vmem:[#allocation3 + $0x3a0] sm:$0xff]
    %v227 = vld [vmem:[#allocation3 + $0x3a8] sm:$0xff]
    %v228 = vld [vmem:[#allocation3 + $0x3b0] sm:$0xff]
    %v229 = vld [vmem:[#allocation3 + $0x3b8] sm:$0xff]
    %v230 = vld [vmem:[#allocation3 + $0x3c0] sm:$0xff]
    %v231 = vld [vmem:[#allocation3 + $0x3c8] sm:$0xff]
    %v232 = vld [vmem:[#allocation3 + $0x3d0] sm:$0xff]
    %v233 = vld [vmem:[#allocation3 + $0x3d8] sm:$0xff]
    %v234 = vld [vmem:[#allocation3 + $0x3e0] sm:$0xff]
    %v235 = vld [vmem:[#allocation3 + $0x3e8] sm:$0xff]
    %v236 = vld [vmem:[#allocation3 + $0x3f0] sm:$0xff]
    %v237 = vld [vmem:[#allocation3 + $0x3f8] sm:$0xff]
    %v238 = vld [vmem:[#allocation3 + $0x400] sm:$0xff]
    %v239 = vld [vmem:[#allocation3 + $0x408] sm:$0xff]
    %v240 = vld [vmem:[#allocation3 + $0x410] sm:$0xff]
    %v241 = vld [vmem:[#allocation3 + $0x418] sm:$0xff]
    %v242 = vld [vmem:[#allocation3 + $0x420] sm:$0xff]
    %v243 = vld [vmem:[#allocation3 + $0x428] sm:$0xff]
    %v244 = vld [vmem:[#allocation3 + $0x430] sm:$0xff]
    %v245 = vld [vmem:[#allocation3 + $0x438] sm:$0xff]
    %v246 = vld [vmem:[#allocation3 + $0x440] sm:$0xff]
    %v247 = vld [vmem:[#allocation3 + $0x448] sm:$0xff]
    %v248 = vld [vmem:[#allocation3 + $0x450] sm:$0xff]
    %v249 = vld [vmem:[#allocation3 + $0x458] sm:$0xff]
    %v250 = vld [vmem:[#allocation3 + $0x460] sm:$0xff]
    %v251 = vld [vmem:[#allocation3 + $0x468] sm:$0xff]
    %v252 = vld [vmem:[#allocation3 + $0x470] sm:$0xff]
    %v253 = vld [vmem:[#allocation3 + $0x478] sm:$0xff]
    %v254 = vld [vmem:[#allocation3 + $0x480] sm:$0xff]
    %v255 = vld [vmem:[#allocation3 + $0x488] sm:$0xff]
    %v256 = vld [vmem:[#allocation3 + $0x490] sm:$0xff]
    %v257 = vld [vmem:[#allocation3 + $0x498] sm:$0xff]
    %v258 = vld [vmem:[#allocation3 + $0x4a0] sm:$0xff]
    %v259 = vld [vmem:[#allocation3 + $0x4a8] sm:$0xff]
    %v260 = vld [vmem:[#allocation3 + $0x4b0] sm:$0xff]
    %v261 = vld [vmem:[#allocation3 + $0x4b8] sm:$0xff]
    %v262 = vld [vmem:[#allocation3 + $0x4c0] sm:$0xff]
    %v263 = vld [vmem:[#allocation3 + $0x4c8] sm:$0xff]
    %v264 = vld [vmem:[#allocation3 + $0x4d0] sm:$0xff]
    %v265 = vld [vmem:[#allocation3 + $0x4d8] sm:$0xff]
    %v266 = vld [vmem:[#allocation3 + $0x4e0] sm:$0xff]
    %v267 = vld [vmem:[#allocation3 + $0x4e8] sm:$0xff]
    %v268 = vld [vmem:[#allocation3 + $0x4f0] sm:$0xff]
    %v269 = vld [vmem:[#allocation3 + $0x4f8] sm:$0xff]
    %v270 = vld [vmem:[#allocation3 + $0x500] sm:$0xff]
    %v271 = vld [vmem:[#allocation3 + $0x508] sm:$0xff]
    %v272 = vld [vmem:[#allocation3 + $0x510] sm:$0xff]
    %v273 = vld [vmem:[#allocation3 + $0x518] sm:$0xff]
    %v274 = vld [vmem:[#allocation3 + $0x520] sm:$0xff]
    %v275 = vld [vmem:[#allocation3 + $0x528] sm:$0xff]
    %v276 = vld [vmem:[#allocation3 + $0x530] sm:$0xff]
    %v277 = vld [vmem:[#allocation3 + $0x538] sm:$0xff]
    %v278 = vld [vmem:[#allocation3 + $0x540] sm:$0xff]
    %v279 = vld [vmem:[#allocation3 + $0x548] sm:$0xff]
    %v280 = vld [vmem:[#allocation3 + $0x550] sm:$0xff]
    %v281 = vld [vmem:[#allocation3 + $0x558] sm:$0xff]
    %v282 = vld [vmem:[#allocation3 + $0x560] sm:$0xff]
    %v283 = vld [vmem:[#allocation3 + $0x568] sm:$0xff]
    %v284 = vld [vmem:[#allocation3 + $0x570] sm:$0xff]
    %v285 = vld [vmem:[#allocation3 + $0x578] sm:$0xff]
    %v286 = vld [vmem:[#allocation3 + $0x580] sm:$0xff]
    %v287 = vld [vmem:[#allocation3 + $0x588] sm:$0xff]
    %v288 = vld [vmem:[#allocation3 + $0x590] sm:$0xff]
    %v289 = vld [vmem:[#allocation3 + $0x598] sm:$0xff]
    %v290 = vld [vmem:[#allocation3 + $0x5a0] sm:$0xff]
    %v291 = vld [vmem:[#allocation3 + $0x5a8] sm:$0xff]
    %v292 = vld [vmem:[#allocation3 + $0x5b0] sm:$0xff]
    %v293 = vld [vmem:[#allocation3 + $0x5b8] sm:$0xff]
    %v294 = vld [vmem:[#allocation3 + $0x5c0] sm:$0xff]
    %v295 = vld [vmem:[#allocation3 + $0x5c8] sm:$0xff]
    %v296 = vld [vmem:[#allocation3 + $0x5d0] sm:$0xff]
    %v297 = vld [vmem:[#allocation3 + $0x5d8] sm:$0xff]
    %v298 = vld [vmem:[#allocation3 + $0x5e0] sm:$0xff]
    %v299 = vld [vmem:[#allocation3 + $0x5e8] sm:$0xff]
    %v300 = vld [vmem:[#allocation3 + $0x5f0] sm:$0xff]
    %v301 = vld [vmem:[#allocation3 + $0x5f8] sm:$0xff]
    %v302 = vld [vmem:[#allocation3 + $0x600] sm:$0xff]
    %v303 = vld [vmem:[#allocation3 + $0x608] sm:$0xff]
    %v304 = vld [vmem:[#allocation3 + $0x610] sm:$0xff]
    %v305 = vld [vmem:[#allocation3 + $0x618] sm:$0xff]
    %v306 = vld [vmem:[%s3] sm:$0xff]
    %v307 = vld [vmem:[%s3 + $0x8] sm:$0xff]
    %v308 = vld [vmem:[%s3 + $0x10] sm:$0xff]
    %v309 = vld [vmem:[%s3 + $0x18] sm:$0xff]
    %v310 = vld [vmem:[%s3 + $0x20] sm:$0xff]
    %v311 = vld [vmem:[%s3 + $0x28] sm:$0xff]
    %v312 = vld [vmem:[%s3 + $0x30] sm:$0xff]
    %v313 = vld [vmem:[%s3 + $0x38] sm:$0xff]
    %v314 = vld [vmem:[%s3 + $0x40] sm:$0xff]
    %v315 = vld [vmem:[%s3 + $0x48] sm:$0xff]
    %v316 = vld [vmem:[%s3 + $0x50] sm:$0xff]
    %v317 = vld [vmem:[%s3 + $0x58] sm:$0xff]
    %v318 = vld [vmem:[%s3 + $0x60] sm:$0xff]
    %v319 = vld [vmem:[%s3 + $0x68] sm:$0xff]
    %v320 = vld [vmem:[%s3 + $0x70] sm:$0xff]
    %v321 = vld [vmem:[%s3 + $0x78] sm:$0xff]
    %v322 = vld [vmem:[%s3 + $0x80] sm:$0xff]
    %v323 = vld [vmem:[%s3 + $0x88] sm:$0xff]
    %v324 = vld [vmem:[%s3 + $0x90] sm:$0xff]
    %v325 = vld [vmem:[%s3 + $0x98] sm:$0xff]
    %v326 = vld [vmem:[%s3 + $0xa0] sm:$0xff]
    %v327 = vld [vmem:[%s3 + $0xa8] sm:$0xff]
    %v328 = vld [vmem:[%s3 + $0xb0] sm:$0xff]
    %v329 = vld [vmem:[%s3 + $0xb8] sm:$0xff]
    %v330 = vld [vmem:[%s3 + $0xc0] sm:$0xff]
    %v331 = vld [vmem:[%s3 + $0xc8] sm:$0xff]
    %v332 = vld [vmem:[%s3 + $0xd0] sm:$0xff]
    %v333 = vld [vmem:[%s3 + $0xd8] sm:$0xff]
    %v334 = vld [vmem:[%s3 + $0xe0] sm:$0xff]
    %v335 = vld [vmem:[%s3 + $0xe8] sm:$0xff]
    %v336 = vld [vmem:[%s3 + $0xf0] sm:$0xff]
    %v337 = vld [vmem:[%s3 + $0xf8] sm:$0xff]
    %v338 = vld [vmem:[%s4] sm:$0xf]
    %v340 = vperm.slane %v338, 0
    %v341 = vperm.slane %v338, 1
    %v342 = vperm.slane %v338, 2
    %v343 = vperm.slane %v338, 3
    %v348 = vpack.c.bf16 %v341, %v340
    %v349 = vpack.c.bf16 %v343, %v342
    %v350 = vld [vmem:[#allocation5] sm:$0xff]
    %v351 = vld [vmem:[#allocation5 + $0x8] sm:$0xff]
    %v352 = vld [vmem:[#allocation5 + $0x10] sm:$0xff]
    %v353 = vld [vmem:[#allocation5 + $0x18] sm:$0xff]
    %v354 = vld [vmem:[#allocation5 + $0x20] sm:$0xff]
    %v355 = vld [vmem:[#allocation5 + $0x28] sm:$0xff]
    %v356 = vld [vmem:[#allocation5 + $0x30] sm:$0xff]
    %v357 = vld [vmem:[#allocation5 + $0x38] sm:$0xff]
    %v358 = vld [vmem:[#allocation5 + $0x40] sm:$0xff]
    %v359 = vld [vmem:[#allocation5 + $0x48] sm:$0xff]
    %v360 = vld [vmem:[#allocation5 + $0x50] sm:$0xff]
    %v361 = vld [vmem:[#allocation5 + $0x58] sm:$0xff]
    %v362 = vld [vmem:[#allocation5 + $0x60] sm:$0xff]
    %v363 = vld [vmem:[#allocation5 + $0x68] sm:$0xff]
    %v364 = vld [vmem:[#allocation5 + $0x70] sm:$0xff]
    %v365 = vld [vmem:[#allocation5 + $0x78] sm:$0xff]
    %v366 = vld [vmem:[#allocation5 + $0x80] sm:$0xff]
    %v367 = vld [vmem:[#allocation5 + $0x88] sm:$0xff]
    %v368 = vld [vmem:[#allocation5 + $0x90] sm:$0xff]
    %v369 = vld [vmem:[#allocation5 + $0x98] sm:$0xff]
    %v370 = vld [vmem:[#allocation5 + $0xa0] sm:$0xff]
    %v371 = vld [vmem:[#allocation5 + $0xa8] sm:$0xff]
    %v372 = vld [vmem:[#allocation5 + $0xb0] sm:$0xff]
    %v373 = vld [vmem:[#allocation5 + $0xb8] sm:$0xff]
    %v374 = vld [vmem:[#allocation5 + $0xc0] sm:$0xff]
    %v375 = vld [vmem:[#allocation5 + $0xc8] sm:$0xff]
    %v376 = vld [vmem:[#allocation5 + $0xd0] sm:$0xff]
    %v377 = vld [vmem:[#allocation5 + $0xd8] sm:$0xff]
    %v378 = vld [vmem:[#allocation5 + $0xe0] sm:$0xff]
    %v379 = vld [vmem:[#allocation5 + $0xe8] sm:$0xff]
    %v380 = vld [vmem:[#allocation5 + $0xf0] sm:$0xff]
    %v381 = vld [vmem:[#allocation5 + $0xf8] sm:$0xff]
    %v382 = vld [vmem:[#allocation5 + $0x100] sm:$0xff]
    %v383 = vld [vmem:[#allocation5 + $0x108] sm:$0xff]
    %v384 = vld [vmem:[#allocation5 + $0x110] sm:$0xff]
    %v385 = vld [vmem:[#allocation5 + $0x118] sm:$0xff]
    %v386 = vld [vmem:[#allocation5 + $0x120] sm:$0xff]
    %v387 = vld [vmem:[#allocation5 + $0x128] sm:$0xff]
    %v388 = vld [vmem:[#allocation5 + $0x130] sm:$0xff]
    %v389 = vld [vmem:[#allocation5 + $0x138] sm:$0xff]
    %v390 = vld [vmem:[#allocation5 + $0x140] sm:$0xff]
    %v391 = vld [vmem:[#allocation5 + $0x148] sm:$0xff]
    %v392 = vld [vmem:[#allocation5 + $0x150] sm:$0xff]
    %v393 = vld [vmem:[#allocation5 + $0x158] sm:$0xff]
    %v394 = vld [vmem:[#allocation5 + $0x160] sm:$0xff]
    %v395 = vld [vmem:[#allocation5 + $0x168] sm:$0xff]
    %v396 = vld [vmem:[#allocation5 + $0x170] sm:$0xff]
    %v397 = vld [vmem:[#allocation5 + $0x178] sm:$0xff]
    %v398 = vld [vmem:[#allocation5 + $0x180] sm:$0xff]
    %v399 = vld [vmem:[#allocation5 + $0x188] sm:$0xff]
    %v400 = vld [vmem:[#allocation5 + $0x190] sm:$0xff]
    %v401 = vld [vmem:[#allocation5 + $0x198] sm:$0xff]
    %v402 = vld [vmem:[#allocation5 + $0x1a0] sm:$0xff]
    %v403 = vld [vmem:[#allocation5 + $0x1a8] sm:$0xff]
    %v404 = vld [vmem:[#allocation5 + $0x1b0] sm:$0xff]
    %v405 = vld [vmem:[#allocation5 + $0x1b8] sm:$0xff]
    %v406 = vld [vmem:[#allocation5 + $0x1c0] sm:$0xff]
    %v407 = vld [vmem:[#allocation5 + $0x1c8] sm:$0xff]
    %v408 = vld [vmem:[#allocation5 + $0x1d0] sm:$0xff]
    %v409 = vld [vmem:[#allocation5 + $0x1d8] sm:$0xff]
    %v410 = vld [vmem:[#allocation5 + $0x1e0] sm:$0xff]
    %v411 = vld [vmem:[#allocation5 + $0x1e8] sm:$0xff]
    %v412 = vld [vmem:[#allocation5 + $0x1f0] sm:$0xff]
    %v413 = vld [vmem:[#allocation5 + $0x1f8] sm:$0xff]
    %v414 = vld [vmem:[#allocation5 + $0x200] sm:$0xff]
    %v415 = vld [vmem:[#allocation5 + $0x208] sm:$0xff]
    %v416 = vld [vmem:[#allocation5 + $0x210] sm:$0xff]
    %v417 = vld [vmem:[#allocation5 + $0x218] sm:$0xff]
    %v418 = vld [vmem:[#allocation5 + $0x220] sm:$0xff]
    %v419 = vld [vmem:[#allocation5 + $0x228] sm:$0xff]
    %v420 = vld [vmem:[#allocation5 + $0x230] sm:$0xff]
    %v421 = vld [vmem:[#allocation5 + $0x238] sm:$0xff]
    %v422 = vld [vmem:[#allocation5 + $0x240] sm:$0xff]
    %v423 = vld [vmem:[#allocation5 + $0x248] sm:$0xff]
    %v424 = vld [vmem:[#allocation5 + $0x250] sm:$0xff]
    %v425 = vld [vmem:[#allocation5 + $0x258] sm:$0xff]
    %v426 = vld [vmem:[#allocation5 + $0x260] sm:$0xff]
    %v427 = vld [vmem:[#allocation5 + $0x268] sm:$0xff]
    %v428 = vld [vmem:[#allocation5 + $0x270] sm:$0xff]
    %v429 = vld [vmem:[#allocation5 + $0x278] sm:$0xff]
    %v430 = vld [vmem:[#allocation5 + $0x280] sm:$0xff]
    %v431 = vld [vmem:[#allocation5 + $0x288] sm:$0xff]
    %v432 = vld [vmem:[#allocation5 + $0x290] sm:$0xff]
    %v433 = vld [vmem:[#allocation5 + $0x298] sm:$0xff]
    %v434 = vld [vmem:[#allocation5 + $0x2a0] sm:$0xff]
    %v435 = vld [vmem:[#allocation5 + $0x2a8] sm:$0xff]
    %v436 = vld [vmem:[#allocation5 + $0x2b0] sm:$0xff]
    %v437 = vld [vmem:[#allocation5 + $0x2b8] sm:$0xff]
    %v438 = vld [vmem:[#allocation5 + $0x2c0] sm:$0xff]
    %v439 = vld [vmem:[#allocation5 + $0x2c8] sm:$0xff]
    %v440 = vld [vmem:[#allocation5 + $0x2d0] sm:$0xff]
    %v441 = vld [vmem:[#allocation5 + $0x2d8] sm:$0xff]
    %v442 = vld [vmem:[#allocation5 + $0x2e0] sm:$0xff]
    %v443 = vld [vmem:[#allocation5 + $0x2e8] sm:$0xff]
    %v444 = vld [vmem:[#allocation5 + $0x2f0] sm:$0xff]
    %v445 = vld [vmem:[#allocation5 + $0x2f8] sm:$0xff]
    %v446 = vld [vmem:[#allocation5 + $0x300] sm:$0xff]
    %v447 = vld [vmem:[#allocation5 + $0x308] sm:$0xff]
    %v448 = vld [vmem:[#allocation5 + $0x310] sm:$0xff]
    %v449 = vld [vmem:[#allocation5 + $0x318] sm:$0xff]
    %v450 = vld [vmem:[#allocation5 + $0x320] sm:$0xff]
    %v451 = vld [vmem:[#allocation5 + $0x328] sm:$0xff]
    %v452 = vld [vmem:[#allocation5 + $0x330] sm:$0xff]
    %v453 = vld [vmem:[#allocation5 + $0x338] sm:$0xff]
    %v454 = vld [vmem:[#allocation5 + $0x340] sm:$0xff]
    %v455 = vld [vmem:[#allocation5 + $0x348] sm:$0xff]
    %v456 = vld [vmem:[#allocation5 + $0x350] sm:$0xff]
    %v457 = vld [vmem:[#allocation5 + $0x358] sm:$0xff]
    %v458 = vld [vmem:[#allocation5 + $0x360] sm:$0xff]
    %v459 = vld [vmem:[#allocation5 + $0x368] sm:$0xff]
    %v460 = vld [vmem:[#allocation5 + $0x370] sm:$0xff]
    %v461 = vld [vmem:[#allocation5 + $0x378] sm:$0xff]
    %v462 = vld [vmem:[#allocation5 + $0x380] sm:$0xff]
    %v463 = vld [vmem:[#allocation5 + $0x388] sm:$0xff]
    %v464 = vld [vmem:[#allocation5 + $0x390] sm:$0xff]
    %v465 = vld [vmem:[#allocation5 + $0x398] sm:$0xff]
    %v466 = vld [vmem:[#allocation5 + $0x3a0] sm:$0xff]
    %v467 = vld [vmem:[#allocation5 + $0x3a8] sm:$0xff]
    %v468 = vld [vmem:[#allocation5 + $0x3b0] sm:$0xff]
    %v469 = vld [vmem:[#allocation5 + $0x3b8] sm:$0xff]
    %v470 = vld [vmem:[#allocation5 + $0x3c0] sm:$0xff]
    %v471 = vld [vmem:[#allocation5 + $0x3c8] sm:$0xff]
    %v472 = vld [vmem:[#allocation5 + $0x3d0] sm:$0xff]
    %v473 = vld [vmem:[#allocation5 + $0x3d8] sm:$0xff]
    %v474 = vld [vmem:[#allocation5 + $0x3e0] sm:$0xff]
    %v475 = vld [vmem:[#allocation5 + $0x3e8] sm:$0xff]
    %v476 = vld [vmem:[#allocation5 + $0x3f0] sm:$0xff]
    %v477 = vld [vmem:[#allocation5 + $0x3f8] sm:$0xff]
    %v478 = vld [vmem:[%s6] sm:$0xf]
    %v480 = vperm.slane %v478, 0
    %v481 = vperm.slane %v478, 1
    %v482 = vperm.slane %v478, 2
    %v483 = vperm.slane %v478, 3
    %v488 = vpack.c.bf16 %v481, %v480
    %v489 = vpack.c.bf16 %v483, %v482
    %v490 = vld [vmem:[#allocation7] sm:$0xff]
    %v491 = vld [vmem:[#allocation7 + $0x8] sm:$0xff]
    %v492 = vld [vmem:[#allocation7 + $0x10] sm:$0xff]
    %v493 = vld [vmem:[#allocation7 + $0x18] sm:$0xff]
    %v494 = vld [vmem:[#allocation7 + $0x20] sm:$0xff]
    %v495 = vld [vmem:[#allocation7 + $0x28] sm:$0xff]
    %v496 = vld [vmem:[#allocation7 + $0x30] sm:$0xff]
    %v497 = vld [vmem:[#allocation7 + $0x38] sm:$0xff]
    %v498 = vld [vmem:[#allocation7 + $0x40] sm:$0xff]
    %v499 = vld [vmem:[#allocation7 + $0x48] sm:$0xff]
    %v500 = vld [vmem:[#allocation7 + $0x50] sm:$0xff]
    %v501 = vld [vmem:[#allocation7 + $0x58] sm:$0xff]
    %v502 = vld [vmem:[#allocation7 + $0x60] sm:$0xff]
    %v503 = vld [vmem:[#allocation7 + $0x68] sm:$0xff]
    %v504 = vld [vmem:[#allocation7 + $0x70] sm:$0xff]
    %v505 = vld [vmem:[#allocation7 + $0x78] sm:$0xff]
    %v506 = vld [vmem:[#allocation7 + $0x80] sm:$0xff]
    %v507 = vld [vmem:[#allocation7 + $0x88] sm:$0xff]
    %v508 = vld [vmem:[#allocation7 + $0x90] sm:$0xff]
    %v509 = vld [vmem:[#allocation7 + $0x98] sm:$0xff]
    %v510 = vld [vmem:[#allocation7 + $0xa0] sm:$0xff]
    %v511 = vld [vmem:[#allocation7 + $0xa8] sm:$0xff]
    %v512 = vld [vmem:[#allocation7 + $0xb0] sm:$0xff]
    %v513 = vld [vmem:[#allocation7 + $0xb8] sm:$0xff]
    %v514 = vld [vmem:[#allocation7 + $0xc0] sm:$0xff]
    %v515 = vld [vmem:[#allocation7 + $0xc8] sm:$0xff]
    %v516 = vld [vmem:[#allocation7 + $0xd0] sm:$0xff]
    %v517 = vld [vmem:[#allocation7 + $0xd8] sm:$0xff]
    %v518 = vld [vmem:[#allocation7 + $0xe0] sm:$0xff]
    %v519 = vld [vmem:[#allocation7 + $0xe8] sm:$0xff]
    %v520 = vld [vmem:[#allocation7 + $0xf0] sm:$0xff]
    %v521 = vld [vmem:[#allocation7 + $0xf8] sm:$0xff]
    %v522 = vld [vmem:[#allocation7 + $0x100] sm:$0xff]
    %v523 = vld [vmem:[#allocation7 + $0x108] sm:$0xff]
    %v524 = vld [vmem:[#allocation7 + $0x110] sm:$0xff]
    %v525 = vld [vmem:[#allocation7 + $0x118] sm:$0xff]
    %v526 = vld [vmem:[#allocation7 + $0x120] sm:$0xff]
    %v527 = vld [vmem:[#allocation7 + $0x128] sm:$0xff]
    %v528 = vld [vmem:[#allocation7 + $0x130] sm:$0xff]
    %v529 = vld [vmem:[#allocation7 + $0x138] sm:$0xff]
    %v530 = vld [vmem:[#allocation7 + $0x140] sm:$0xff]
    %v531 = vld [vmem:[#allocation7 + $0x148] sm:$0xff]
    %v532 = vld [vmem:[#allocation7 + $0x150] sm:$0xff]
    %v533 = vld [vmem:[#allocation7 + $0x158] sm:$0xff]
    %v534 = vld [vmem:[#allocation7 + $0x160] sm:$0xff]
    %v535 = vld [vmem:[#allocation7 + $0x168] sm:$0xff]
    %v536 = vld [vmem:[#allocation7 + $0x170] sm:$0xff]
    %v537 = vld [vmem:[#allocation7 + $0x178] sm:$0xff]
    %v538 = vld [vmem:[#allocation7 + $0x180] sm:$0xff]
    %v539 = vld [vmem:[#allocation7 + $0x188] sm:$0xff]
    %v540 = vld [vmem:[#allocation7 + $0x190] sm:$0xff]
    %v541 = vld [vmem:[#allocation7 + $0x198] sm:$0xff]
    %v542 = vld [vmem:[#allocation7 + $0x1a0] sm:$0xff]
    %v543 = vld [vmem:[#allocation7 + $0x1a8] sm:$0xff]
    %v544 = vld [vmem:[#allocation7 + $0x1b0] sm:$0xff]
    %v545 = vld [vmem:[#allocation7 + $0x1b8] sm:$0xff]
    %v546 = vld [vmem:[#allocation7 + $0x1c0] sm:$0xff]
    %v547 = vld [vmem:[#allocation7 + $0x1c8] sm:$0xff]
    %v548 = vld [vmem:[#allocation7 + $0x1d0] sm:$0xff]
    %v549 = vld [vmem:[#allocation7 + $0x1d8] sm:$0xff]
    %v550 = vld [vmem:[#allocation7 + $0x1e0] sm:$0xff]
    %v551 = vld [vmem:[#allocation7 + $0x1e8] sm:$0xff]
    %v552 = vld [vmem:[#allocation7 + $0x1f0] sm:$0xff]
    %v553 = vld [vmem:[#allocation7 + $0x1f8] sm:$0xff]
    %v554 = vld [vmem:[#allocation7 + $0x200] sm:$0xff]
    %v555 = vld [vmem:[#allocation7 + $0x208] sm:$0xff]
    %v556 = vld [vmem:[#allocation7 + $0x210] sm:$0xff]
    %v557 = vld [vmem:[#allocation7 + $0x218] sm:$0xff]
    %v558 = vld [vmem:[#allocation7 + $0x220] sm:$0xff]
    %v559 = vld [vmem:[#allocation7 + $0x228] sm:$0xff]
    %v560 = vld [vmem:[#allocation7 + $0x230] sm:$0xff]
    %v561 = vld [vmem:[#allocation7 + $0x238] sm:$0xff]
    %v562 = vld [vmem:[#allocation7 + $0x240] sm:$0xff]
    %v563 = vld [vmem:[#allocation7 + $0x248] sm:$0xff]
    %v564 = vld [vmem:[#allocation7 + $0x250] sm:$0xff]
    %v565 = vld [vmem:[#allocation7 + $0x258] sm:$0xff]
    %v566 = vld [vmem:[#allocation7 + $0x260] sm:$0xff]
    %v567 = vld [vmem:[#allocation7 + $0x268] sm:$0xff]
    %v568 = vld [vmem:[#allocation7 + $0x270] sm:$0xff]
    %v569 = vld [vmem:[#allocation7 + $0x278] sm:$0xff]
    %v570 = vld [vmem:[#allocation7 + $0x280] sm:$0xff]
    %v571 = vld [vmem:[#allocation7 + $0x288] sm:$0xff]
    %v572 = vld [vmem:[#allocation7 + $0x290] sm:$0xff]
    %v573 = vld [vmem:[#allocation7 + $0x298] sm:$0xff]
    %v574 = vld [vmem:[#allocation7 + $0x2a0] sm:$0xff]
    %v575 = vld [vmem:[#allocation7 + $0x2a8] sm:$0xff]
    %v576 = vld [vmem:[#allocation7 + $0x2b0] sm:$0xff]
    %v577 = vld [vmem:[#allocation7 + $0x2b8] sm:$0xff]
    %v578 = vld [vmem:[#allocation7 + $0x2c0] sm:$0xff]
    %v579 = vld [vmem:[#allocation7 + $0x2c8] sm:$0xff]
    %v580 = vld [vmem:[#allocation7 + $0x2d0] sm:$0xff]
    %v581 = vld [vmem:[#allocation7 + $0x2d8] sm:$0xff]
    %v582 = vld [vmem:[#allocation7 + $0x2e0] sm:$0xff]
    %v583 = vld [vmem:[#allocation7 + $0x2e8] sm:$0xff]
    %v584 = vld [vmem:[#allocation7 + $0x2f0] sm:$0xff]
    %v585 = vld [vmem:[#allocation7 + $0x2f8] sm:$0xff]
    %v586 = vld [vmem:[#allocation7 + $0x300] sm:$0xff]
    %v587 = vld [vmem:[#allocation7 + $0x308] sm:$0xff]
    %v588 = vld [vmem:[#allocation7 + $0x310] sm:$0xff]
    %v589 = vld [vmem:[#allocation7 + $0x318] sm:$0xff]
    %v590 = vld [vmem:[#allocation7 + $0x320] sm:$0xff]
    %v591 = vld [vmem:[#allocation7 + $0x328] sm:$0xff]
    %v592 = vld [vmem:[#allocation7 + $0x330] sm:$0xff]
    %v593 = vld [vmem:[#allocation7 + $0x338] sm:$0xff]
    %v594 = vld [vmem:[#allocation7 + $0x340] sm:$0xff]
    %v595 = vld [vmem:[#allocation7 + $0x348] sm:$0xff]
    %v596 = vld [vmem:[#allocation7 + $0x350] sm:$0xff]
    %v597 = vld [vmem:[#allocation7 + $0x358] sm:$0xff]
    %v598 = vld [vmem:[#allocation7 + $0x360] sm:$0xff]
    %v599 = vld [vmem:[#allocation7 + $0x368] sm:$0xff]
    %v600 = vld [vmem:[#allocation7 + $0x370] sm:$0xff]
    %v601 = vld [vmem:[#allocation7 + $0x378] sm:$0xff]
    %v602 = vld [vmem:[#allocation7 + $0x380] sm:$0xff]
    %v603 = vld [vmem:[#allocation7 + $0x388] sm:$0xff]
    %v604 = vld [vmem:[#allocation7 + $0x390] sm:$0xff]
    %v605 = vld [vmem:[#allocation7 + $0x398] sm:$0xff]
    %v606 = vld [vmem:[#allocation7 + $0x3a0] sm:$0xff]
    %v607 = vld [vmem:[#allocation7 + $0x3a8] sm:$0xff]
    %v608 = vld [vmem:[#allocation7 + $0x3b0] sm:$0xff]
    %v609 = vld [vmem:[#allocation7 + $0x3b8] sm:$0xff]
    %v610 = vld [vmem:[#allocation7 + $0x3c0] sm:$0xff]
    %v611 = vld [vmem:[#allocation7 + $0x3c8] sm:$0xff]
    %v612 = vld [vmem:[#allocation7 + $0x3d0] sm:$0xff]
    %v613 = vld [vmem:[#allocation7 + $0x3d8] sm:$0xff]
    %v614 = vld [vmem:[#allocation7 + $0x3e0] sm:$0xff]
    %v615 = vld [vmem:[#allocation7 + $0x3e8] sm:$0xff]
    %v616 = vld [vmem:[#allocation7 + $0x3f0] sm:$0xff]
    %v617 = vld [vmem:[#allocation7 + $0x3f8] sm:$0xff]
    %v618 = vld [vmem:[%s8] sm:$0xf]
    %v620 = vperm.slane %v618, 0
    %v621 = vperm.slane %v618, 1
    %v622 = vperm.slane %v618, 2
    %v623 = vperm.slane %v618, 3
    %v628 = vpack.c.bf16 %v621, %v620
    %v629 = vpack.c.bf16 %v623, %v622
    %v630 = vld [vmem:[#allocation8] sm:$0xff]
    %v631 = vld [vmem:[#allocation8 + $0x8] sm:$0xff]
    %v632 = vld [vmem:[#allocation8 + $0x10] sm:$0xff]
    %v633 = vld [vmem:[#allocation8 + $0x18] sm:$0xff]
    %v634 = vld [vmem:[#allocation8 + $0x20] sm:$0xff]
    %v635 = vld [vmem:[#allocation8 + $0x28] sm:$0xff]
    %v636 = vld [vmem:[#allocation8 + $0x30] sm:$0xff]
    %v637 = vld [vmem:[#allocation8 + $0x38] sm:$0xff]
    %v638 = vld [vmem:[#allocation8 + $0x40] sm:$0xff]
    %v639 = vld [vmem:[#allocation8 + $0x48] sm:$0xff]
    %v640 = vld [vmem:[#allocation8 + $0x50] sm:$0xff]
    %v641 = vld [vmem:[#allocation8 + $0x58] sm:$0xff]
    %v642 = vld [vmem:[#allocation8 + $0x60] sm:$0xff]
    %v643 = vld [vmem:[#allocation8 + $0x68] sm:$0xff]
    %v644 = vld [vmem:[#allocation8 + $0x70] sm:$0xff]
    %v645 = vld [vmem:[#allocation8 + $0x78] sm:$0xff]
    %v646 = vld [vmem:[#allocation8 + $0x80] sm:$0xff]
    %v647 = vld [vmem:[#allocation8 + $0x88] sm:$0xff]
    %v648 = vld [vmem:[#allocation8 + $0x90] sm:$0xff]
    %v649 = vld [vmem:[#allocation8 + $0x98] sm:$0xff]
    %v650 = vld [vmem:[#allocation8 + $0xa0] sm:$0xff]
    %v651 = vld [vmem:[#allocation8 + $0xa8] sm:$0xff]
    %v652 = vld [vmem:[#allocation8 + $0xb0] sm:$0xff]
    %v653 = vld [vmem:[#allocation8 + $0xb8] sm:$0xff]
    %v654 = vld [vmem:[#allocation8 + $0xc0] sm:$0xff]
    %v655 = vld [vmem:[#allocation8 + $0xc8] sm:$0xff]
    %v656 = vld [vmem:[#allocation8 + $0xd0] sm:$0xff]
    %v657 = vld [vmem:[#allocation8 + $0xd8] sm:$0xff]
    %v658 = vld [vmem:[#allocation8 + $0xe0] sm:$0xff]
    %v659 = vld [vmem:[#allocation8 + $0xe8] sm:$0xff]
    %v660 = vld [vmem:[#allocation8 + $0xf0] sm:$0xff]
    %v661 = vld [vmem:[#allocation8 + $0xf8] sm:$0xff]
    %v662 = vld [vmem:[#allocation8 + $0x100] sm:$0xff]
    %v663 = vld [vmem:[#allocation8 + $0x108] sm:$0xff]
    %v664 = vld [vmem:[#allocation8 + $0x110] sm:$0xff]
    %v665 = vld [vmem:[#allocation8 + $0x118] sm:$0xff]
    %v666 = vld [vmem:[#allocation8 + $0x120] sm:$0xff]
    %v667 = vld [vmem:[#allocation8 + $0x128] sm:$0xff]
    %v668 = vld [vmem:[#allocation8 + $0x130] sm:$0xff]
    %v669 = vld [vmem:[#allocation8 + $0x138] sm:$0xff]
    %v670 = vld [vmem:[#allocation8 + $0x140] sm:$0xff]
    %v671 = vld [vmem:[#allocation8 + $0x148] sm:$0xff]
    %v672 = vld [vmem:[#allocation8 + $0x150] sm:$0xff]
    %v673 = vld [vmem:[#allocation8 + $0x158] sm:$0xff]
    %v674 = vld [vmem:[#allocation8 + $0x160] sm:$0xff]
    %v675 = vld [vmem:[#allocation8 + $0x168] sm:$0xff]
    %v676 = vld [vmem:[#allocation8 + $0x170] sm:$0xff]
    %v677 = vld [vmem:[#allocation8 + $0x178] sm:$0xff]
    %v678 = vld [vmem:[#allocation8 + $0x180] sm:$0xff]
    %v679 = vld [vmem:[#allocation8 + $0x188] sm:$0xff]
    %v680 = vld [vmem:[#allocation8 + $0x190] sm:$0xff]
    %v681 = vld [vmem:[#allocation8 + $0x198] sm:$0xff]
    %v682 = vld [vmem:[#allocation8 + $0x1a0] sm:$0xff]
    %v683 = vld [vmem:[#allocation8 + $0x1a8] sm:$0xff]
    %v684 = vld [vmem:[#allocation8 + $0x1b0] sm:$0xff]
    %v685 = vld [vmem:[#allocation8 + $0x1b8] sm:$0xff]
    %v686 = vld [vmem:[#allocation8 + $0x1c0] sm:$0xff]
    %v687 = vld [vmem:[#allocation8 + $0x1c8] sm:$0xff]
    %v688 = vld [vmem:[#allocation8 + $0x1d0] sm:$0xff]
    %v689 = vld [vmem:[#allocation8 + $0x1d8] sm:$0xff]
    %v690 = vld [vmem:[#allocation8 + $0x1e0] sm:$0xff]
    %v691 = vld [vmem:[#allocation8 + $0x1e8] sm:$0xff]
    %v692 = vld [vmem:[#allocation8 + $0x1f0] sm:$0xff]
    %v693 = vld [vmem:[#allocation8 + $0x1f8] sm:$0xff]
    %v694 = vld [vmem:[#allocation8 + $0x200] sm:$0xff]
    %v695 = vld [vmem:[#allocation8 + $0x208] sm:$0xff]
    %v696 = vld [vmem:[#allocation8 + $0x210] sm:$0xff]
    %v697 = vld [vmem:[#allocation8 + $0x218] sm:$0xff]
    %v698 = vld [vmem:[#allocation8 + $0x220] sm:$0xff]
    %v699 = vld [vmem:[#allocation8 + $0x228] sm:$0xff]
    %v700 = vld [vmem:[#allocation8 + $0x230] sm:$0xff]
    %v701 = vld [vmem:[#allocation8 + $0x238] sm:$0xff]
    %v702 = vld [vmem:[#allocation8 + $0x240] sm:$0xff]
    %v703 = vld [vmem:[#allocation8 + $0x248] sm:$0xff]
    %v704 = vld [vmem:[#allocation8 + $0x250] sm:$0xff]
    %v705 = vld [vmem:[#allocation8 + $0x258] sm:$0xff]
    %v706 = vld [vmem:[#allocation8 + $0x260] sm:$0xff]
    %v707 = vld [vmem:[#allocation8 + $0x268] sm:$0xff]
    %v708 = vld [vmem:[#allocation8 + $0x270] sm:$0xff]
    %v709 = vld [vmem:[#allocation8 + $0x278] sm:$0xff]
    %v710 = vld [vmem:[#allocation8 + $0x280] sm:$0xff]
    %v711 = vld [vmem:[#allocation8 + $0x288] sm:$0xff]
    %v712 = vld [vmem:[#allocation8 + $0x290] sm:$0xff]
    %v713 = vld [vmem:[#allocation8 + $0x298] sm:$0xff]
    %v714 = vld [vmem:[#allocation8 + $0x2a0] sm:$0xff]
    %v715 = vld [vmem:[#allocation8 + $0x2a8] sm:$0xff]
    %v716 = vld [vmem:[#allocation8 + $0x2b0] sm:$0xff]
    %v717 = vld [vmem:[#allocation8 + $0x2b8] sm:$0xff]
    %v718 = vld [vmem:[#allocation8 + $0x2c0] sm:$0xff]
    %v719 = vld [vmem:[#allocation8 + $0x2c8] sm:$0xff]
    %v720 = vld [vmem:[#allocation8 + $0x2d0] sm:$0xff]
    %v721 = vld [vmem:[#allocation8 + $0x2d8] sm:$0xff]
    %v722 = vld [vmem:[#allocation8 + $0x2e0] sm:$0xff]
    %v723 = vld [vmem:[#allocation8 + $0x2e8] sm:$0xff]
    %v724 = vld [vmem:[#allocation8 + $0x2f0] sm:$0xff]
    %v725 = vld [vmem:[#allocation8 + $0x2f8] sm:$0xff]
    %v726 = vld [vmem:[#allocation8 + $0x300] sm:$0xff]
    %v727 = vld [vmem:[#allocation8 + $0x308] sm:$0xff]
    %v728 = vld [vmem:[#allocation8 + $0x310] sm:$0xff]
    %v729 = vld [vmem:[#allocation8 + $0x318] sm:$0xff]
    %v730 = vld [vmem:[#allocation8 + $0x320] sm:$0xff]
    %v731 = vld [vmem:[#allocation8 + $0x328] sm:$0xff]
    %v732 = vld [vmem:[#allocation8 + $0x330] sm:$0xff]
    %v733 = vld [vmem:[#allocation8 + $0x338] sm:$0xff]
    %v734 = vld [vmem:[#allocation8 + $0x340] sm:$0xff]
    %v735 = vld [vmem:[#allocation8 + $0x348] sm:$0xff]
    %v736 = vld [vmem:[#allocation8 + $0x350] sm:$0xff]
    %v737 = vld [vmem:[#allocation8 + $0x358] sm:$0xff]
    %v738 = vld [vmem:[#allocation8 + $0x360] sm:$0xff]
    %v739 = vld [vmem:[#allocation8 + $0x368] sm:$0xff]
    %v740 = vld [vmem:[#allocation8 + $0x370] sm:$0xff]
    %v741 = vld [vmem:[#allocation8 + $0x378] sm:$0xff]
    %v742 = vld [vmem:[#allocation8 + $0x380] sm:$0xff]
    %v743 = vld [vmem:[#allocation8 + $0x388] sm:$0xff]
    %v744 = vld [vmem:[#allocation8 + $0x390] sm:$0xff]
    %v745 = vld [vmem:[#allocation8 + $0x398] sm:$0xff]
    %v746 = vld [vmem:[#allocation8 + $0x3a0] sm:$0xff]
    %v747 = vld [vmem:[#allocation8 + $0x3a8] sm:$0xff]
    %v748 = vld [vmem:[#allocation8 + $0x3b0] sm:$0xff]
    %v749 = vld [vmem:[#allocation8 + $0x3b8] sm:$0xff]
    %v750 = vld [vmem:[#allocation8 + $0x3c0] sm:$0xff]
    %v751 = vld [vmem:[#allocation8 + $0x3c8] sm:$0xff]
    %v752 = vld [vmem:[#allocation8 + $0x3d0] sm:$0xff]
    %v753 = vld [vmem:[#allocation8 + $0x3d8] sm:$0xff]
    %v754 = vld [vmem:[#allocation8 + $0x3e0] sm:$0xff]
    %v755 = vld [vmem:[#allocation8 + $0x3e8] sm:$0xff]
    %v756 = vld [vmem:[#allocation8 + $0x3f0] sm:$0xff]
    %v757 = vld [vmem:[#allocation8 + $0x3f8] sm:$0xff]
    %v758 = vld [vmem:[%s10] sm:$0xf]
    %v760 = vperm.slane %v758, 0
    %v761 = vperm.slane %v758, 1
    %v762 = vperm.slane %v758, 2
    %v763 = vperm.slane %v758, 3
    %v768 = vpack.c.bf16 %v761, %v760
    %v769 = vpack.c.bf16 %v763, %v762
    %v770 = vld [vmem:[%s11] sm:$0xf]
    %v771 = vld [vmem:[#allocation2] sm:$0x1]
    %v772 = vld [vmem:[%s0] sm:$0xff]
    %v773 = vld [vmem:[%s0 + $0x8] sm:$0xff]
    %v774 = vld [vmem:[%s0 + $0x10] sm:$0xff]
    %v775 = vld [vmem:[%s0 + $0x18] sm:$0xff]
    %v776 = vld [vmem:[%s0 + $0x20] sm:$0xff]
    %v777 = vld [vmem:[%s0 + $0x28] sm:$0xff]
    %v778 = vld [vmem:[%s0 + $0x30] sm:$0xff]
    %v779 = vpack.c.bf16 %v772, %v772
    %v780 = vpack.c.bf16 %v773, %v773
    %v781 = vpack.c.bf16 %v774, %v774
    %v782 = vpack.c.bf16 %v775, %v775
    %v783 = vpack.c.bf16 %v776, %v776
    %v784 = vpack.c.bf16 %v777, %v777
    %v785 = vpack.c.bf16 %v778, %v778
    %v786 = vld [vmem:[%s1] sm:$0xff]
    %v787 = vpack.c.bf16 %v786, %v786
    %v820 = vunpack.c.l.b16 %v306
    %v821 = vunpack.c.h.b16 %v306
    %v822 = vunpack.c.l.b16 %v307
    %v823 = vunpack.c.h.b16 %v307
    %v824 = vunpack.c.l.b16 %v308
    %v825 = vunpack.c.h.b16 %v308
    %v826 = vunpack.c.l.b16 %v309
    %v827 = vunpack.c.h.b16 %v309
    %v828 = vunpack.c.l.b16 %v310
    %v829 = vunpack.c.h.b16 %v310
    %v830 = vunpack.c.l.b16 %v311
    %v831 = vunpack.c.h.b16 %v311
    %v832 = vunpack.c.l.b16 %v312
    %v833 = vunpack.c.h.b16 %v312
    %v834 = vunpack.c.l.b16 %v313
    %v835 = vunpack.c.h.b16 %v313
    %v836 = vunpack.c.l.b16 %v314
    %v837 = vunpack.c.h.b16 %v314
    %v838 = vunpack.c.l.b16 %v315
    %v839 = vunpack.c.h.b16 %v315
    %v840 = vunpack.c.l.b16 %v316
    %v841 = vunpack.c.h.b16 %v316
    %v842 = vunpack.c.l.b16 %v317
    %v843 = vunpack.c.h.b16 %v317
    %v844 = vunpack.c.l.b16 %v318
    %v845 = vunpack.c.h.b16 %v318
    %v846 = vunpack.c.l.b16 %v319
    %v847 = vunpack.c.h.b16 %v319
    %v848 = vunpack.c.l.b16 %v320
    %v849 = vunpack.c.h.b16 %v320
    %v850 = vunpack.c.l.b16 %v321
    %v851 = vunpack.c.h.b16 %v321
    %v852 = vunpack.c.l.b16 %v322
    %v853 = vunpack.c.h.b16 %v322
    %v854 = vunpack.c.l.b16 %v323
    %v855 = vunpack.c.h.b16 %v323
    %v856 = vunpack.c.l.b16 %v324
    %v857 = vunpack.c.h.b16 %v324
    %v858 = vunpack.c.l.b16 %v325
    %v859 = vunpack.c.h.b16 %v325
    %v860 = vunpack.c.l.b16 %v326
    %v861 = vunpack.c.h.b16 %v326
    %v862 = vunpack.c.l.b16 %v327
    %v863 = vunpack.c.h.b16 %v327
    %v864 = vunpack.c.l.b16 %v328
    %v865 = vunpack.c.h.b16 %v328
    %v866 = vunpack.c.l.b16 %v329
    %v867 = vunpack.c.h.b16 %v329
    %v868 = vunpack.c.l.b16 %v330
    %v869 = vunpack.c.h.b16 %v330
    %v870 = vunpack.c.l.b16 %v331
    %v871 = vunpack.c.h.b16 %v331
    %v872 = vunpack.c.l.b16 %v332
    %v873 = vunpack.c.h.b16 %v332
    %v874 = vunpack.c.l.b16 %v333
    %v875 = vunpack.c.h.b16 %v333
    %v876 = vunpack.c.l.b16 %v334
    %v877 = vunpack.c.h.b16 %v334
    %v878 = vunpack.c.l.b16 %v335
    %v879 = vunpack.c.h.b16 %v335
    %v880 = vunpack.c.l.b16 %v336
    %v881 = vunpack.c.h.b16 %v336
    %v882 = vunpack.c.l.b16 %v337
    %v883 = vunpack.c.h.b16 %v337
    %v884 = vpack.c.b16 %v824, %v820
    %v885 = vpack.c.b16 %v825, %v821
    %v886 = vpack.c.b16 %v826, %v822
    %v887 = vpack.c.b16 %v827, %v823
    %v888 = vpack.c.b16 %v832, %v828
    %v889 = vpack.c.b16 %v833, %v829
    %v890 = vpack.c.b16 %v834, %v830
    %v891 = vpack.c.b16 %v835, %v831
    %v892 = vpack.c.b16 %v840, %v836
    %v893 = vpack.c.b16 %v841, %v837
    %v894 = vpack.c.b16 %v842, %v838
    %v895 = vpack.c.b16 %v843, %v839
    %v896 = vpack.c.b16 %v848, %v844
    %v897 = vpack.c.b16 %v849, %v845
    %v898 = vpack.c.b16 %v850, %v846
    %v899 = vpack.c.b16 %v851, %v847
    %v900 = vpack.c.b16 %v856, %v852
    %v901 = vpack.c.b16 %v857, %v853
    %v902 = vpack.c.b16 %v858, %v854
    %v903 = vpack.c.b16 %v859, %v855
    %v904 = vpack.c.b16 %v864, %v860
    %v905 = vpack.c.b16 %v865, %v861
    %v906 = vpack.c.b16 %v866, %v862
    %v907 = vpack.c.b16 %v867, %v863
    %v908 = vpack.c.b16 %v872, %v868
    %v909 = vpack.c.b16 %v873, %v869
    %v910 = vpack.c.b16 %v874, %v870
    %v911 = vpack.c.b16 %v875, %v871
    %v912 = vpack.c.b16 %v880, %v876
    %v913 = vpack.c.b16 %v881, %v877
    %v914 = vpack.c.b16 %v882, %v878
    %v915 = vpack.c.b16 %v883, %v879
    %948 = vmatpush.bf16.msra.mxu0 %v912
    %949 = vmatpush.bf16.msra.mxu0 %v908
    %950 = vmatpush.bf16.msra.mxu0 %v904
    %951 = vmatpush.bf16.msra.mxu0 %v900
    %952 = vmatpush.bf16.msra.mxu0 %v896
    %953 = vmatpush.bf16.msra.mxu0 %v892
    %954 = vmatpush.bf16.msra.mxu0 %v888
    %955 = vmatpush.bf16.msra.mxu0 %v884
    %956 = vmatmul.bf16.gmra.mxu0 %v787
    %v957 = vpop.f32.mrf.mxu0
    %v958 = vadd.f32 0.0, %v957
    %v959 = vpop.f32.mrf.mxu0
    %960 = vdwg.mxu0
    %961 = vmatpush.bf16.msra.mxu0 %v913
    %962 = vmatpush.bf16.msra.mxu0 %v909
    %963 = vmatpush.bf16.msra.mxu0 %v905
    %964 = vmatpush.bf16.msra.mxu0 %v901
    %965 = vmatpush.bf16.msra.mxu0 %v897
    %966 = vmatpush.bf16.msra.mxu0 %v893
    %967 = vmatpush.bf16.msra.mxu0 %v889
    %968 = vmatpush.bf16.msra.mxu0 %v885
    %969 = vmatmul.bf16.gmra.mxu0 %v787
    %v970 = vpop.f32.mrf.mxu0
    %v971 = vadd.f32 0.0, %v970
    %v972 = vpop.f32.mrf.mxu0
    %973 = vdwg.mxu0
    %974 = vmatpush.bf16.msra.mxu0 %v914
    %975 = vmatpush.bf16.msra.mxu0 %v910
    %976 = vmatpush.bf16.msra.mxu0 %v906
    %977 = vmatpush.bf16.msra.mxu0 %v902
    %978 = vmatpush.bf16.msra.mxu0 %v898
    %979 = vmatpush.bf16.msra.mxu0 %v894
    %980 = vmatpush.bf16.msra.mxu0 %v890
    %981 = vmatpush.bf16.msra.mxu0 %v886
    %982 = vmatmul.bf16.gmra.mxu0 %v787
    %v983 = vpop.f32.mrf.mxu0
    %v984 = vadd.f32 0.0, %v983
    %v985 = vpop.f32.mrf.mxu0
    %986 = vdwg.mxu0
    %987 = vmatpush.bf16.msra.mxu0 %v915
    %988 = vmatpush.bf16.msra.mxu0 %v911
    %989 = vmatpush.bf16.msra.mxu0 %v907
    %990 = vmatpush.bf16.msra.mxu0 %v903
    %991 = vmatpush.bf16.msra.mxu0 %v899
    %992 = vmatpush.bf16.msra.mxu0 %v895
    %993 = vmatpush.bf16.msra.mxu0 %v891
    %994 = vmatpush.bf16.msra.mxu0 %v887
    %995 = vmatmul.bf16.gmra.mxu0 %v787
    %v996 = vpop.f32.mrf.mxu0
    %v997 = vadd.f32 0.0, %v996
    %v998 = vpop.f32.mrf.mxu0
    %999 = vdwg.mxu0
    %v1196 = vunpack.c.l.b16 %v110
    %v1197 = vunpack.c.h.b16 %v110
    %v1198 = vunpack.c.l.b16 %v111
    %v1199 = vunpack.c.h.b16 %v111
    %v1200 = vunpack.c.l.b16 %v112
    %v1201 = vunpack.c.h.b16 %v112
    %v1202 = vunpack.c.l.b16 %v113
    %v1203 = vunpack.c.h.b16 %v113
    %v1204 = vunpack.c.l.b16 %v114
    %v1205 = vunpack.c.h.b16 %v114
    %v1206 = vunpack.c.l.b16 %v115
    %v1207 = vunpack.c.h.b16 %v115
    %v1208 = vunpack.c.l.b16 %v116
    %v1209 = vunpack.c.h.b16 %v116
    %v1210 = vunpack.c.l.b16 %v117
    %v1211 = vunpack.c.h.b16 %v117
    %v1212 = vunpack.c.l.b16 %v118
    %v1213 = vunpack.c.h.b16 %v118
    %v1214 = vunpack.c.l.b16 %v119
    %v1215 = vunpack.c.h.b16 %v119
    %v1216 = vunpack.c.l.b16 %v120
    %v1217 = vunpack.c.h.b16 %v120
    %v1218 = vunpack.c.l.b16 %v121
    %v1219 = vunpack.c.h.b16 %v121
    %v1220 = vunpack.c.l.b16 %v122
    %v1221 = vunpack.c.h.b16 %v122
    %v1222 = vunpack.c.l.b16 %v123
    %v1223 = vunpack.c.h.b16 %v123
    %v1224 = vunpack.c.l.b16 %v124
    %v1225 = vunpack.c.h.b16 %v124
    %v1226 = vunpack.c.l.b16 %v125
    %v1227 = vunpack.c.h.b16 %v125
    %v1228 = vunpack.c.l.b16 %v126
    %v1229 = vunpack.c.h.b16 %v126
    %v1230 = vunpack.c.l.b16 %v127
    %v1231 = vunpack.c.h.b16 %v127
    %v1232 = vunpack.c.l.b16 %v128
    %v1233 = vunpack.c.h.b16 %v128
    %v1234 = vunpack.c.l.b16 %v129
    %v1235 = vunpack.c.h.b16 %v129
    %v1236 = vunpack.c.l.b16 %v130
    %v1237 = vunpack.c.h.b16 %v130
    %v1238 = vunpack.c.l.b16 %v131
    %v1239 = vunpack.c.h.b16 %v131
    %v1240 = vunpack.c.l.b16 %v132
    %v1241 = vunpack.c.h.b16 %v132
    %v1242 = vunpack.c.l.b16 %v133
    %v1243 = vunpack.c.h.b16 %v133
    %v1244 = vunpack.c.l.b16 %v134
    %v1245 = vunpack.c.h.b16 %v134
    %v1246 = vunpack.c.l.b16 %v135
    %v1247 = vunpack.c.h.b16 %v135
    %v1248 = vunpack.c.l.b16 %v136
    %v1249 = vunpack.c.h.b16 %v136
    %v1250 = vunpack.c.l.b16 %v137
    %v1251 = vunpack.c.h.b16 %v137
    %v1252 = vunpack.c.l.b16 %v138
    %v1253 = vunpack.c.h.b16 %v138
    %v1254 = vunpack.c.l.b16 %v139
    %v1255 = vunpack.c.h.b16 %v139
    %v1256 = vunpack.c.l.b16 %v140
    %v1257 = vunpack.c.h.b16 %v140
    %v1258 = vunpack.c.l.b16 %v141
    %v1259 = vunpack.c.h.b16 %v141
    %v1260 = vunpack.c.l.b16 %v142
    %v1261 = vunpack.c.h.b16 %v142
    %v1262 = vunpack.c.l.b16 %v143
    %v1263 = vunpack.c.h.b16 %v143
    %v1264 = vunpack.c.l.b16 %v144
    %v1265 = vunpack.c.h.b16 %v144
    %v1266 = vunpack.c.l.b16 %v145
    %v1267 = vunpack.c.h.b16 %v145
    %v1268 = vunpack.c.l.b16 %v146
    %v1269 = vunpack.c.h.b16 %v146
    %v1270 = vunpack.c.l.b16 %v147
    %v1271 = vunpack.c.h.b16 %v147
    %v1272 = vunpack.c.l.b16 %v148
    %v1273 = vunpack.c.h.b16 %v148
    %v1274 = vunpack.c.l.b16 %v149
    %v1275 = vunpack.c.h.b16 %v149
    %v1276 = vunpack.c.l.b16 %v150
    %v1277 = vunpack.c.h.b16 %v150
    %v1278 = vunpack.c.l.b16 %v151
    %v1279 = vunpack.c.h.b16 %v151
    %v1280 = vunpack.c.l.b16 %v152
    %v1281 = vunpack.c.h.b16 %v152
    %v1282 = vunpack.c.l.b16 %v153
    %v1283 = vunpack.c.h.b16 %v153
    %v1284 = vunpack.c.l.b16 %v154
    %v1285 = vunpack.c.h.b16 %v154
    %v1286 = vunpack.c.l.b16 %v155
    %v1287 = vunpack.c.h.b16 %v155
    %v1288 = vunpack.c.l.b16 %v156
    %v1289 = vunpack.c.h.b16 %v156
    %v1290 = vunpack.c.l.b16 %v157
    %v1291 = vunpack.c.h.b16 %v157
    %v1292 = vunpack.c.l.b16 %v158
    %v1293 = vunpack.c.h.b16 %v158
    %v1294 = vunpack.c.l.b16 %v159
    %v1295 = vunpack.c.h.b16 %v159
    %v1296 = vunpack.c.l.b16 %v160
    %v1297 = vunpack.c.h.b16 %v160
    %v1298 = vunpack.c.l.b16 %v161
    %v1299 = vunpack.c.h.b16 %v161
    %v1300 = vunpack.c.l.b16 %v162
    %v1301 = vunpack.c.h.b16 %v162
    %v1302 = vunpack.c.l.b16 %v163
    %v1303 = vunpack.c.h.b16 %v163
    %v1304 = vunpack.c.l.b16 %v164
    %v1305 = vunpack.c.h.b16 %v164
    %v1306 = vunpack.c.l.b16 %v165
    %v1307 = vunpack.c.h.b16 %v165
    %v1308 = vunpack.c.l.b16 %v166
    %v1309 = vunpack.c.h.b16 %v166
    %v1310 = vunpack.c.l.b16 %v167
    %v1311 = vunpack.c.h.b16 %v167
    %v1312 = vunpack.c.l.b16 %v168
    %v1313 = vunpack.c.h.b16 %v168
    %v1314 = vunpack.c.l.b16 %v169
    %v1315 = vunpack.c.h.b16 %v169
    %v1316 = vunpack.c.l.b16 %v170
    %v1317 = vunpack.c.h.b16 %v170
    %v1318 = vunpack.c.l.b16 %v171
    %v1319 = vunpack.c.h.b16 %v171
    %v1320 = vunpack.c.l.b16 %v172
    %v1321 = vunpack.c.h.b16 %v172
    %v1322 = vunpack.c.l.b16 %v173
    %v1323 = vunpack.c.h.b16 %v173
    %v1324 = vunpack.c.l.b16 %v174
    %v1325 = vunpack.c.h.b16 %v174
    %v1326 = vunpack.c.l.b16 %v175
    %v1327 = vunpack.c.h.b16 %v175
    %v1328 = vunpack.c.l.b16 %v176
    %v1329 = vunpack.c.h.b16 %v176
    %v1330 = vunpack.c.l.b16 %v177
    %v1331 = vunpack.c.h.b16 %v177
    %v1332 = vunpack.c.l.b16 %v178
    %v1333 = vunpack.c.h.b16 %v178
    %v1334 = vunpack.c.l.b16 %v179
    %v1335 = vunpack.c.h.b16 %v179
    %v1336 = vunpack.c.l.b16 %v180
    %v1337 = vunpack.c.h.b16 %v180
    %v1338 = vunpack.c.l.b16 %v181
    %v1339 = vunpack.c.h.b16 %v181
    %v1340 = vunpack.c.l.b16 %v182
    %v1341 = vunpack.c.h.b16 %v182
    %v1342 = vunpack.c.l.b16 %v183
    %v1343 = vunpack.c.h.b16 %v183
    %v1344 = vunpack.c.l.b16 %v184
    %v1345 = vunpack.c.h.b16 %v184
    %v1346 = vunpack.c.l.b16 %v185
    %v1347 = vunpack.c.h.b16 %v185
    %v1348 = vunpack.c.l.b16 %v186
    %v1349 = vunpack.c.h.b16 %v186
    %v1350 = vunpack.c.l.b16 %v187
    %v1351 = vunpack.c.h.b16 %v187
    %v1352 = vunpack.c.l.b16 %v188
    %v1353 = vunpack.c.h.b16 %v188
    %v1354 = vunpack.c.l.b16 %v189
    %v1355 = vunpack.c.h.b16 %v189
    %v1356 = vunpack.c.l.b16 %v190
    %v1357 = vunpack.c.h.b16 %v190
    %v1358 = vunpack.c.l.b16 %v191
    %v1359 = vunpack.c.h.b16 %v191
    %v1360 = vunpack.c.l.b16 %v192
    %v1361 = vunpack.c.h.b16 %v192
    %v1362 = vunpack.c.l.b16 %v193
    %v1363 = vunpack.c.h.b16 %v193
    %v1364 = vunpack.c.l.b16 %v194
    %v1365 = vunpack.c.h.b16 %v194
    %v1366 = vunpack.c.l.b16 %v195
    %v1367 = vunpack.c.h.b16 %v195
    %v1368 = vunpack.c.l.b16 %v196
    %v1369 = vunpack.c.h.b16 %v196
    %v1370 = vunpack.c.l.b16 %v197
    %v1371 = vunpack.c.h.b16 %v197
    %v1372 = vunpack.c.l.b16 %v198
    %v1373 = vunpack.c.h.b16 %v198
    %v1374 = vunpack.c.l.b16 %v199
    %v1375 = vunpack.c.h.b16 %v199
    %v1376 = vunpack.c.l.b16 %v200
    %v1377 = vunpack.c.h.b16 %v200
    %v1378 = vunpack.c.l.b16 %v201
    %v1379 = vunpack.c.h.b16 %v201
    %v1380 = vunpack.c.l.b16 %v202
    %v1381 = vunpack.c.h.b16 %v202
    %v1382 = vunpack.c.l.b16 %v203
    %v1383 = vunpack.c.h.b16 %v203
    %v1384 = vunpack.c.l.b16 %v204
    %v1385 = vunpack.c.h.b16 %v204
    %v1386 = vunpack.c.l.b16 %v205
    %v1387 = vunpack.c.h.b16 %v205
    %v1388 = vunpack.c.l.b16 %v206
    %v1389 = vunpack.c.h.b16 %v206
    %v1390 = vunpack.c.l.b16 %v207
    %v1391 = vunpack.c.h.b16 %v207
    %v1392 = vunpack.c.l.b16 %v208
    %v1393 = vunpack.c.h.b16 %v208
    %v1394 = vunpack.c.l.b16 %v209
    %v1395 = vunpack.c.h.b16 %v209
    %v1396 = vunpack.c.l.b16 %v210
    %v1397 = vunpack.c.h.b16 %v210
    %v1398 = vunpack.c.l.b16 %v211
    %v1399 = vunpack.c.h.b16 %v211
    %v1400 = vunpack.c.l.b16 %v212
    %v1401 = vunpack.c.h.b16 %v212
    %v1402 = vunpack.c.l.b16 %v213
    %v1403 = vunpack.c.h.b16 %v213
    %v1404 = vunpack.c.l.b16 %v214
    %v1405 = vunpack.c.h.b16 %v214
    %v1406 = vunpack.c.l.b16 %v215
    %v1407 = vunpack.c.h.b16 %v215
    %v1408 = vunpack.c.l.b16 %v216
    %v1409 = vunpack.c.h.b16 %v216
    %v1410 = vunpack.c.l.b16 %v217
    %v1411 = vunpack.c.h.b16 %v217
    %v1412 = vunpack.c.l.b16 %v218
    %v1413 = vunpack.c.h.b16 %v218
    %v1414 = vunpack.c.l.b16 %v219
    %v1415 = vunpack.c.h.b16 %v219
    %v1416 = vunpack.c.l.b16 %v220
    %v1417 = vunpack.c.h.b16 %v220
    %v1418 = vunpack.c.l.b16 %v221
    %v1419 = vunpack.c.h.b16 %v221
    %v1420 = vunpack.c.l.b16 %v222
    %v1421 = vunpack.c.h.b16 %v222
    %v1422 = vunpack.c.l.b16 %v223
    %v1423 = vunpack.c.h.b16 %v223
    %v1424 = vunpack.c.l.b16 %v224
    %v1425 = vunpack.c.h.b16 %v224
    %v1426 = vunpack.c.l.b16 %v225
    %v1427 = vunpack.c.h.b16 %v225
    %v1428 = vunpack.c.l.b16 %v226
    %v1429 = vunpack.c.h.b16 %v226
    %v1430 = vunpack.c.l.b16 %v227
    %v1431 = vunpack.c.h.b16 %v227
    %v1432 = vunpack.c.l.b16 %v228
    %v1433 = vunpack.c.h.b16 %v228
    %v1434 = vunpack.c.l.b16 %v229
    %v1435 = vunpack.c.h.b16 %v229
    %v1436 = vunpack.c.l.b16 %v230
    %v1437 = vunpack.c.h.b16 %v230
    %v1438 = vunpack.c.l.b16 %v231
    %v1439 = vunpack.c.h.b16 %v231
    %v1440 = vunpack.c.l.b16 %v232
    %v1441 = vunpack.c.h.b16 %v232
    %v1442 = vunpack.c.l.b16 %v233
    %v1443 = vunpack.c.h.b16 %v233
    %v1444 = vunpack.c.l.b16 %v234
    %v1445 = vunpack.c.h.b16 %v234
    %v1446 = vunpack.c.l.b16 %v235
    %v1447 = vunpack.c.h.b16 %v235
    %v1448 = vunpack.c.l.b16 %v236
    %v1449 = vunpack.c.h.b16 %v236
    %v1450 = vunpack.c.l.b16 %v237
    %v1451 = vunpack.c.h.b16 %v237
    %v1452 = vunpack.c.l.b16 %v238
    %v1453 = vunpack.c.h.b16 %v238
    %v1454 = vunpack.c.l.b16 %v239
    %v1455 = vunpack.c.h.b16 %v239
    %v1456 = vunpack.c.l.b16 %v240
    %v1457 = vunpack.c.h.b16 %v240
    %v1458 = vunpack.c.l.b16 %v241
    %v1459 = vunpack.c.h.b16 %v241
    %v1460 = vunpack.c.l.b16 %v242
    %v1461 = vunpack.c.h.b16 %v242
    %v1462 = vunpack.c.l.b16 %v243
    %v1463 = vunpack.c.h.b16 %v243
    %v1464 = vunpack.c.l.b16 %v244
    %v1465 = vunpack.c.h.b16 %v244
    %v1466 = vunpack.c.l.b16 %v245
    %v1467 = vunpack.c.h.b16 %v245
    %v1468 = vunpack.c.l.b16 %v246
    %v1469 = vunpack.c.h.b16 %v246
    %v1470 = vunpack.c.l.b16 %v247
    %v1471 = vunpack.c.h.b16 %v247
    %v1472 = vunpack.c.l.b16 %v248
    %v1473 = vunpack.c.h.b16 %v248
    %v1474 = vunpack.c.l.b16 %v249
    %v1475 = vunpack.c.h.b16 %v249
    %v1476 = vunpack.c.l.b16 %v250
    %v1477 = vunpack.c.h.b16 %v250
    %v1478 = vunpack.c.l.b16 %v251
    %v1479 = vunpack.c.h.b16 %v251
    %v1480 = vunpack.c.l.b16 %v252
    %v1481 = vunpack.c.h.b16 %v252
    %v1482 = vunpack.c.l.b16 %v253
    %v1483 = vunpack.c.h.b16 %v253
    %v1484 = vunpack.c.l.b16 %v254
    %v1485 = vunpack.c.h.b16 %v254
    %v1486 = vunpack.c.l.b16 %v255
    %v1487 = vunpack.c.h.b16 %v255
    %v1488 = vunpack.c.l.b16 %v256
    %v1489 = vunpack.c.h.b16 %v256
    %v1490 = vunpack.c.l.b16 %v257
    %v1491 = vunpack.c.h.b16 %v257
    %v1492 = vunpack.c.l.b16 %v258
    %v1493 = vunpack.c.h.b16 %v258
    %v1494 = vunpack.c.l.b16 %v259
    %v1495 = vunpack.c.h.b16 %v259
    %v1496 = vunpack.c.l.b16 %v260
    %v1497 = vunpack.c.h.b16 %v260
    %v1498 = vunpack.c.l.b16 %v261
    %v1499 = vunpack.c.h.b16 %v261
    %v1500 = vunpack.c.l.b16 %v262
    %v1501 = vunpack.c.h.b16 %v262
    %v1502 = vunpack.c.l.b16 %v263
    %v1503 = vunpack.c.h.b16 %v263
    %v1504 = vunpack.c.l.b16 %v264
    %v1505 = vunpack.c.h.b16 %v264
    %v1506 = vunpack.c.l.b16 %v265
    %v1507 = vunpack.c.h.b16 %v265
    %v1508 = vunpack.c.l.b16 %v266
    %v1509 = vunpack.c.h.b16 %v266
    %v1510 = vunpack.c.l.b16 %v267
    %v1511 = vunpack.c.h.b16 %v267
    %v1512 = vunpack.c.l.b16 %v268
    %v1513 = vunpack.c.h.b16 %v268
    %v1514 = vunpack.c.l.b16 %v269
    %v1515 = vunpack.c.h.b16 %v269
    %v1516 = vunpack.c.l.b16 %v270
    %v1517 = vunpack.c.h.b16 %v270
    %v1518 = vunpack.c.l.b16 %v271
    %v1519 = vunpack.c.h.b16 %v271
    %v1520 = vunpack.c.l.b16 %v272
    %v1521 = vunpack.c.h.b16 %v272
    %v1522 = vunpack.c.l.b16 %v273
    %v1523 = vunpack.c.h.b16 %v273
    %v1524 = vunpack.c.l.b16 %v274
    %v1525 = vunpack.c.h.b16 %v274
    %v1526 = vunpack.c.l.b16 %v275
    %v1527 = vunpack.c.h.b16 %v275
    %v1528 = vunpack.c.l.b16 %v276
    %v1529 = vunpack.c.h.b16 %v276
    %v1530 = vunpack.c.l.b16 %v277
    %v1531 = vunpack.c.h.b16 %v277
    %v1532 = vunpack.c.l.b16 %v278
    %v1533 = vunpack.c.h.b16 %v278
    %v1534 = vunpack.c.l.b16 %v279
    %v1535 = vunpack.c.h.b16 %v279
    %v1536 = vunpack.c.l.b16 %v280
    %v1537 = vunpack.c.h.b16 %v280
    %v1538 = vunpack.c.l.b16 %v281
    %v1539 = vunpack.c.h.b16 %v281
    %v1540 = vunpack.c.l.b16 %v282
    %v1541 = vunpack.c.h.b16 %v282
    %v1542 = vunpack.c.l.b16 %v283
    %v1543 = vunpack.c.h.b16 %v283
    %v1544 = vunpack.c.l.b16 %v284
    %v1545 = vunpack.c.h.b16 %v284
    %v1546 = vunpack.c.l.b16 %v285
    %v1547 = vunpack.c.h.b16 %v285
    %v1548 = vunpack.c.l.b16 %v286
    %v1549 = vunpack.c.h.b16 %v286
    %v1550 = vunpack.c.l.b16 %v287
    %v1551 = vunpack.c.h.b16 %v287
    %v1552 = vunpack.c.l.b16 %v288
    %v1553 = vunpack.c.h.b16 %v288
    %v1554 = vunpack.c.l.b16 %v289
    %v1555 = vunpack.c.h.b16 %v289
    %v1556 = vunpack.c.l.b16 %v290
    %v1557 = vunpack.c.h.b16 %v290
    %v1558 = vunpack.c.l.b16 %v291
    %v1559 = vunpack.c.h.b16 %v291
    %v1560 = vunpack.c.l.b16 %v292
    %v1561 = vunpack.c.h.b16 %v292
    %v1562 = vunpack.c.l.b16 %v293
    %v1563 = vunpack.c.h.b16 %v293
    %v1564 = vunpack.c.l.b16 %v294
    %v1565 = vunpack.c.h.b16 %v294
    %v1566 = vunpack.c.l.b16 %v295
    %v1567 = vunpack.c.h.b16 %v295
    %v1568 = vunpack.c.l.b16 %v296
    %v1569 = vunpack.c.h.b16 %v296
    %v1570 = vunpack.c.l.b16 %v297
    %v1571 = vunpack.c.h.b16 %v297
    %v1572 = vunpack.c.l.b16 %v298
    %v1573 = vunpack.c.h.b16 %v298
    %v1574 = vunpack.c.l.b16 %v299
    %v1575 = vunpack.c.h.b16 %v299
    %v1576 = vunpack.c.l.b16 %v300
    %v1577 = vunpack.c.h.b16 %v300
    %v1578 = vunpack.c.l.b16 %v301
    %v1579 = vunpack.c.h.b16 %v301
    %v1580 = vunpack.c.l.b16 %v302
    %v1581 = vunpack.c.h.b16 %v302
    %v1582 = vunpack.c.l.b16 %v303
    %v1583 = vunpack.c.h.b16 %v303
    %v1584 = vunpack.c.l.b16 %v304
    %v1585 = vunpack.c.h.b16 %v304
    %v1586 = vunpack.c.l.b16 %v305
    %v1587 = vunpack.c.h.b16 %v305
    %v1588 = vpack.c.b16 %v1200, %v1196
    %v1589 = vpack.c.b16 %v1201, %v1197
    %v1590 = vpack.c.b16 %v1202, %v1198
    %v1591 = vpack.c.b16 %v1203, %v1199
    %v1592 = vpack.c.b16 %v1208, %v1204
    %v1593 = vpack.c.b16 %v1209, %v1205
    %v1594 = vpack.c.b16 %v1210, %v1206
    %v1595 = vpack.c.b16 %v1211, %v1207
    %v1596 = vpack.c.b16 %v1216, %v1212
    %v1597 = vpack.c.b16 %v1217, %v1213
    %v1598 = vpack.c.b16 %v1218, %v1214
    %v1599 = vpack.c.b16 %v1219, %v1215
    %v1600 = vpack.c.b16 %v1224, %v1220
    %v1601 = vpack.c.b16 %v1225, %v1221
    %v1602 = vpack.c.b16 %v1226, %v1222
    %v1603 = vpack.c.b16 %v1227, %v1223
    %v1604 = vpack.c.b16 %v1232, %v1228
    %v1605 = vpack.c.b16 %v1233, %v1229
    %v1606 = vpack.c.b16 %v1234, %v1230
    %v1607 = vpack.c.b16 %v1235, %v1231
    %v1608 = vpack.c.b16 %v1240, %v1236
    %v1609 = vpack.c.b16 %v1241, %v1237
    %v1610 = vpack.c.b16 %v1242, %v1238
    %v1611 = vpack.c.b16 %v1243, %v1239
    %v1612 = vpack.c.b16 %v1248, %v1244
    %v1613 = vpack.c.b16 %v1249, %v1245
    %v1614 = vpack.c.b16 %v1250, %v1246
    %v1615 = vpack.c.b16 %v1251, %v1247
    %v1616 = vpack.c.b16 %v1256, %v1252
    %v1617 = vpack.c.b16 %v1257, %v1253
    %v1618 = vpack.c.b16 %v1258, %v1254
    %v1619 = vpack.c.b16 %v1259, %v1255
    %v1620 = vpack.c.b16 %v1264, %v1260
    %v1621 = vpack.c.b16 %v1265, %v1261
    %v1622 = vpack.c.b16 %v1266, %v1262
    %v1623 = vpack.c.b16 %v1267, %v1263
    %v1624 = vpack.c.b16 %v1272, %v1268
    %v1625 = vpack.c.b16 %v1273, %v1269
    %v1626 = vpack.c.b16 %v1274, %v1270
    %v1627 = vpack.c.b16 %v1275, %v1271
    %v1628 = vpack.c.b16 %v1280, %v1276
    %v1629 = vpack.c.b16 %v1281, %v1277
    %v1630 = vpack.c.b16 %v1282, %v1278
    %v1631 = vpack.c.b16 %v1283, %v1279
    %v1632 = vpack.c.b16 %v1288, %v1284
    %v1633 = vpack.c.b16 %v1289, %v1285
    %v1634 = vpack.c.b16 %v1290, %v1286
    %v1635 = vpack.c.b16 %v1291, %v1287
    %v1636 = vpack.c.b16 %v1296, %v1292
    %v1637 = vpack.c.b16 %v1297, %v1293
    %v1638 = vpack.c.b16 %v1298, %v1294
    %v1639 = vpack.c.b16 %v1299, %v1295
    %v1640 = vpack.c.b16 %v1304, %v1300
    %v1641 = vpack.c.b16 %v1305, %v1301
    %v1642 = vpack.c.b16 %v1306, %v1302
    %v1643 = vpack.c.b16 %v1307, %v1303
    %v1644 = vpack.c.b16 %v1312, %v1308
    %v1645 = vpack.c.b16 %v1313, %v1309
    %v1646 = vpack.c.b16 %v1314, %v1310
    %v1647 = vpack.c.b16 %v1315, %v1311
    %v1648 = vpack.c.b16 %v1320, %v1316
    %v1649 = vpack.c.b16 %v1321, %v1317
    %v1650 = vpack.c.b16 %v1322, %v1318
    %v1651 = vpack.c.b16 %v1323, %v1319
    %v1652 = vpack.c.b16 %v1328, %v1324
    %v1653 = vpack.c.b16 %v1329, %v1325
    %v1654 = vpack.c.b16 %v1330, %v1326
    %v1655 = vpack.c.b16 %v1331, %v1327
    %v1656 = vpack.c.b16 %v1336, %v1332
    %v1657 = vpack.c.b16 %v1337, %v1333
    %v1658 = vpack.c.b16 %v1338, %v1334
    %v1659 = vpack.c.b16 %v1339, %v1335
    %v1660 = vpack.c.b16 %v1344, %v1340
    %v1661 = vpack.c.b16 %v1345, %v1341
    %v1662 = vpack.c.b16 %v1346, %v1342
    %v1663 = vpack.c.b16 %v1347, %v1343
    %v1664 = vpack.c.b16 %v1352, %v1348
    %v1665 = vpack.c.b16 %v1353, %v1349
    %v1666 = vpack.c.b16 %v1354, %v1350
    %v1667 = vpack.c.b16 %v1355, %v1351
    %v1668 = vpack.c.b16 %v1360, %v1356
    %v1669 = vpack.c.b16 %v1361, %v1357
    %v1670 = vpack.c.b16 %v1362, %v1358
    %v1671 = vpack.c.b16 %v1363, %v1359
    %v1672 = vpack.c.b16 %v1368, %v1364
    %v1673 = vpack.c.b16 %v1369, %v1365
    %v1674 = vpack.c.b16 %v1370, %v1366
    %v1675 = vpack.c.b16 %v1371, %v1367
    %v1676 = vpack.c.b16 %v1376, %v1372
    %v1677 = vpack.c.b16 %v1377, %v1373
    %v1678 = vpack.c.b16 %v1378, %v1374
    %v1679 = vpack.c.b16 %v1379, %v1375
    %v1680 = vpack.c.b16 %v1384, %v1380
    %v1681 = vpack.c.b16 %v1385, %v1381
    %v1682 = vpack.c.b16 %v1386, %v1382
    %v1683 = vpack.c.b16 %v1387, %v1383
    %v1684 = vpack.c.b16 %v1392, %v1388
    %v1685 = vpack.c.b16 %v1393, %v1389
    %v1686 = vpack.c.b16 %v1394, %v1390
    %v1687 = vpack.c.b16 %v1395, %v1391
    %v1688 = vpack.c.b16 %v1400, %v1396
    %v1689 = vpack.c.b16 %v1401, %v1397
    %v1690 = vpack.c.b16 %v1402, %v1398
    %v1691 = vpack.c.b16 %v1403, %v1399
    %v1692 = vpack.c.b16 %v1408, %v1404
    %v1693 = vpack.c.b16 %v1409, %v1405
    %v1694 = vpack.c.b16 %v1410, %v1406
    %v1695 = vpack.c.b16 %v1411, %v1407
    %v1696 = vpack.c.b16 %v1416, %v1412
    %v1697 = vpack.c.b16 %v1417, %v1413
    %v1698 = vpack.c.b16 %v1418, %v1414
    %v1699 = vpack.c.b16 %v1419, %v1415
    %v1700 = vpack.c.b16 %v1424, %v1420
    %v1701 = vpack.c.b16 %v1425, %v1421
    %v1702 = vpack.c.b16 %v1426, %v1422
    %v1703 = vpack.c.b16 %v1427, %v1423
    %v1704 = vpack.c.b16 %v1432, %v1428
    %v1705 = vpack.c.b16 %v1433, %v1429
    %v1706 = vpack.c.b16 %v1434, %v1430
    %v1707 = vpack.c.b16 %v1435, %v1431
    %v1708 = vpack.c.b16 %v1440, %v1436
    %v1709 = vpack.c.b16 %v1441, %v1437
    %v1710 = vpack.c.b16 %v1442, %v1438
    %v1711 = vpack.c.b16 %v1443, %v1439
    %v1712 = vpack.c.b16 %v1448, %v1444
    %v1713 = vpack.c.b16 %v1449, %v1445
    %v1714 = vpack.c.b16 %v1450, %v1446
    %v1715 = vpack.c.b16 %v1451, %v1447
    %v1716 = vpack.c.b16 %v1456, %v1452
    %v1717 = vpack.c.b16 %v1457, %v1453
    %v1718 = vpack.c.b16 %v1458, %v1454
    %v1719 = vpack.c.b16 %v1459, %v1455
    %v1720 = vpack.c.b16 %v1464, %v1460
    %v1721 = vpack.c.b16 %v1465, %v1461
    %v1722 = vpack.c.b16 %v1466, %v1462
    %v1723 = vpack.c.b16 %v1467, %v1463
    %v1724 = vpack.c.b16 %v1472, %v1468
    %v1725 = vpack.c.b16 %v1473, %v1469
    %v1726 = vpack.c.b16 %v1474, %v1470
    %v1727 = vpack.c.b16 %v1475, %v1471
    %v1728 = vpack.c.b16 %v1480, %v1476
    %v1729 = vpack.c.b16 %v1481, %v1477
    %v1730 = vpack.c.b16 %v1482, %v1478
    %v1731 = vpack.c.b16 %v1483, %v1479
    %v1732 = vpack.c.b16 %v1488, %v1484
    %v1733 = vpack.c.b16 %v1489, %v1485
    %v1734 = vpack.c.b16 %v1490, %v1486
    %v1735 = vpack.c.b16 %v1491, %v1487
    %v1736 = vpack.c.b16 %v1496, %v1492
    %v1737 = vpack.c.b16 %v1497, %v1493
    %v1738 = vpack.c.b16 %v1498, %v1494
    %v1739 = vpack.c.b16 %v1499, %v1495
    %v1740 = vpack.c.b16 %v1504, %v1500
    %v1741 = vpack.c.b16 %v1505, %v1501
    %v1742 = vpack.c.b16 %v1506, %v1502
    %v1743 = vpack.c.b16 %v1507, %v1503
    %v1744 = vpack.c.b16 %v1512, %v1508
    %v1745 = vpack.c.b16 %v1513, %v1509
    %v1746 = vpack.c.b16 %v1514, %v1510
    %v1747 = vpack.c.b16 %v1515, %v1511
    %v1748 = vpack.c.b16 %v1520, %v1516
    %v1749 = vpack.c.b16 %v1521, %v1517
    %v1750 = vpack.c.b16 %v1522, %v1518
    %v1751 = vpack.c.b16 %v1523, %v1519
    %v1752 = vpack.c.b16 %v1528, %v1524
    %v1753 = vpack.c.b16 %v1529, %v1525
    %v1754 = vpack.c.b16 %v1530, %v1526
    %v1755 = vpack.c.b16 %v1531, %v1527
    %v1756 = vpack.c.b16 %v1536, %v1532
    %v1757 = vpack.c.b16 %v1537, %v1533
    %v1758 = vpack.c.b16 %v1538, %v1534
    %v1759 = vpack.c.b16 %v1539, %v1535
    %v1760 = vpack.c.b16 %v1544, %v1540
    %v1761 = vpack.c.b16 %v1545, %v1541
    %v1762 = vpack.c.b16 %v1546, %v1542
    %v1763 = vpack.c.b16 %v1547, %v1543
    %v1764 = vpack.c.b16 %v1552, %v1548
    %v1765 = vpack.c.b16 %v1553, %v1549
    %v1766 = vpack.c.b16 %v1554, %v1550
    %v1767 = vpack.c.b16 %v1555, %v1551
    %v1768 = vpack.c.b16 %v1560, %v1556
    %v1769 = vpack.c.b16 %v1561, %v1557
    %v1770 = vpack.c.b16 %v1562, %v1558
    %v1771 = vpack.c.b16 %v1563, %v1559
    %v1772 = vpack.c.b16 %v1568, %v1564
    %v1773 = vpack.c.b16 %v1569, %v1565
    %v1774 = vpack.c.b16 %v1570, %v1566
    %v1775 = vpack.c.b16 %v1571, %v1567
    %v1776 = vpack.c.b16 %v1576, %v1572
    %v1777 = vpack.c.b16 %v1577, %v1573
    %v1778 = vpack.c.b16 %v1578, %v1574
    %v1779 = vpack.c.b16 %v1579, %v1575
    %v1780 = vpack.c.b16 %v1584, %v1580
    %v1781 = vpack.c.b16 %v1585, %v1581
    %v1782 = vpack.c.b16 %v1586, %v1582
    %v1783 = vpack.c.b16 %v1587, %v1583
    %vm1980 = vcmask 130048
    %v1982 = vsel %vm1980, %v785, 0
    %1984 = vmatpush.bf16.msra.mxu0 %v1616
    %1985 = vmatpush.bf16.msra.mxu0 %v1612
    %1986 = vmatpush.bf16.msra.mxu0 %v1608
    %1987 = vmatpush.bf16.msra.mxu0 %v1604
    %1988 = vmatpush.bf16.msra.mxu0 %v1600
    %1989 = vmatpush.bf16.msra.mxu0 %v1596
    %1990 = vmatpush.bf16.msra.mxu0 %v1592
    %1991 = vmatpush.bf16.msra.mxu0 %v1588
    %1992 = vmatmul.bf16.gmra.mxu0 %v779
    %v1993 = vpop.f32.mrf.mxu0
    %v1994 = vadd.f32 %v958, %v1993
    %v1995 = vpop.f32.mrf.mxu0
    %1996 = vdwg.mxu0
    %1997 = vmatpush.bf16.msra.mxu0 %v1648
    %1998 = vmatpush.bf16.msra.mxu0 %v1644
    %1999 = vmatpush.bf16.msra.mxu0 %v1640
    %2000 = vmatpush.bf16.msra.mxu0 %v1636
    %2001 = vmatpush.bf16.msra.mxu0 %v1632
    %2002 = vmatpush.bf16.msra.mxu0 %v1628
    %2003 = vmatpush.bf16.msra.mxu0 %v1624
    %2004 = vmatpush.bf16.msra.mxu0 %v1620
    %2005 = vmatmul.bf16.gmra.mxu0 %v780
    %v2006 = vpop.f32.mrf.mxu0
    %v2007 = vadd.f32 %v1994, %v2006
    %v2008 = vpop.f32.mrf.mxu0
    %2009 = vdwg.mxu0
    %2010 = vmatpush.bf16.msra.mxu0 %v1680
    %2011 = vmatpush.bf16.msra.mxu0 %v1676
    %2012 = vmatpush.bf16.msra.mxu0 %v1672
    %2013 = vmatpush.bf16.msra.mxu0 %v1668
    %2014 = vmatpush.bf16.msra.mxu0 %v1664
    %2015 = vmatpush.bf16.msra.mxu0 %v1660
    %2016 = vmatpush.bf16.msra.mxu0 %v1656
    %2017 = vmatpush.bf16.msra.mxu0 %v1652
    %2018 = vmatmul.bf16.gmra.mxu0 %v781
    %v2019 = vpop.f32.mrf.mxu0
    %v2020 = vadd.f32 %v2007, %v2019
    %v2021 = vpop.f32.mrf.mxu0
    %2022 = vdwg.mxu0
    %2023 = vmatpush.bf16.msra.mxu0 %v1712
    %2024 = vmatpush.bf16.msra.mxu0 %v1708
    %2025 = vmatpush.bf16.msra.mxu0 %v1704
    %2026 = vmatpush.bf16.msra.mxu0 %v1700
    %2027 = vmatpush.bf16.msra.mxu0 %v1696
    %2028 = vmatpush.bf16.msra.mxu0 %v1692
    %2029 = vmatpush.bf16.msra.mxu0 %v1688
    %2030 = vmatpush.bf16.msra.mxu0 %v1684
    %2031 = vmatmul.bf16.gmra.mxu0 %v782
    %v2032 = vpop.f32.mrf.mxu0
    %v2033 = vadd.f32 %v2020, %v2032
    %v2034 = vpop.f32.mrf.mxu0
    %2035 = vdwg.mxu0
    %2036 = vmatpush.bf16.msra.mxu0 %v1744
    %2037 = vmatpush.bf16.msra.mxu0 %v1740
    %2038 = vmatpush.bf16.msra.mxu0 %v1736
    %2039 = vmatpush.bf16.msra.mxu0 %v1732
    %2040 = vmatpush.bf16.msra.mxu0 %v1728
    %2041 = vmatpush.bf16.msra.mxu0 %v1724
    %2042 = vmatpush.bf16.msra.mxu0 %v1720
    %2043 = vmatpush.bf16.msra.mxu0 %v1716
    %2044 = vmatmul.bf16.gmra.mxu0 %v783
    %v2045 = vpop.f32.mrf.mxu0
    %v2046 = vadd.f32 %v2033, %v2045
    %v2047 = vpop.f32.mrf.mxu0
    %2048 = vdwg.mxu0
    %2049 = vmatpush.bf16.msra.mxu0 %v1776
    %2050 = vmatpush.bf16.msra.mxu0 %v1772
    %2051 = vmatpush.bf16.msra.mxu0 %v1768
    %2052 = vmatpush.bf16.msra.mxu0 %v1764
    %2053 = vmatpush.bf16.msra.mxu0 %v1760
    %2054 = vmatpush.bf16.msra.mxu0 %v1756
    %2055 = vmatpush.bf16.msra.mxu0 %v1752
    %2056 = vmatpush.bf16.msra.mxu0 %v1748
    %2057 = vmatmul.bf16.gmra.mxu0 %v784
    %v2058 = vpop.f32.mrf.mxu0
    %v2059 = vadd.f32 %v2046, %v2058
    %v2060 = vpop.f32.mrf.mxu0
    %2061 = vdwg.mxu0
    %2062 = vmatpush.bf16.msra.mxu0 0
    %2063 = vmatpush.bf16.msra.mxu0 0
    %2064 = vmatpush.bf16.msra.mxu0 0
    %2065 = vmatpush.bf16.msra.mxu0 0
    %2066 = vmatpush.bf16.msra.mxu0 0
    %2067 = vmatpush.bf16.msra.mxu0 0
    %2068 = vmatpush.bf16.msra.mxu0 0
    %2069 = vmatpush.bf16.msra.mxu0 %v1780
    %2070 = vmatmul.bf16.gmra.mxu0 %v1982
    %v2071 = vpop.f32.mrf.mxu0
    %v2072 = vadd.f32 %v2059, %v2071
    %v2073 = vpop.f32.mrf.mxu0
    %2074 = vdwg.mxu0
    %2075 = vmatpush.bf16.msra.mxu0 %v1617
    %2076 = vmatpush.bf16.msra.mxu0 %v1613
    %2077 = vmatpush.bf16.msra.mxu0 %v1609
    %2078 = vmatpush.bf16.msra.mxu0 %v1605
    %2079 = vmatpush.bf16.msra.mxu0 %v1601
    %2080 = vmatpush.bf16.msra.mxu0 %v1597
    %2081 = vmatpush.bf16.msra.mxu0 %v1593
    %2082 = vmatpush.bf16.msra.mxu0 %v1589
    %2083 = vmatmul.bf16.gmra.mxu0 %v779
    %v2084 = vpop.f32.mrf.mxu0
    %v2085 = vadd.f32 %v971, %v2084
    %v2086 = vpop.f32.mrf.mxu0
    %2087 = vdwg.mxu0
    %2088 = vmatpush.bf16.msra.mxu0 %v1649
    %2089 = vmatpush.bf16.msra.mxu0 %v1645
    %2090 = vmatpush.bf16.msra.mxu0 %v1641
    %2091 = vmatpush.bf16.msra.mxu0 %v1637
    %2092 = vmatpush.bf16.msra.mxu0 %v1633
    %2093 = vmatpush.bf16.msra.mxu0 %v1629
    %2094 = vmatpush.bf16.msra.mxu0 %v1625
    %2095 = vmatpush.bf16.msra.mxu0 %v1621
    %2096 = vmatmul.bf16.gmra.mxu0 %v780
    %v2097 = vpop.f32.mrf.mxu0
    %v2098 = vadd.f32 %v2085, %v2097
    %v2099 = vpop.f32.mrf.mxu0
    %2100 = vdwg.mxu0
    %2101 = vmatpush.bf16.msra.mxu0 %v1681
    %2102 = vmatpush.bf16.msra.mxu0 %v1677
    %2103 = vmatpush.bf16.msra.mxu0 %v1673
    %2104 = vmatpush.bf16.msra.mxu0 %v1669
    %2105 = vmatpush.bf16.msra.mxu0 %v1665
    %2106 = vmatpush.bf16.msra.mxu0 %v1661
    %2107 = vmatpush.bf16.msra.mxu0 %v1657
    %2108 = vmatpush.bf16.msra.mxu0 %v1653
    %2109 = vmatmul.bf16.gmra.mxu0 %v781
    %v2110 = vpop.f32.mrf.mxu0
    %v2111 = vadd.f32 %v2098, %v2110
    %v2112 = vpop.f32.mrf.mxu0
    %2113 = vdwg.mxu0
    %2114 = vmatpush.bf16.msra.mxu0 %v1713
    %2115 = vmatpush.bf16.msra.mxu0 %v1709
    %2116 = vmatpush.bf16.msra.mxu0 %v1705
    %2117 = vmatpush.bf16.msra.mxu0 %v1701
    %2118 = vmatpush.bf16.msra.mxu0 %v1697
    %2119 = vmatpush.bf16.msra.mxu0 %v1693
    %2120 = vmatpush.bf16.msra.mxu0 %v1689
    %2121 = vmatpush.bf16.msra.mxu0 %v1685
    %2122 = vmatmul.bf16.gmra.mxu0 %v782
    %v2123 = vpop.f32.mrf.mxu0
    %v2124 = vadd.f32 %v2111, %v2123
    %v2125 = vpop.f32.mrf.mxu0
    %2126 = vdwg.mxu0
    %2127 = vmatpush.bf16.msra.mxu0 %v1745
    %2128 = vmatpush.bf16.msra.mxu0 %v1741
    %2129 = vmatpush.bf16.msra.mxu0 %v1737
    %2130 = vmatpush.bf16.msra.mxu0 %v1733
    %2131 = vmatpush.bf16.msra.mxu0 %v1729
    %2132 = vmatpush.bf16.msra.mxu0 %v1725
    %2133 = vmatpush.bf16.msra.mxu0 %v1721
    %2134 = vmatpush.bf16.msra.mxu0 %v1717
    %2135 = vmatmul.bf16.gmra.mxu0 %v783
    %v2136 = vpop.f32.mrf.mxu0
    %v2137 = vadd.f32 %v2124, %v2136
    %v2138 = vpop.f32.mrf.mxu0
    %2139 = vdwg.mxu0
    %2140 = vmatpush.bf16.msra.mxu0 %v1777
    %2141 = vmatpush.bf16.msra.mxu0 %v1773
    %2142 = vmatpush.bf16.msra.mxu0 %v1769
    %2143 = vmatpush.bf16.msra.mxu0 %v1765
    %2144 = vmatpush.bf16.msra.mxu0 %v1761
    %2145 = vmatpush.bf16.msra.mxu0 %v1757
    %2146 = vmatpush.bf16.msra.mxu0 %v1753
    %2147 = vmatpush.bf16.msra.mxu0 %v1749
    %2148 = vmatmul.bf16.gmra.mxu0 %v784
    %v2149 = vpop.f32.mrf.mxu0
    %v2150 = vadd.f32 %v2137, %v2149
    %v2151 = vpop.f32.mrf.mxu0
    %2152 = vdwg.mxu0
    %2153 = vmatpush.bf16.msra.mxu0 0
    %2154 = vmatpush.bf16.msra.mxu0 0
    %2155 = vmatpush.bf16.msra.mxu0 0
    %2156 = vmatpush.bf16.msra.mxu0 0
    %2157 = vmatpush.bf16.msra.mxu0 0
    %2158 = vmatpush.bf16.msra.mxu0 0
    %2159 = vmatpush.bf16.msra.mxu0 0
    %2160 = vmatpush.bf16.msra.mxu0 %v1781
    %2161 = vmatmul.bf16.gmra.mxu0 %v1982
    %v2162 = vpop.f32.mrf.mxu0
    %v2163 = vadd.f32 %v2150, %v2162
    %v2164 = vpop.f32.mrf.mxu0
    %2165 = vdwg.mxu0
    %2166 = vmatpush.bf16.msra.mxu0 %v1618
    %2167 = vmatpush.bf16.msra.mxu0 %v1614
    %2168 = vmatpush.bf16.msra.mxu0 %v1610
    %2169 = vmatpush.bf16.msra.mxu0 %v1606
    %2170 = vmatpush.bf16.msra.mxu0 %v1602
    %2171 = vmatpush.bf16.msra.mxu0 %v1598
    %2172 = vmatpush.bf16.msra.mxu0 %v1594
    %2173 = vmatpush.bf16.msra.mxu0 %v1590
    %2174 = vmatmul.bf16.gmra.mxu0 %v779
    %v2175 = vpop.f32.mrf.mxu0
    %v2176 = vadd.f32 %v984, %v2175
    %v2177 = vpop.f32.mrf.mxu0
    %2178 = vdwg.mxu0
    %2179 = vmatpush.bf16.msra.mxu0 %v1650
    %2180 = vmatpush.bf16.msra.mxu0 %v1646
    %2181 = vmatpush.bf16.msra.mxu0 %v1642
    %2182 = vmatpush.bf16.msra.mxu0 %v1638
    %2183 = vmatpush.bf16.msra.mxu0 %v1634
    %2184 = vmatpush.bf16.msra.mxu0 %v1630
    %2185 = vmatpush.bf16.msra.mxu0 %v1626
    %2186 = vmatpush.bf16.msra.mxu0 %v1622
    %2187 = vmatmul.bf16.gmra.mxu0 %v780
    %v2188 = vpop.f32.mrf.mxu0
    %v2189 = vadd.f32 %v2176, %v2188
    %v2190 = vpop.f32.mrf.mxu0
    %2191 = vdwg.mxu0
    %2192 = vmatpush.bf16.msra.mxu0 %v1682
    %2193 = vmatpush.bf16.msra.mxu0 %v1678
    %2194 = vmatpush.bf16.msra.mxu0 %v1674
    %2195 = vmatpush.bf16.msra.mxu0 %v1670
    %2196 = vmatpush.bf16.msra.mxu0 %v1666
    %2197 = vmatpush.bf16.msra.mxu0 %v1662
    %2198 = vmatpush.bf16.msra.mxu0 %v1658
    %2199 = vmatpush.bf16.msra.mxu0 %v1654
    %2200 = vmatmul.bf16.gmra.mxu0 %v781
    %v2201 = vpop.f32.mrf.mxu0
    %v2202 = vadd.f32 %v2189, %v2201
    %v2203 = vpop.f32.mrf.mxu0
    %2204 = vdwg.mxu0
    %2205 = vmatpush.bf16.msra.mxu0 %v1714
    %2206 = vmatpush.bf16.msra.mxu0 %v1710
    %2207 = vmatpush.bf16.msra.mxu0 %v1706
    %2208 = vmatpush.bf16.msra.mxu0 %v1702
    %2209 = vmatpush.bf16.msra.mxu0 %v1698
    %2210 = vmatpush.bf16.msra.mxu0 %v1694
    %2211 = vmatpush.bf16.msra.mxu0 %v1690
    %2212 = vmatpush.bf16.msra.mxu0 %v1686
    %2213 = vmatmul.bf16.gmra.mxu0 %v782
    %v2214 = vpop.f32.mrf.mxu0
    %v2215 = vadd.f32 %v2202, %v2214
    %v2216 = vpop.f32.mrf.mxu0
    %2217 = vdwg.mxu0
    %2218 = vmatpush.bf16.msra.mxu0 %v1746
    %2219 = vmatpush.bf16.msra.mxu0 %v1742
    %2220 = vmatpush.bf16.msra.mxu0 %v1738
    %2221 = vmatpush.bf16.msra.mxu0 %v1734
    %2222 = vmatpush.bf16.msra.mxu0 %v1730
    %2223 = vmatpush.bf16.msra.mxu0 %v1726
    %2224 = vmatpush.bf16.msra.mxu0 %v1722
    %2225 = vmatpush.bf16.msra.mxu0 %v1718
    %2226 = vmatmul.bf16.gmra.mxu0 %v783
    %v2227 = vpop.f32.mrf.mxu0
    %v2228 = vadd.f32 %v2215, %v2227
    %v2229 = vpop.f32.mrf.mxu0
    %2230 = vdwg.mxu0
    %2231 = vmatpush.bf16.msra.mxu0 %v1778
    %2232 = vmatpush.bf16.msra.mxu0 %v1774
    %2233 = vmatpush.bf16.msra.mxu0 %v1770
    %2234 = vmatpush.bf16.msra.mxu0 %v1766
    %2235 = vmatpush.bf16.msra.mxu0 %v1762
    %2236 = vmatpush.bf16.msra.mxu0 %v1758
    %2237 = vmatpush.bf16.msra.mxu0 %v1754
    %2238 = vmatpush.bf16.msra.mxu0 %v1750
    %2239 = vmatmul.bf16.gmra.mxu0 %v784
    %v2240 = vpop.f32.mrf.mxu0
    %v2241 = vadd.f32 %v2228, %v2240
    %v2242 = vpop.f32.mrf.mxu0
    %2243 = vdwg.mxu0
    %2244 = vmatpush.bf16.msra.mxu0 0
    %2245 = vmatpush.bf16.msra.mxu0 0
    %2246 = vmatpush.bf16.msra.mxu0 0
    %2247 = vmatpush.bf16.msra.mxu0 0
    %2248 = vmatpush.bf16.msra.mxu0 0
    %2249 = vmatpush.bf16.msra.mxu0 0
    %2250 = vmatpush.bf16.msra.mxu0 0
    %2251 = vmatpush.bf16.msra.mxu0 %v1782
    %2252 = vmatmul.bf16.gmra.mxu0 %v1982
    %v2253 = vpop.f32.mrf.mxu0
    %v2254 = vadd.f32 %v2241, %v2253
    %v2255 = vpop.f32.mrf.mxu0
    %2256 = vdwg.mxu0
    %2257 = vmatpush.bf16.msra.mxu0 %v1619
    %2258 = vmatpush.bf16.msra.mxu0 %v1615
    %2259 = vmatpush.bf16.msra.mxu0 %v1611
    %2260 = vmatpush.bf16.msra.mxu0 %v1607
    %2261 = vmatpush.bf16.msra.mxu0 %v1603
    %2262 = vmatpush.bf16.msra.mxu0 %v1599
    %2263 = vmatpush.bf16.msra.mxu0 %v1595
    %2264 = vmatpush.bf16.msra.mxu0 %v1591
    %2265 = vmatmul.bf16.gmra.mxu0 %v779
    %v2266 = vpop.f32.mrf.mxu0
    %v2267 = vadd.f32 %v997, %v2266
    %v2268 = vpop.f32.mrf.mxu0
    %2269 = vdwg.mxu0
    %2270 = vmatpush.bf16.msra.mxu0 %v1651
    %2271 = vmatpush.bf16.msra.mxu0 %v1647
    %2272 = vmatpush.bf16.msra.mxu0 %v1643
    %2273 = vmatpush.bf16.msra.mxu0 %v1639
    %2274 = vmatpush.bf16.msra.mxu0 %v1635
    %2275 = vmatpush.bf16.msra.mxu0 %v1631
    %2276 = vmatpush.bf16.msra.mxu0 %v1627
    %2277 = vmatpush.bf16.msra.mxu0 %v1623
    %2278 = vmatmul.bf16.gmra.mxu0 %v780
    %v2279 = vpop.f32.mrf.mxu0
    %v2280 = vadd.f32 %v2267, %v2279
    %v2281 = vpop.f32.mrf.mxu0
    %2282 = vdwg.mxu0
    %2283 = vmatpush.bf16.msra.mxu0 %v1683
    %2284 = vmatpush.bf16.msra.mxu0 %v1679
    %2285 = vmatpush.bf16.msra.mxu0 %v1675
    %2286 = vmatpush.bf16.msra.mxu0 %v1671
    %2287 = vmatpush.bf16.msra.mxu0 %v1667
    %2288 = vmatpush.bf16.msra.mxu0 %v1663
    %2289 = vmatpush.bf16.msra.mxu0 %v1659
    %2290 = vmatpush.bf16.msra.mxu0 %v1655
    %2291 = vmatmul.bf16.gmra.mxu0 %v781
    %v2292 = vpop.f32.mrf.mxu0
    %v2293 = vadd.f32 %v2280, %v2292
    %v2294 = vpop.f32.mrf.mxu0
    %2295 = vdwg.mxu0
    %2296 = vmatpush.bf16.msra.mxu0 %v1715
    %2297 = vmatpush.bf16.msra.mxu0 %v1711
    %2298 = vmatpush.bf16.msra.mxu0 %v1707
    %2299 = vmatpush.bf16.msra.mxu0 %v1703
    %2300 = vmatpush.bf16.msra.mxu0 %v1699
    %2301 = vmatpush.bf16.msra.mxu0 %v1695
    %2302 = vmatpush.bf16.msra.mxu0 %v1691
    %2303 = vmatpush.bf16.msra.mxu0 %v1687
    %2304 = vmatmul.bf16.gmra.mxu0 %v782
    %v2305 = vpop.f32.mrf.mxu0
    %v2306 = vadd.f32 %v2293, %v2305
    %v2307 = vpop.f32.mrf.mxu0
    %2308 = vdwg.mxu0
    %2309 = vmatpush.bf16.msra.mxu0 %v1747
    %2310 = vmatpush.bf16.msra.mxu0 %v1743
    %2311 = vmatpush.bf16.msra.mxu0 %v1739
    %2312 = vmatpush.bf16.msra.mxu0 %v1735
    %2313 = vmatpush.bf16.msra.mxu0 %v1731
    %2314 = vmatpush.bf16.msra.mxu0 %v1727
    %2315 = vmatpush.bf16.msra.mxu0 %v1723
    %2316 = vmatpush.bf16.msra.mxu0 %v1719
    %2317 = vmatmul.bf16.gmra.mxu0 %v783
    %v2318 = vpop.f32.mrf.mxu0
    %v2319 = vadd.f32 %v2306, %v2318
    %v2320 = vpop.f32.mrf.mxu0
    %2321 = vdwg.mxu0
    %2322 = vmatpush.bf16.msra.mxu0 %v1779
    %2323 = vmatpush.bf16.msra.mxu0 %v1775
    %2324 = vmatpush.bf16.msra.mxu0 %v1771
    %2325 = vmatpush.bf16.msra.mxu0 %v1767
    %2326 = vmatpush.bf16.msra.mxu0 %v1763
    %2327 = vmatpush.bf16.msra.mxu0 %v1759
    %2328 = vmatpush.bf16.msra.mxu0 %v1755
    %2329 = vmatpush.bf16.msra.mxu0 %v1751
    %2330 = vmatmul.bf16.gmra.mxu0 %v784
    %v2331 = vpop.f32.mrf.mxu0
    %v2332 = vadd.f32 %v2319, %v2331
    %v2333 = vpop.f32.mrf.mxu0
    %2334 = vdwg.mxu0
    %2335 = vmatpush.bf16.msra.mxu0 0
    %2336 = vmatpush.bf16.msra.mxu0 0
    %2337 = vmatpush.bf16.msra.mxu0 0
    %2338 = vmatpush.bf16.msra.mxu0 0
    %2339 = vmatpush.bf16.msra.mxu0 0
    %2340 = vmatpush.bf16.msra.mxu0 0
    %2341 = vmatpush.bf16.msra.mxu0 0
    %2342 = vmatpush.bf16.msra.mxu0 %v1783
    %2343 = vmatmul.bf16.gmra.mxu0 %v1982
    %v2344 = vpop.f32.mrf.mxu0
    %v2345 = vadd.f32 %v2332, %v2344
    %v2346 = vpop.f32.mrf.mxu0
    %2347 = vdwg.mxu0
    %v2348 = vpack.c.bf16 %v2163, %v2072
    %v2349 = vpack.c.bf16 %v2345, %v2254
    %v2352 = vunpack.c.l.b16 %v348
    %v2353 = vunpack.c.h.b16 %v348
    %v2354 = vunpack.c.l.b16 %v349
    %v2355 = vunpack.c.h.b16 %v349
    %v2356 = vpack.c.b16 %v2352, %v2352
    %v2357 = vpack.c.b16 %v2353, %v2353
    %v2358 = vpack.c.b16 %v2354, %v2354
    %v2359 = vpack.c.b16 %v2355, %v2355
    %v2361 = vpack.i.b16 %v2356, %v2356
    %v2363 = vperm.slane %v2361, 0
    %v2365 = vpack.i.b16 %v2357, %v2357
    %v2367 = vperm.slane %v2365, 0
    %v2369 = vpack.i.b16 %v2358, %v2358
    %v2371 = vperm.slane %v2369, 0
    %v2373 = vpack.i.b16 %v2359, %v2359
    %v2375 = vperm.slane %v2373, 0
    %v2376 = vunpack.c.l.bf16 %v2348
    %v2377 = vunpack.c.h.bf16 %v2348
    %v2378 = vunpack.c.l.bf16 %v2349
    %v2379 = vunpack.c.h.bf16 %v2349
    %v2380 = vunpack.c.l.bf16 %v2363
    %v2381 = vunpack.c.l.bf16 %v2367
    %v2382 = vunpack.c.l.bf16 %v2371
    %v2383 = vunpack.c.l.bf16 %v2375
    %v2384 = vadd.f32 %v2376, %v2380
    %v2385 = vadd.f32 %v2377, %v2381
    %v2386 = vadd.f32 %v2378, %v2382
    %v2387 = vadd.f32 %v2379, %v2383
    %v2388 = vpack.c.bf16 %v2385, %v2384
    %v2389 = vpack.c.bf16 %v2387, %v2386
    %v2390 = vunpack.c.l.bf16 %v2388
    %v2391 = vunpack.c.h.bf16 %v2388
    %v2392 = vunpack.c.l.bf16 %v2389
    %v2393 = vunpack.c.h.bf16 %v2389
    %v2394 = vmul.f32 %v2390, 0.20019531
    %v2395 = vmul.f32 %v2391, 0.20019531
    %v2396 = vmul.f32 %v2392, 0.20019531
    %v2397 = vmul.f32 %v2393, 0.20019531
    %v2398 = vpack.c.bf16 %v2395, %v2394
    %v2399 = vpack.c.bf16 %v2397, %v2396
    %v2400 = vunpack.c.l.bf16 %v2398
    %v2401 = vunpack.c.h.bf16 %v2398
    %v2402 = vunpack.c.l.bf16 %v2399
    %v2403 = vunpack.c.h.bf16 %v2399
    %v2404 = vmax.f32 %v2390, %v2400
    %v2405 = vmax.f32 %v2391, %v2401
    %v2406 = vmax.f32 %v2392, %v2402
    %v2407 = vmax.f32 %v2393, %v2403
    %v2408 = vpack.c.bf16 %v2404, %v2404
    %v2409 = vpack.c.bf16 %v2405, %v2405
    %v2410 = vpack.c.bf16 %v2406, %v2406
    %v2411 = vpack.c.bf16 %v2407, %v2407
    %v2540 = vunpack.c.l.b16 %v350
    %v2541 = vunpack.c.h.b16 %v350
    %v2542 = vunpack.c.l.b16 %v351
    %v2543 = vunpack.c.h.b16 %v351
    %v2544 = vunpack.c.l.b16 %v352
    %v2545 = vunpack.c.h.b16 %v352
    %v2546 = vunpack.c.l.b16 %v353
    %v2547 = vunpack.c.h.b16 %v353
    %v2548 = vunpack.c.l.b16 %v354
    %v2549 = vunpack.c.h.b16 %v354
    %v2550 = vunpack.c.l.b16 %v355
    %v2551 = vunpack.c.h.b16 %v355
    %v2552 = vunpack.c.l.b16 %v356
    %v2553 = vunpack.c.h.b16 %v356
    %v2554 = vunpack.c.l.b16 %v357
    %v2555 = vunpack.c.h.b16 %v357
    %v2556 = vunpack.c.l.b16 %v358
    %v2557 = vunpack.c.h.b16 %v358
    %v2558 = vunpack.c.l.b16 %v359
    %v2559 = vunpack.c.h.b16 %v359
    %v2560 = vunpack.c.l.b16 %v360
    %v2561 = vunpack.c.h.b16 %v360
    %v2562 = vunpack.c.l.b16 %v361
    %v2563 = vunpack.c.h.b16 %v361
    %v2564 = vunpack.c.l.b16 %v362
    %v2565 = vunpack.c.h.b16 %v362
    %v2566 = vunpack.c.l.b16 %v363
    %v2567 = vunpack.c.h.b16 %v363
    %v2568 = vunpack.c.l.b16 %v364
    %v2569 = vunpack.c.h.b16 %v364
    %v2570 = vunpack.c.l.b16 %v365
    %v2571 = vunpack.c.h.b16 %v365
    %v2572 = vunpack.c.l.b16 %v366
    %v2573 = vunpack.c.h.b16 %v366
    %v2574 = vunpack.c.l.b16 %v367
    %v2575 = vunpack.c.h.b16 %v367
    %v2576 = vunpack.c.l.b16 %v368
    %v2577 = vunpack.c.h.b16 %v368
    %v2578 = vunpack.c.l.b16 %v369
    %v2579 = vunpack.c.h.b16 %v369
    %v2580 = vunpack.c.l.b16 %v370
    %v2581 = vunpack.c.h.b16 %v370
    %v2582 = vunpack.c.l.b16 %v371
    %v2583 = vunpack.c.h.b16 %v371
    %v2584 = vunpack.c.l.b16 %v372
    %v2585 = vunpack.c.h.b16 %v372
    %v2586 = vunpack.c.l.b16 %v373
    %v2587 = vunpack.c.h.b16 %v373
    %v2588 = vunpack.c.l.b16 %v374
    %v2589 = vunpack.c.h.b16 %v374
    %v2590 = vunpack.c.l.b16 %v375
    %v2591 = vunpack.c.h.b16 %v375
    %v2592 = vunpack.c.l.b16 %v376
    %v2593 = vunpack.c.h.b16 %v376
    %v2594 = vunpack.c.l.b16 %v377
    %v2595 = vunpack.c.h.b16 %v377
    %v2596 = vunpack.c.l.b16 %v378
    %v2597 = vunpack.c.h.b16 %v378
    %v2598 = vunpack.c.l.b16 %v379
    %v2599 = vunpack.c.h.b16 %v379
    %v2600 = vunpack.c.l.b16 %v380
    %v2601 = vunpack.c.h.b16 %v380
    %v2602 = vunpack.c.l.b16 %v381
    %v2603 = vunpack.c.h.b16 %v381
    %v2604 = vunpack.c.l.b16 %v382
    %v2605 = vunpack.c.h.b16 %v382
    %v2606 = vunpack.c.l.b16 %v383
    %v2607 = vunpack.c.h.b16 %v383
    %v2608 = vunpack.c.l.b16 %v384
    %v2609 = vunpack.c.h.b16 %v384
    %v2610 = vunpack.c.l.b16 %v385
    %v2611 = vunpack.c.h.b16 %v385
    %v2612 = vunpack.c.l.b16 %v386
    %v2613 = vunpack.c.h.b16 %v386
    %v2614 = vunpack.c.l.b16 %v387
    %v2615 = vunpack.c.h.b16 %v387
    %v2616 = vunpack.c.l.b16 %v388
    %v2617 = vunpack.c.h.b16 %v388
    %v2618 = vunpack.c.l.b16 %v389
    %v2619 = vunpack.c.h.b16 %v389
    %v2620 = vunpack.c.l.b16 %v390
    %v2621 = vunpack.c.h.b16 %v390
    %v2622 = vunpack.c.l.b16 %v391
    %v2623 = vunpack.c.h.b16 %v391
    %v2624 = vunpack.c.l.b16 %v392
    %v2625 = vunpack.c.h.b16 %v392
    %v2626 = vunpack.c.l.b16 %v393
    %v2627 = vunpack.c.h.b16 %v393
    %v2628 = vunpack.c.l.b16 %v394
    %v2629 = vunpack.c.h.b16 %v394
    %v2630 = vunpack.c.l.b16 %v395
    %v2631 = vunpack.c.h.b16 %v395
    %v2632 = vunpack.c.l.b16 %v396
    %v2633 = vunpack.c.h.b16 %v396
    %v2634 = vunpack.c.l.b16 %v397
    %v2635 = vunpack.c.h.b16 %v397
    %v2636 = vunpack.c.l.b16 %v398
    %v2637 = vunpack.c.h.b16 %v398
    %v2638 = vunpack.c.l.b16 %v399
    %v2639 = vunpack.c.h.b16 %v399
    %v2640 = vunpack.c.l.b16 %v400
    %v2641 = vunpack.c.h.b16 %v400
    %v2642 = vunpack.c.l.b16 %v401
    %v2643 = vunpack.c.h.b16 %v401
    %v2644 = vunpack.c.l.b16 %v402
    %v2645 = vunpack.c.h.b16 %v402
    %v2646 = vunpack.c.l.b16 %v403
    %v2647 = vunpack.c.h.b16 %v403
    %v2648 = vunpack.c.l.b16 %v404
    %v2649 = vunpack.c.h.b16 %v404
    %v2650 = vunpack.c.l.b16 %v405
    %v2651 = vunpack.c.h.b16 %v405
    %v2652 = vunpack.c.l.b16 %v406
    %v2653 = vunpack.c.h.b16 %v406
    %v2654 = vunpack.c.l.b16 %v407
    %v2655 = vunpack.c.h.b16 %v407
    %v2656 = vunpack.c.l.b16 %v408
    %v2657 = vunpack.c.h.b16 %v408
    %v2658 = vunpack.c.l.b16 %v409
    %v2659 = vunpack.c.h.b16 %v409
    %v2660 = vunpack.c.l.b16 %v410
    %v2661 = vunpack.c.h.b16 %v410
    %v2662 = vunpack.c.l.b16 %v411
    %v2663 = vunpack.c.h.b16 %v411
    %v2664 = vunpack.c.l.b16 %v412
    %v2665 = vunpack.c.h.b16 %v412
    %v2666 = vunpack.c.l.b16 %v413
    %v2667 = vunpack.c.h.b16 %v413
    %v2668 = vunpack.c.l.b16 %v414
    %v2669 = vunpack.c.h.b16 %v414
    %v2670 = vunpack.c.l.b16 %v415
    %v2671 = vunpack.c.h.b16 %v415
    %v2672 = vunpack.c.l.b16 %v416
    %v2673 = vunpack.c.h.b16 %v416
    %v2674 = vunpack.c.l.b16 %v417
    %v2675 = vunpack.c.h.b16 %v417
    %v2676 = vunpack.c.l.b16 %v418
    %v2677 = vunpack.c.h.b16 %v418
    %v2678 = vunpack.c.l.b16 %v419
    %v2679 = vunpack.c.h.b16 %v419
    %v2680 = vunpack.c.l.b16 %v420
    %v2681 = vunpack.c.h.b16 %v420
    %v2682 = vunpack.c.l.b16 %v421
    %v2683 = vunpack.c.h.b16 %v421
    %v2684 = vunpack.c.l.b16 %v422
    %v2685 = vunpack.c.h.b16 %v422
    %v2686 = vunpack.c.l.b16 %v423
    %v2687 = vunpack.c.h.b16 %v423
    %v2688 = vunpack.c.l.b16 %v424
    %v2689 = vunpack.c.h.b16 %v424
    %v2690 = vunpack.c.l.b16 %v425
    %v2691 = vunpack.c.h.b16 %v425
    %v2692 = vunpack.c.l.b16 %v426
    %v2693 = vunpack.c.h.b16 %v426
    %v2694 = vunpack.c.l.b16 %v427
    %v2695 = vunpack.c.h.b16 %v427
    %v2696 = vunpack.c.l.b16 %v428
    %v2697 = vunpack.c.h.b16 %v428
    %v2698 = vunpack.c.l.b16 %v429
    %v2699 = vunpack.c.h.b16 %v429
    %v2700 = vunpack.c.l.b16 %v430
    %v2701 = vunpack.c.h.b16 %v430
    %v2702 = vunpack.c.l.b16 %v431
    %v2703 = vunpack.c.h.b16 %v431
    %v2704 = vunpack.c.l.b16 %v432
    %v2705 = vunpack.c.h.b16 %v432
    %v2706 = vunpack.c.l.b16 %v433
    %v2707 = vunpack.c.h.b16 %v433
    %v2708 = vunpack.c.l.b16 %v434
    %v2709 = vunpack.c.h.b16 %v434
    %v2710 = vunpack.c.l.b16 %v435
    %v2711 = vunpack.c.h.b16 %v435
    %v2712 = vunpack.c.l.b16 %v436
    %v2713 = vunpack.c.h.b16 %v436
    %v2714 = vunpack.c.l.b16 %v437
    %v2715 = vunpack.c.h.b16 %v437
    %v2716 = vunpack.c.l.b16 %v438
    %v2717 = vunpack.c.h.b16 %v438
    %v2718 = vunpack.c.l.b16 %v439
    %v2719 = vunpack.c.h.b16 %v439
    %v2720 = vunpack.c.l.b16 %v440
    %v2721 = vunpack.c.h.b16 %v440
    %v2722 = vunpack.c.l.b16 %v441
    %v2723 = vunpack.c.h.b16 %v441
    %v2724 = vunpack.c.l.b16 %v442
    %v2725 = vunpack.c.h.b16 %v442
    %v2726 = vunpack.c.l.b16 %v443
    %v2727 = vunpack.c.h.b16 %v443
    %v2728 = vunpack.c.l.b16 %v444
    %v2729 = vunpack.c.h.b16 %v444
    %v2730 = vunpack.c.l.b16 %v445
    %v2731 = vunpack.c.h.b16 %v445
    %v2732 = vunpack.c.l.b16 %v446
    %v2733 = vunpack.c.h.b16 %v446
    %v2734 = vunpack.c.l.b16 %v447
    %v2735 = vunpack.c.h.b16 %v447
    %v2736 = vunpack.c.l.b16 %v448
    %v2737 = vunpack.c.h.b16 %v448
    %v2738 = vunpack.c.l.b16 %v449
    %v2739 = vunpack.c.h.b16 %v449
    %v2740 = vunpack.c.l.b16 %v450
    %v2741 = vunpack.c.h.b16 %v450
    %v2742 = vunpack.c.l.b16 %v451
    %v2743 = vunpack.c.h.b16 %v451
    %v2744 = vunpack.c.l.b16 %v452
    %v2745 = vunpack.c.h.b16 %v452
    %v2746 = vunpack.c.l.b16 %v453
    %v2747 = vunpack.c.h.b16 %v453
    %v2748 = vunpack.c.l.b16 %v454
    %v2749 = vunpack.c.h.b16 %v454
    %v2750 = vunpack.c.l.b16 %v455
    %v2751 = vunpack.c.h.b16 %v455
    %v2752 = vunpack.c.l.b16 %v456
    %v2753 = vunpack.c.h.b16 %v456
    %v2754 = vunpack.c.l.b16 %v457
    %v2755 = vunpack.c.h.b16 %v457
    %v2756 = vunpack.c.l.b16 %v458
    %v2757 = vunpack.c.h.b16 %v458
    %v2758 = vunpack.c.l.b16 %v459
    %v2759 = vunpack.c.h.b16 %v459
    %v2760 = vunpack.c.l.b16 %v460
    %v2761 = vunpack.c.h.b16 %v460
    %v2762 = vunpack.c.l.b16 %v461
    %v2763 = vunpack.c.h.b16 %v461
    %v2764 = vunpack.c.l.b16 %v462
    %v2765 = vunpack.c.h.b16 %v462
    %v2766 = vunpack.c.l.b16 %v463
    %v2767 = vunpack.c.h.b16 %v463
    %v2768 = vunpack.c.l.b16 %v464
    %v2769 = vunpack.c.h.b16 %v464
    %v2770 = vunpack.c.l.b16 %v465
    %v2771 = vunpack.c.h.b16 %v465
    %v2772 = vunpack.c.l.b16 %v466
    %v2773 = vunpack.c.h.b16 %v466
    %v2774 = vunpack.c.l.b16 %v467
    %v2775 = vunpack.c.h.b16 %v467
    %v2776 = vunpack.c.l.b16 %v468
    %v2777 = vunpack.c.h.b16 %v468
    %v2778 = vunpack.c.l.b16 %v469
    %v2779 = vunpack.c.h.b16 %v469
    %v2780 = vunpack.c.l.b16 %v470
    %v2781 = vunpack.c.h.b16 %v470
    %v2782 = vunpack.c.l.b16 %v471
    %v2783 = vunpack.c.h.b16 %v471
    %v2784 = vunpack.c.l.b16 %v472
    %v2785 = vunpack.c.h.b16 %v472
    %v2786 = vunpack.c.l.b16 %v473
    %v2787 = vunpack.c.h.b16 %v473
    %v2788 = vunpack.c.l.b16 %v474
    %v2789 = vunpack.c.h.b16 %v474
    %v2790 = vunpack.c.l.b16 %v475
    %v2791 = vunpack.c.h.b16 %v475
    %v2792 = vunpack.c.l.b16 %v476
    %v2793 = vunpack.c.h.b16 %v476
    %v2794 = vunpack.c.l.b16 %v477
    %v2795 = vunpack.c.h.b16 %v477
    %v2796 = vpack.c.b16 %v2544, %v2540
    %v2797 = vpack.c.b16 %v2545, %v2541
    %v2798 = vpack.c.b16 %v2546, %v2542
    %v2799 = vpack.c.b16 %v2547, %v2543
    %v2800 = vpack.c.b16 %v2552, %v2548
    %v2801 = vpack.c.b16 %v2553, %v2549
    %v2802 = vpack.c.b16 %v2554, %v2550
    %v2803 = vpack.c.b16 %v2555, %v2551
    %v2804 = vpack.c.b16 %v2560, %v2556
    %v2805 = vpack.c.b16 %v2561, %v2557
    %v2806 = vpack.c.b16 %v2562, %v2558
    %v2807 = vpack.c.b16 %v2563, %v2559
    %v2808 = vpack.c.b16 %v2568, %v2564
    %v2809 = vpack.c.b16 %v2569, %v2565
    %v2810 = vpack.c.b16 %v2570, %v2566
    %v2811 = vpack.c.b16 %v2571, %v2567
    %v2812 = vpack.c.b16 %v2576, %v2572
    %v2813 = vpack.c.b16 %v2577, %v2573
    %v2814 = vpack.c.b16 %v2578, %v2574
    %v2815 = vpack.c.b16 %v2579, %v2575
    %v2816 = vpack.c.b16 %v2584, %v2580
    %v2817 = vpack.c.b16 %v2585, %v2581
    %v2818 = vpack.c.b16 %v2586, %v2582
    %v2819 = vpack.c.b16 %v2587, %v2583
    %v2820 = vpack.c.b16 %v2592, %v2588
    %v2821 = vpack.c.b16 %v2593, %v2589
    %v2822 = vpack.c.b16 %v2594, %v2590
    %v2823 = vpack.c.b16 %v2595, %v2591
    %v2824 = vpack.c.b16 %v2600, %v2596
    %v2825 = vpack.c.b16 %v2601, %v2597
    %v2826 = vpack.c.b16 %v2602, %v2598
    %v2827 = vpack.c.b16 %v2603, %v2599
    %v2828 = vpack.c.b16 %v2608, %v2604
    %v2829 = vpack.c.b16 %v2609, %v2605
    %v2830 = vpack.c.b16 %v2610, %v2606
    %v2831 = vpack.c.b16 %v2611, %v2607
    %v2832 = vpack.c.b16 %v2616, %v2612
    %v2833 = vpack.c.b16 %v2617, %v2613
    %v2834 = vpack.c.b16 %v2618, %v2614
    %v2835 = vpack.c.b16 %v2619, %v2615
    %v2836 = vpack.c.b16 %v2624, %v2620
    %v2837 = vpack.c.b16 %v2625, %v2621
    %v2838 = vpack.c.b16 %v2626, %v2622
    %v2839 = vpack.c.b16 %v2627, %v2623
    %v2840 = vpack.c.b16 %v2632, %v2628
    %v2841 = vpack.c.b16 %v2633, %v2629
    %v2842 = vpack.c.b16 %v2634, %v2630
    %v2843 = vpack.c.b16 %v2635, %v2631
    %v2844 = vpack.c.b16 %v2640, %v2636
    %v2845 = vpack.c.b16 %v2641, %v2637
    %v2846 = vpack.c.b16 %v2642, %v2638
    %v2847 = vpack.c.b16 %v2643, %v2639
    %v2848 = vpack.c.b16 %v2648, %v2644
    %v2849 = vpack.c.b16 %v2649, %v2645
    %v2850 = vpack.c.b16 %v2650, %v2646
    %v2851 = vpack.c.b16 %v2651, %v2647
    %v2852 = vpack.c.b16 %v2656, %v2652
    %v2853 = vpack.c.b16 %v2657, %v2653
    %v2854 = vpack.c.b16 %v2658, %v2654
    %v2855 = vpack.c.b16 %v2659, %v2655
    %v2856 = vpack.c.b16 %v2664, %v2660
    %v2857 = vpack.c.b16 %v2665, %v2661
    %v2858 = vpack.c.b16 %v2666, %v2662
    %v2859 = vpack.c.b16 %v2667, %v2663
    %v2860 = vpack.c.b16 %v2672, %v2668
    %v2861 = vpack.c.b16 %v2673, %v2669
    %v2862 = vpack.c.b16 %v2674, %v2670
    %v2863 = vpack.c.b16 %v2675, %v2671
    %v2864 = vpack.c.b16 %v2680, %v2676
    %v2865 = vpack.c.b16 %v2681, %v2677
    %v2866 = vpack.c.b16 %v2682, %v2678
    %v2867 = vpack.c.b16 %v2683, %v2679
    %v2868 = vpack.c.b16 %v2688, %v2684
    %v2869 = vpack.c.b16 %v2689, %v2685
    %v2870 = vpack.c.b16 %v2690, %v2686
    %v2871 = vpack.c.b16 %v2691, %v2687
    %v2872 = vpack.c.b16 %v2696, %v2692
    %v2873 = vpack.c.b16 %v2697, %v2693
    %v2874 = vpack.c.b16 %v2698, %v2694
    %v2875 = vpack.c.b16 %v2699, %v2695
    %v2876 = vpack.c.b16 %v2704, %v2700
    %v2877 = vpack.c.b16 %v2705, %v2701
    %v2878 = vpack.c.b16 %v2706, %v2702
    %v2879 = vpack.c.b16 %v2707, %v2703
    %v2880 = vpack.c.b16 %v2712, %v2708
    %v2881 = vpack.c.b16 %v2713, %v2709
    %v2882 = vpack.c.b16 %v2714, %v2710
    %v2883 = vpack.c.b16 %v2715, %v2711
    %v2884 = vpack.c.b16 %v2720, %v2716
    %v2885 = vpack.c.b16 %v2721, %v2717
    %v2886 = vpack.c.b16 %v2722, %v2718
    %v2887 = vpack.c.b16 %v2723, %v2719
    %v2888 = vpack.c.b16 %v2728, %v2724
    %v2889 = vpack.c.b16 %v2729, %v2725
    %v2890 = vpack.c.b16 %v2730, %v2726
    %v2891 = vpack.c.b16 %v2731, %v2727
    %v2892 = vpack.c.b16 %v2736, %v2732
    %v2893 = vpack.c.b16 %v2737, %v2733
    %v2894 = vpack.c.b16 %v2738, %v2734
    %v2895 = vpack.c.b16 %v2739, %v2735
    %v2896 = vpack.c.b16 %v2744, %v2740
    %v2897 = vpack.c.b16 %v2745, %v2741
    %v2898 = vpack.c.b16 %v2746, %v2742
    %v2899 = vpack.c.b16 %v2747, %v2743
    %v2900 = vpack.c.b16 %v2752, %v2748
    %v2901 = vpack.c.b16 %v2753, %v2749
    %v2902 = vpack.c.b16 %v2754, %v2750
    %v2903 = vpack.c.b16 %v2755, %v2751
    %v2904 = vpack.c.b16 %v2760, %v2756
    %v2905 = vpack.c.b16 %v2761, %v2757
    %v2906 = vpack.c.b16 %v2762, %v2758
    %v2907 = vpack.c.b16 %v2763, %v2759
    %v2908 = vpack.c.b16 %v2768, %v2764
    %v2909 = vpack.c.b16 %v2769, %v2765
    %v2910 = vpack.c.b16 %v2770, %v2766
    %v2911 = vpack.c.b16 %v2771, %v2767
    %v2912 = vpack.c.b16 %v2776, %v2772
    %v2913 = vpack.c.b16 %v2777, %v2773
    %v2914 = vpack.c.b16 %v2778, %v2774
    %v2915 = vpack.c.b16 %v2779, %v2775
    %v2916 = vpack.c.b16 %v2784, %v2780
    %v2917 = vpack.c.b16 %v2785, %v2781
    %v2918 = vpack.c.b16 %v2786, %v2782
    %v2919 = vpack.c.b16 %v2787, %v2783
    %v2920 = vpack.c.b16 %v2792, %v2788
    %v2921 = vpack.c.b16 %v2793, %v2789
    %v2922 = vpack.c.b16 %v2794, %v2790
    %v2923 = vpack.c.b16 %v2795, %v2791
    %3052 = vmatpush.bf16.msra.mxu0 %v2824
    %3053 = vmatpush.bf16.msra.mxu0 %v2820
    %3054 = vmatpush.bf16.msra.mxu0 %v2816
    %3055 = vmatpush.bf16.msra.mxu0 %v2812
    %3056 = vmatpush.bf16.msra.mxu0 %v2808
    %3057 = vmatpush.bf16.msra.mxu0 %v2804
    %3058 = vmatpush.bf16.msra.mxu0 %v2800
    %3059 = vmatpush.bf16.msra.mxu0 %v2796
    %3060 = vmatmul.bf16.gmra.mxu0 %v2408
    %v3061 = vpop.f32.mrf.mxu0
    %v3062 = vadd.f32 0.0, %v3061
    %v3063 = vpop.f32.mrf.mxu0
    %3064 = vdwg.mxu0
    %3065 = vmatpush.bf16.msra.mxu0 %v2856
    %3066 = vmatpush.bf16.msra.mxu0 %v2852
    %3067 = vmatpush.bf16.msra.mxu0 %v2848
    %3068 = vmatpush.bf16.msra.mxu0 %v2844
    %3069 = vmatpush.bf16.msra.mxu0 %v2840
    %3070 = vmatpush.bf16.msra.mxu0 %v2836
    %3071 = vmatpush.bf16.msra.mxu0 %v2832
    %3072 = vmatpush.bf16.msra.mxu0 %v2828
    %3073 = vmatmul.bf16.gmra.mxu0 %v2409
    %v3074 = vpop.f32.mrf.mxu0
    %v3075 = vadd.f32 %v3062, %v3074
    %v3076 = vpop.f32.mrf.mxu0
    %3077 = vdwg.mxu0
    %3078 = vmatpush.bf16.msra.mxu0 %v2888
    %3079 = vmatpush.bf16.msra.mxu0 %v2884
    %3080 = vmatpush.bf16.msra.mxu0 %v2880
    %3081 = vmatpush.bf16.msra.mxu0 %v2876
    %3082 = vmatpush.bf16.msra.mxu0 %v2872
    %3083 = vmatpush.bf16.msra.mxu0 %v2868
    %3084 = vmatpush.bf16.msra.mxu0 %v2864
    %3085 = vmatpush.bf16.msra.mxu0 %v2860
    %3086 = vmatmul.bf16.gmra.mxu0 %v2410
    %v3087 = vpop.f32.mrf.mxu0
    %v3088 = vadd.f32 %v3075, %v3087
    %v3089 = vpop.f32.mrf.mxu0
    %3090 = vdwg.mxu0
    %3091 = vmatpush.bf16.msra.mxu0 %v2920
    %3092 = vmatpush.bf16.msra.mxu0 %v2916
    %3093 = vmatpush.bf16.msra.mxu0 %v2912
    %3094 = vmatpush.bf16.msra.mxu0 %v2908
    %3095 = vmatpush.bf16.msra.mxu0 %v2904
    %3096 = vmatpush.bf16.msra.mxu0 %v2900
    %3097 = vmatpush.bf16.msra.mxu0 %v2896
    %3098 = vmatpush.bf16.msra.mxu0 %v2892
    %3099 = vmatmul.bf16.gmra.mxu0 %v2411
    %v3100 = vpop.f32.mrf.mxu0
    %v3101 = vadd.f32 %v3088, %v3100
    %v3102 = vpop.f32.mrf.mxu0
    %3103 = vdwg.mxu0
    %3104 = vmatpush.bf16.msra.mxu0 %v2825
    %3105 = vmatpush.bf16.msra.mxu0 %v2821
    %3106 = vmatpush.bf16.msra.mxu0 %v2817
    %3107 = vmatpush.bf16.msra.mxu0 %v2813
    %3108 = vmatpush.bf16.msra.mxu0 %v2809
    %3109 = vmatpush.bf16.msra.mxu0 %v2805
    %3110 = vmatpush.bf16.msra.mxu0 %v2801
    %3111 = vmatpush.bf16.msra.mxu0 %v2797
    %3112 = vmatmul.bf16.gmra.mxu0 %v2408
    %v3113 = vpop.f32.mrf.mxu0
    %v3114 = vadd.f32 0.0, %v3113
    %v3115 = vpop.f32.mrf.mxu0
    %3116 = vdwg.mxu0
    %3117 = vmatpush.bf16.msra.mxu0 %v2857
    %3118 = vmatpush.bf16.msra.mxu0 %v2853
    %3119 = vmatpush.bf16.msra.mxu0 %v2849
    %3120 = vmatpush.bf16.msra.mxu0 %v2845
    %3121 = vmatpush.bf16.msra.mxu0 %v2841
    %3122 = vmatpush.bf16.msra.mxu0 %v2837
    %3123 = vmatpush.bf16.msra.mxu0 %v2833
    %3124 = vmatpush.bf16.msra.mxu0 %v2829
    %3125 = vmatmul.bf16.gmra.mxu0 %v2409
    %v3126 = vpop.f32.mrf.mxu0
    %v3127 = vadd.f32 %v3114, %v3126
    %v3128 = vpop.f32.mrf.mxu0
    %3129 = vdwg.mxu0
    %3130 = vmatpush.bf16.msra.mxu0 %v2889
    %3131 = vmatpush.bf16.msra.mxu0 %v2885
    %3132 = vmatpush.bf16.msra.mxu0 %v2881
    %3133 = vmatpush.bf16.msra.mxu0 %v2877
    %3134 = vmatpush.bf16.msra.mxu0 %v2873
    %3135 = vmatpush.bf16.msra.mxu0 %v2869
    %3136 = vmatpush.bf16.msra.mxu0 %v2865
    %3137 = vmatpush.bf16.msra.mxu0 %v2861
    %3138 = vmatmul.bf16.gmra.mxu0 %v2410
    %v3139 = vpop.f32.mrf.mxu0
    %v3140 = vadd.f32 %v3127, %v3139
    %v3141 = vpop.f32.mrf.mxu0
    %3142 = vdwg.mxu0
    %3143 = vmatpush.bf16.msra.mxu0 %v2921
    %3144 = vmatpush.bf16.msra.mxu0 %v2917
    %3145 = vmatpush.bf16.msra.mxu0 %v2913
    %3146 = vmatpush.bf16.msra.mxu0 %v2909
    %3147 = vmatpush.bf16.msra.mxu0 %v2905
    %3148 = vmatpush.bf16.msra.mxu0 %v2901
    %3149 = vmatpush.bf16.msra.mxu0 %v2897
    %3150 = vmatpush.bf16.msra.mxu0 %v2893
    %3151 = vmatmul.bf16.gmra.mxu0 %v2411
    %v3152 = vpop.f32.mrf.mxu0
    %v3153 = vadd.f32 %v3140, %v3152
    %v3154 = vpop.f32.mrf.mxu0
    %3155 = vdwg.mxu0
    %3156 = vmatpush.bf16.msra.mxu0 %v2826
    %3157 = vmatpush.bf16.msra.mxu0 %v2822
    %3158 = vmatpush.bf16.msra.mxu0 %v2818
    %3159 = vmatpush.bf16.msra.mxu0 %v2814
    %3160 = vmatpush.bf16.msra.mxu0 %v2810
    %3161 = vmatpush.bf16.msra.mxu0 %v2806
    %3162 = vmatpush.bf16.msra.mxu0 %v2802
    %3163 = vmatpush.bf16.msra.mxu0 %v2798
    %3164 = vmatmul.bf16.gmra.mxu0 %v2408
    %v3165 = vpop.f32.mrf.mxu0
    %v3166 = vadd.f32 0.0, %v3165
    %v3167 = vpop.f32.mrf.mxu0
    %3168 = vdwg.mxu0
    %3169 = vmatpush.bf16.msra.mxu0 %v2858
    %3170 = vmatpush.bf16.msra.mxu0 %v2854
    %3171 = vmatpush.bf16.msra.mxu0 %v2850
    %3172 = vmatpush.bf16.msra.mxu0 %v2846
    %3173 = vmatpush.bf16.msra.mxu0 %v2842
    %3174 = vmatpush.bf16.msra.mxu0 %v2838
    %3175 = vmatpush.bf16.msra.mxu0 %v2834
    %3176 = vmatpush.bf16.msra.mxu0 %v2830
    %3177 = vmatmul.bf16.gmra.mxu0 %v2409
    %v3178 = vpop.f32.mrf.mxu0
    %v3179 = vadd.f32 %v3166, %v3178
    %v3180 = vpop.f32.mrf.mxu0
    %3181 = vdwg.mxu0
    %3182 = vmatpush.bf16.msra.mxu0 %v2890
    %3183 = vmatpush.bf16.msra.mxu0 %v2886
    %3184 = vmatpush.bf16.msra.mxu0 %v2882
    %3185 = vmatpush.bf16.msra.mxu0 %v2878
    %3186 = vmatpush.bf16.msra.mxu0 %v2874
    %3187 = vmatpush.bf16.msra.mxu0 %v2870
    %3188 = vmatpush.bf16.msra.mxu0 %v2866
    %3189 = vmatpush.bf16.msra.mxu0 %v2862
    %3190 = vmatmul.bf16.gmra.mxu0 %v2410
    %v3191 = vpop.f32.mrf.mxu0
    %v3192 = vadd.f32 %v3179, %v3191
    %v3193 = vpop.f32.mrf.mxu0
    %3194 = vdwg.mxu0
    %3195 = vmatpush.bf16.msra.mxu0 %v2922
    %3196 = vmatpush.bf16.msra.mxu0 %v2918
    %3197 = vmatpush.bf16.msra.mxu0 %v2914
    %3198 = vmatpush.bf16.msra.mxu0 %v2910
    %3199 = vmatpush.bf16.msra.mxu0 %v2906
    %3200 = vmatpush.bf16.msra.mxu0 %v2902
    %3201 = vmatpush.bf16.msra.mxu0 %v2898
    %3202 = vmatpush.bf16.msra.mxu0 %v2894
    %3203 = vmatmul.bf16.gmra.mxu0 %v2411
    %v3204 = vpop.f32.mrf.mxu0
    %v3205 = vadd.f32 %v3192, %v3204
    %v3206 = vpop.f32.mrf.mxu0
    %3207 = vdwg.mxu0
    %3208 = vmatpush.bf16.msra.mxu0 %v2827
    %3209 = vmatpush.bf16.msra.mxu0 %v2823
    %3210 = vmatpush.bf16.msra.mxu0 %v2819
    %3211 = vmatpush.bf16.msra.mxu0 %v2815
    %3212 = vmatpush.bf16.msra.mxu0 %v2811
    %3213 = vmatpush.bf16.msra.mxu0 %v2807
    %3214 = vmatpush.bf16.msra.mxu0 %v2803
    %3215 = vmatpush.bf16.msra.mxu0 %v2799
    %3216 = vmatmul.bf16.gmra.mxu0 %v2408
    %v3217 = vpop.f32.mrf.mxu0
    %v3218 = vadd.f32 0.0, %v3217
    %v3219 = vpop.f32.mrf.mxu0
    %3220 = vdwg.mxu0
    %3221 = vmatpush.bf16.msra.mxu0 %v2859
    %3222 = vmatpush.bf16.msra.mxu0 %v2855
    %3223 = vmatpush.bf16.msra.mxu0 %v2851
    %3224 = vmatpush.bf16.msra.mxu0 %v2847
    %3225 = vmatpush.bf16.msra.mxu0 %v2843
    %3226 = vmatpush.bf16.msra.mxu0 %v2839
    %3227 = vmatpush.bf16.msra.mxu0 %v2835
    %3228 = vmatpush.bf16.msra.mxu0 %v2831
    %3229 = vmatmul.bf16.gmra.mxu0 %v2409
    %v3230 = vpop.f32.mrf.mxu0
    %v3231 = vadd.f32 %v3218, %v3230
    %v3232 = vpop.f32.mrf.mxu0
    %3233 = vdwg.mxu0
    %3234 = vmatpush.bf16.msra.mxu0 %v2891
    %3235 = vmatpush.bf16.msra.mxu0 %v2887
    %3236 = vmatpush.bf16.msra.mxu0 %v2883
    %3237 = vmatpush.bf16.msra.mxu0 %v2879
    %3238 = vmatpush.bf16.msra.mxu0 %v2875
    %3239 = vmatpush.bf16.msra.mxu0 %v2871
    %3240 = vmatpush.bf16.msra.mxu0 %v2867
    %3241 = vmatpush.bf16.msra.mxu0 %v2863
    %3242 = vmatmul.bf16.gmra.mxu0 %v2410
    %v3243 = vpop.f32.mrf.mxu0
    %v3244 = vadd.f32 %v3231, %v3243
    %v3245 = vpop.f32.mrf.mxu0
    %3246 = vdwg.mxu0
    %3247 = vmatpush.bf16.msra.mxu0 %v2923
    %3248 = vmatpush.bf16.msra.mxu0 %v2919
    %3249 = vmatpush.bf16.msra.mxu0 %v2915
    %3250 = vmatpush.bf16.msra.mxu0 %v2911
    %3251 = vmatpush.bf16.msra.mxu0 %v2907
    %3252 = vmatpush.bf16.msra.mxu0 %v2903
    %3253 = vmatpush.bf16.msra.mxu0 %v2899
    %3254 = vmatpush.bf16.msra.mxu0 %v2895
    %3255 = vmatmul.bf16.gmra.mxu0 %v2411
    %v3256 = vpop.f32.mrf.mxu0
    %v3257 = vadd.f32 %v3244, %v3256
    %v3258 = vpop.f32.mrf.mxu0
    %3259 = vdwg.mxu0
    %v3260 = vpack.c.bf16 %v3153, %v3101
    %v3261 = vpack.c.bf16 %v3257, %v3205
    %v3264 = vunpack.c.l.b16 %v488
    %v3265 = vunpack.c.h.b16 %v488
    %v3266 = vunpack.c.l.b16 %v489
    %v3267 = vunpack.c.h.b16 %v489
    %v3268 = vpack.c.b16 %v3264, %v3264
    %v3269 = vpack.c.b16 %v3265, %v3265
    %v3270 = vpack.c.b16 %v3266, %v3266
    %v3271 = vpack.c.b16 %v3267, %v3267
    %v3273 = vpack.i.b16 %v3268, %v3268
    %v3275 = vperm.slane %v3273, 0
    %v3277 = vpack.i.b16 %v3269, %v3269
    %v3279 = vperm.slane %v3277, 0
    %v3281 = vpack.i.b16 %v3270, %v3270
    %v3283 = vperm.slane %v3281, 0
    %v3285 = vpack.i.b16 %v3271, %v3271
    %v3287 = vperm.slane %v3285, 0
    %v3288 = vunpack.c.l.bf16 %v3260
    %v3289 = vunpack.c.h.bf16 %v3260
    %v3290 = vunpack.c.l.bf16 %v3261
    %v3291 = vunpack.c.h.bf16 %v3261
    %v3292 = vunpack.c.l.bf16 %v3275
    %v3293 = vunpack.c.l.bf16 %v3279
    %v3294 = vunpack.c.l.bf16 %v3283
    %v3295 = vunpack.c.l.bf16 %v3287
    %v3296 = vadd.f32 %v3288, %v3292
    %v3297 = vadd.f32 %v3289, %v3293
    %v3298 = vadd.f32 %v3290, %v3294
    %v3299 = vadd.f32 %v3291, %v3295
    %v3300 = vpack.c.bf16 %v3297, %v3296
    %v3301 = vpack.c.bf16 %v3299, %v3298
    %v3302 = vunpack.c.l.bf16 %v3300
    %v3303 = vunpack.c.h.bf16 %v3300
    %v3304 = vunpack.c.l.bf16 %v3301
    %v3305 = vunpack.c.h.bf16 %v3301
    %v3306 = vmul.f32 %v3302, 0.20019531
    %v3307 = vmul.f32 %v3303, 0.20019531
    %v3308 = vmul.f32 %v3304, 0.20019531
    %v3309 = vmul.f32 %v3305, 0.20019531
    %v3310 = vpack.c.bf16 %v3307, %v3306
    %v3311 = vpack.c.bf16 %v3309, %v3308
    %v3312 = vunpack.c.l.bf16 %v3310
    %v3313 = vunpack.c.h.bf16 %v3310
    %v3314 = vunpack.c.l.bf16 %v3311
    %v3315 = vunpack.c.h.bf16 %v3311
    %v3316 = vmax.f32 %v3302, %v3312
    %v3317 = vmax.f32 %v3303, %v3313
    %v3318 = vmax.f32 %v3304, %v3314
    %v3319 = vmax.f32 %v3305, %v3315
    %v3320 = vpack.c.bf16 %v3316, %v3316
    %v3321 = vpack.c.bf16 %v3317, %v3317
    %v3322 = vpack.c.bf16 %v3318, %v3318
    %v3323 = vpack.c.bf16 %v3319, %v3319
    %v3452 = vunpack.c.l.b16 %v490
    %v3453 = vunpack.c.h.b16 %v490
    %v3454 = vunpack.c.l.b16 %v491
    %v3455 = vunpack.c.h.b16 %v491
    %v3456 = vunpack.c.l.b16 %v492
    %v3457 = vunpack.c.h.b16 %v492
    %v3458 = vunpack.c.l.b16 %v493
    %v3459 = vunpack.c.h.b16 %v493
    %v3460 = vunpack.c.l.b16 %v494
    %v3461 = vunpack.c.h.b16 %v494
    %v3462 = vunpack.c.l.b16 %v495
    %v3463 = vunpack.c.h.b16 %v495
    %v3464 = vunpack.c.l.b16 %v496
    %v3465 = vunpack.c.h.b16 %v496
    %v3466 = vunpack.c.l.b16 %v497
    %v3467 = vunpack.c.h.b16 %v497
    %v3468 = vunpack.c.l.b16 %v498
    %v3469 = vunpack.c.h.b16 %v498
    %v3470 = vunpack.c.l.b16 %v499
    %v3471 = vunpack.c.h.b16 %v499
    %v3472 = vunpack.c.l.b16 %v500
    %v3473 = vunpack.c.h.b16 %v500
    %v3474 = vunpack.c.l.b16 %v501
    %v3475 = vunpack.c.h.b16 %v501
    %v3476 = vunpack.c.l.b16 %v502
    %v3477 = vunpack.c.h.b16 %v502
    %v3478 = vunpack.c.l.b16 %v503
    %v3479 = vunpack.c.h.b16 %v503
    %v3480 = vunpack.c.l.b16 %v504
    %v3481 = vunpack.c.h.b16 %v504
    %v3482 = vunpack.c.l.b16 %v505
    %v3483 = vunpack.c.h.b16 %v505
    %v3484 = vunpack.c.l.b16 %v506
    %v3485 = vunpack.c.h.b16 %v506
    %v3486 = vunpack.c.l.b16 %v507
    %v3487 = vunpack.c.h.b16 %v507
    %v3488 = vunpack.c.l.b16 %v508
    %v3489 = vunpack.c.h.b16 %v508
    %v3490 = vunpack.c.l.b16 %v509
    %v3491 = vunpack.c.h.b16 %v509
    %v3492 = vunpack.c.l.b16 %v510
    %v3493 = vunpack.c.h.b16 %v510
    %v3494 = vunpack.c.l.b16 %v511
    %v3495 = vunpack.c.h.b16 %v511
    %v3496 = vunpack.c.l.b16 %v512
    %v3497 = vunpack.c.h.b16 %v512
    %v3498 = vunpack.c.l.b16 %v513
    %v3499 = vunpack.c.h.b16 %v513
    %v3500 = vunpack.c.l.b16 %v514
    %v3501 = vunpack.c.h.b16 %v514
    %v3502 = vunpack.c.l.b16 %v515
    %v3503 = vunpack.c.h.b16 %v515
    %v3504 = vunpack.c.l.b16 %v516
    %v3505 = vunpack.c.h.b16 %v516
    %v3506 = vunpack.c.l.b16 %v517
    %v3507 = vunpack.c.h.b16 %v517
    %v3508 = vunpack.c.l.b16 %v518
    %v3509 = vunpack.c.h.b16 %v518
    %v3510 = vunpack.c.l.b16 %v519
    %v3511 = vunpack.c.h.b16 %v519
    %v3512 = vunpack.c.l.b16 %v520
    %v3513 = vunpack.c.h.b16 %v520
    %v3514 = vunpack.c.l.b16 %v521
    %v3515 = vunpack.c.h.b16 %v521
    %v3516 = vunpack.c.l.b16 %v522
    %v3517 = vunpack.c.h.b16 %v522
    %v3518 = vunpack.c.l.b16 %v523
    %v3519 = vunpack.c.h.b16 %v523
    %v3520 = vunpack.c.l.b16 %v524
    %v3521 = vunpack.c.h.b16 %v524
    %v3522 = vunpack.c.l.b16 %v525
    %v3523 = vunpack.c.h.b16 %v525
    %v3524 = vunpack.c.l.b16 %v526
    %v3525 = vunpack.c.h.b16 %v526
    %v3526 = vunpack.c.l.b16 %v527
    %v3527 = vunpack.c.h.b16 %v527
    %v3528 = vunpack.c.l.b16 %v528
    %v3529 = vunpack.c.h.b16 %v528
    %v3530 = vunpack.c.l.b16 %v529
    %v3531 = vunpack.c.h.b16 %v529
    %v3532 = vunpack.c.l.b16 %v530
    %v3533 = vunpack.c.h.b16 %v530
    %v3534 = vunpack.c.l.b16 %v531
    %v3535 = vunpack.c.h.b16 %v531
    %v3536 = vunpack.c.l.b16 %v532
    %v3537 = vunpack.c.h.b16 %v532
    %v3538 = vunpack.c.l.b16 %v533
    %v3539 = vunpack.c.h.b16 %v533
    %v3540 = vunpack.c.l.b16 %v534
    %v3541 = vunpack.c.h.b16 %v534
    %v3542 = vunpack.c.l.b16 %v535
    %v3543 = vunpack.c.h.b16 %v535
    %v3544 = vunpack.c.l.b16 %v536
    %v3545 = vunpack.c.h.b16 %v536
    %v3546 = vunpack.c.l.b16 %v537
    %v3547 = vunpack.c.h.b16 %v537
    %v3548 = vunpack.c.l.b16 %v538
    %v3549 = vunpack.c.h.b16 %v538
    %v3550 = vunpack.c.l.b16 %v539
    %v3551 = vunpack.c.h.b16 %v539
    %v3552 = vunpack.c.l.b16 %v540
    %v3553 = vunpack.c.h.b16 %v540
    %v3554 = vunpack.c.l.b16 %v541
    %v3555 = vunpack.c.h.b16 %v541
    %v3556 = vunpack.c.l.b16 %v542
    %v3557 = vunpack.c.h.b16 %v542
    %v3558 = vunpack.c.l.b16 %v543
    %v3559 = vunpack.c.h.b16 %v543
    %v3560 = vunpack.c.l.b16 %v544
    %v3561 = vunpack.c.h.b16 %v544
    %v3562 = vunpack.c.l.b16 %v545
    %v3563 = vunpack.c.h.b16 %v545
    %v3564 = vunpack.c.l.b16 %v546
    %v3565 = vunpack.c.h.b16 %v546
    %v3566 = vunpack.c.l.b16 %v547
    %v3567 = vunpack.c.h.b16 %v547
    %v3568 = vunpack.c.l.b16 %v548
    %v3569 = vunpack.c.h.b16 %v548
    %v3570 = vunpack.c.l.b16 %v549
    %v3571 = vunpack.c.h.b16 %v549
    %v3572 = vunpack.c.l.b16 %v550
    %v3573 = vunpack.c.h.b16 %v550
    %v3574 = vunpack.c.l.b16 %v551
    %v3575 = vunpack.c.h.b16 %v551
    %v3576 = vunpack.c.l.b16 %v552
    %v3577 = vunpack.c.h.b16 %v552
    %v3578 = vunpack.c.l.b16 %v553
    %v3579 = vunpack.c.h.b16 %v553
    %v3580 = vunpack.c.l.b16 %v554
    %v3581 = vunpack.c.h.b16 %v554
    %v3582 = vunpack.c.l.b16 %v555
    %v3583 = vunpack.c.h.b16 %v555
    %v3584 = vunpack.c.l.b16 %v556
    %v3585 = vunpack.c.h.b16 %v556
    %v3586 = vunpack.c.l.b16 %v557
    %v3587 = vunpack.c.h.b16 %v557
    %v3588 = vunpack.c.l.b16 %v558
    %v3589 = vunpack.c.h.b16 %v558
    %v3590 = vunpack.c.l.b16 %v559
    %v3591 = vunpack.c.h.b16 %v559
    %v3592 = vunpack.c.l.b16 %v560
    %v3593 = vunpack.c.h.b16 %v560
    %v3594 = vunpack.c.l.b16 %v561
    %v3595 = vunpack.c.h.b16 %v561
    %v3596 = vunpack.c.l.b16 %v562
    %v3597 = vunpack.c.h.b16 %v562
    %v3598 = vunpack.c.l.b16 %v563
    %v3599 = vunpack.c.h.b16 %v563
    %v3600 = vunpack.c.l.b16 %v564
    %v3601 = vunpack.c.h.b16 %v564
    %v3602 = vunpack.c.l.b16 %v565
    %v3603 = vunpack.c.h.b16 %v565
    %v3604 = vunpack.c.l.b16 %v566
    %v3605 = vunpack.c.h.b16 %v566
    %v3606 = vunpack.c.l.b16 %v567
    %v3607 = vunpack.c.h.b16 %v567
    %v3608 = vunpack.c.l.b16 %v568
    %v3609 = vunpack.c.h.b16 %v568
    %v3610 = vunpack.c.l.b16 %v569
    %v3611 = vunpack.c.h.b16 %v569
    %v3612 = vunpack.c.l.b16 %v570
    %v3613 = vunpack.c.h.b16 %v570
    %v3614 = vunpack.c.l.b16 %v571
    %v3615 = vunpack.c.h.b16 %v571
    %v3616 = vunpack.c.l.b16 %v572
    %v3617 = vunpack.c.h.b16 %v572
    %v3618 = vunpack.c.l.b16 %v573
    %v3619 = vunpack.c.h.b16 %v573
    %v3620 = vunpack.c.l.b16 %v574
    %v3621 = vunpack.c.h.b16 %v574
    %v3622 = vunpack.c.l.b16 %v575
    %v3623 = vunpack.c.h.b16 %v575
    %v3624 = vunpack.c.l.b16 %v576
    %v3625 = vunpack.c.h.b16 %v576
    %v3626 = vunpack.c.l.b16 %v577
    %v3627 = vunpack.c.h.b16 %v577
    %v3628 = vunpack.c.l.b16 %v578
    %v3629 = vunpack.c.h.b16 %v578
    %v3630 = vunpack.c.l.b16 %v579
    %v3631 = vunpack.c.h.b16 %v579
    %v3632 = vunpack.c.l.b16 %v580
    %v3633 = vunpack.c.h.b16 %v580
    %v3634 = vunpack.c.l.b16 %v581
    %v3635 = vunpack.c.h.b16 %v581
    %v3636 = vunpack.c.l.b16 %v582
    %v3637 = vunpack.c.h.b16 %v582
    %v3638 = vunpack.c.l.b16 %v583
    %v3639 = vunpack.c.h.b16 %v583
    %v3640 = vunpack.c.l.b16 %v584
    %v3641 = vunpack.c.h.b16 %v584
    %v3642 = vunpack.c.l.b16 %v585
    %v3643 = vunpack.c.h.b16 %v585
    %v3644 = vunpack.c.l.b16 %v586
    %v3645 = vunpack.c.h.b16 %v586
    %v3646 = vunpack.c.l.b16 %v587
    %v3647 = vunpack.c.h.b16 %v587
    %v3648 = vunpack.c.l.b16 %v588
    %v3649 = vunpack.c.h.b16 %v588
    %v3650 = vunpack.c.l.b16 %v589
    %v3651 = vunpack.c.h.b16 %v589
    %v3652 = vunpack.c.l.b16 %v590
    %v3653 = vunpack.c.h.b16 %v590
    %v3654 = vunpack.c.l.b16 %v591
    %v3655 = vunpack.c.h.b16 %v591
    %v3656 = vunpack.c.l.b16 %v592
    %v3657 = vunpack.c.h.b16 %v592
    %v3658 = vunpack.c.l.b16 %v593
    %v3659 = vunpack.c.h.b16 %v593
    %v3660 = vunpack.c.l.b16 %v594
    %v3661 = vunpack.c.h.b16 %v594
    %v3662 = vunpack.c.l.b16 %v595
    %v3663 = vunpack.c.h.b16 %v595
    %v3664 = vunpack.c.l.b16 %v596
    %v3665 = vunpack.c.h.b16 %v596
    %v3666 = vunpack.c.l.b16 %v597
    %v3667 = vunpack.c.h.b16 %v597
    %v3668 = vunpack.c.l.b16 %v598
    %v3669 = vunpack.c.h.b16 %v598
    %v3670 = vunpack.c.l.b16 %v599
    %v3671 = vunpack.c.h.b16 %v599
    %v3672 = vunpack.c.l.b16 %v600
    %v3673 = vunpack.c.h.b16 %v600
    %v3674 = vunpack.c.l.b16 %v601
    %v3675 = vunpack.c.h.b16 %v601
    %v3676 = vunpack.c.l.b16 %v602
    %v3677 = vunpack.c.h.b16 %v602
    %v3678 = vunpack.c.l.b16 %v603
    %v3679 = vunpack.c.h.b16 %v603
    %v3680 = vunpack.c.l.b16 %v604
    %v3681 = vunpack.c.h.b16 %v604
    %v3682 = vunpack.c.l.b16 %v605
    %v3683 = vunpack.c.h.b16 %v605
    %v3684 = vunpack.c.l.b16 %v606
    %v3685 = vunpack.c.h.b16 %v606
    %v3686 = vunpack.c.l.b16 %v607
    %v3687 = vunpack.c.h.b16 %v607
    %v3688 = vunpack.c.l.b16 %v608
    %v3689 = vunpack.c.h.b16 %v608
    %v3690 = vunpack.c.l.b16 %v609
    %v3691 = vunpack.c.h.b16 %v609
    %v3692 = vunpack.c.l.b16 %v610
    %v3693 = vunpack.c.h.b16 %v610
    %v3694 = vunpack.c.l.b16 %v611
    %v3695 = vunpack.c.h.b16 %v611
    %v3696 = vunpack.c.l.b16 %v612
    %v3697 = vunpack.c.h.b16 %v612
    %v3698 = vunpack.c.l.b16 %v613
    %v3699 = vunpack.c.h.b16 %v613
    %v3700 = vunpack.c.l.b16 %v614
    %v3701 = vunpack.c.h.b16 %v614
    %v3702 = vunpack.c.l.b16 %v615
    %v3703 = vunpack.c.h.b16 %v615
    %v3704 = vunpack.c.l.b16 %v616
    %v3705 = vunpack.c.h.b16 %v616
    %v3706 = vunpack.c.l.b16 %v617
    %v3707 = vunpack.c.h.b16 %v617
    %v3708 = vpack.c.b16 %v3456, %v3452
    %v3709 = vpack.c.b16 %v3457, %v3453
    %v3710 = vpack.c.b16 %v3458, %v3454
    %v3711 = vpack.c.b16 %v3459, %v3455
    %v3712 = vpack.c.b16 %v3464, %v3460
    %v3713 = vpack.c.b16 %v3465, %v3461
    %v3714 = vpack.c.b16 %v3466, %v3462
    %v3715 = vpack.c.b16 %v3467, %v3463
    %v3716 = vpack.c.b16 %v3472, %v3468
    %v3717 = vpack.c.b16 %v3473, %v3469
    %v3718 = vpack.c.b16 %v3474, %v3470
    %v3719 = vpack.c.b16 %v3475, %v3471
    %v3720 = vpack.c.b16 %v3480, %v3476
    %v3721 = vpack.c.b16 %v3481, %v3477
    %v3722 = vpack.c.b16 %v3482, %v3478
    %v3723 = vpack.c.b16 %v3483, %v3479
    %v3724 = vpack.c.b16 %v3488, %v3484
    %v3725 = vpack.c.b16 %v3489, %v3485
    %v3726 = vpack.c.b16 %v3490, %v3486
    %v3727 = vpack.c.b16 %v3491, %v3487
    %v3728 = vpack.c.b16 %v3496, %v3492
    %v3729 = vpack.c.b16 %v3497, %v3493
    %v3730 = vpack.c.b16 %v3498, %v3494
    %v3731 = vpack.c.b16 %v3499, %v3495
    %v3732 = vpack.c.b16 %v3504, %v3500
    %v3733 = vpack.c.b16 %v3505, %v3501
    %v3734 = vpack.c.b16 %v3506, %v3502
    %v3735 = vpack.c.b16 %v3507, %v3503
    %v3736 = vpack.c.b16 %v3512, %v3508
    %v3737 = vpack.c.b16 %v3513, %v3509
    %v3738 = vpack.c.b16 %v3514, %v3510
    %v3739 = vpack.c.b16 %v3515, %v3511
    %v3740 = vpack.c.b16 %v3520, %v3516
    %v3741 = vpack.c.b16 %v3521, %v3517
    %v3742 = vpack.c.b16 %v3522, %v3518
    %v3743 = vpack.c.b16 %v3523, %v3519
    %v3744 = vpack.c.b16 %v3528, %v3524
    %v3745 = vpack.c.b16 %v3529, %v3525
    %v3746 = vpack.c.b16 %v3530, %v3526
    %v3747 = vpack.c.b16 %v3531, %v3527
    %v3748 = vpack.c.b16 %v3536, %v3532
    %v3749 = vpack.c.b16 %v3537, %v3533
    %v3750 = vpack.c.b16 %v3538, %v3534
    %v3751 = vpack.c.b16 %v3539, %v3535
    %v3752 = vpack.c.b16 %v3544, %v3540
    %v3753 = vpack.c.b16 %v3545, %v3541
    %v3754 = vpack.c.b16 %v3546, %v3542
    %v3755 = vpack.c.b16 %v3547, %v3543
    %v3756 = vpack.c.b16 %v3552, %v3548
    %v3757 = vpack.c.b16 %v3553, %v3549
    %v3758 = vpack.c.b16 %v3554, %v3550
    %v3759 = vpack.c.b16 %v3555, %v3551
    %v3760 = vpack.c.b16 %v3560, %v3556
    %v3761 = vpack.c.b16 %v3561, %v3557
    %v3762 = vpack.c.b16 %v3562, %v3558
    %v3763 = vpack.c.b16 %v3563, %v3559
    %v3764 = vpack.c.b16 %v3568, %v3564
    %v3765 = vpack.c.b16 %v3569, %v3565
    %v3766 = vpack.c.b16 %v3570, %v3566
    %v3767 = vpack.c.b16 %v3571, %v3567
    %v3768 = vpack.c.b16 %v3576, %v3572
    %v3769 = vpack.c.b16 %v3577, %v3573
    %v3770 = vpack.c.b16 %v3578, %v3574
    %v3771 = vpack.c.b16 %v3579, %v3575
    %v3772 = vpack.c.b16 %v3584, %v3580
    %v3773 = vpack.c.b16 %v3585, %v3581
    %v3774 = vpack.c.b16 %v3586, %v3582
    %v3775 = vpack.c.b16 %v3587, %v3583
    %v3776 = vpack.c.b16 %v3592, %v3588
    %v3777 = vpack.c.b16 %v3593, %v3589
    %v3778 = vpack.c.b16 %v3594, %v3590
    %v3779 = vpack.c.b16 %v3595, %v3591
    %v3780 = vpack.c.b16 %v3600, %v3596
    %v3781 = vpack.c.b16 %v3601, %v3597
    %v3782 = vpack.c.b16 %v3602, %v3598
    %v3783 = vpack.c.b16 %v3603, %v3599
    %v3784 = vpack.c.b16 %v3608, %v3604
    %v3785 = vpack.c.b16 %v3609, %v3605
    %v3786 = vpack.c.b16 %v3610, %v3606
    %v3787 = vpack.c.b16 %v3611, %v3607
    %v3788 = vpack.c.b16 %v3616, %v3612
    %v3789 = vpack.c.b16 %v3617, %v3613
    %v3790 = vpack.c.b16 %v3618, %v3614
    %v3791 = vpack.c.b16 %v3619, %v3615
    %v3792 = vpack.c.b16 %v3624, %v3620
    %v3793 = vpack.c.b16 %v3625, %v3621
    %v3794 = vpack.c.b16 %v3626, %v3622
    %v3795 = vpack.c.b16 %v3627, %v3623
    %v3796 = vpack.c.b16 %v3632, %v3628
    %v3797 = vpack.c.b16 %v3633, %v3629
    %v3798 = vpack.c.b16 %v3634, %v3630
    %v3799 = vpack.c.b16 %v3635, %v3631
    %v3800 = vpack.c.b16 %v3640, %v3636
    %v3801 = vpack.c.b16 %v3641, %v3637
    %v3802 = vpack.c.b16 %v3642, %v3638
    %v3803 = vpack.c.b16 %v3643, %v3639
    %v3804 = vpack.c.b16 %v3648, %v3644
    %v3805 = vpack.c.b16 %v3649, %v3645
    %v3806 = vpack.c.b16 %v3650, %v3646
    %v3807 = vpack.c.b16 %v3651, %v3647
    %v3808 = vpack.c.b16 %v3656, %v3652
    %v3809 = vpack.c.b16 %v3657, %v3653
    %v3810 = vpack.c.b16 %v3658, %v3654
    %v3811 = vpack.c.b16 %v3659, %v3655
    %v3812 = vpack.c.b16 %v3664, %v3660
    %v3813 = vpack.c.b16 %v3665, %v3661
    %v3814 = vpack.c.b16 %v3666, %v3662
    %v3815 = vpack.c.b16 %v3667, %v3663
    %v3816 = vpack.c.b16 %v3672, %v3668
    %v3817 = vpack.c.b16 %v3673, %v3669
    %v3818 = vpack.c.b16 %v3674, %v3670
    %v3819 = vpack.c.b16 %v3675, %v3671
    %v3820 = vpack.c.b16 %v3680, %v3676
    %v3821 = vpack.c.b16 %v3681, %v3677
    %v3822 = vpack.c.b16 %v3682, %v3678
    %v3823 = vpack.c.b16 %v3683, %v3679
    %v3824 = vpack.c.b16 %v3688, %v3684
    %v3825 = vpack.c.b16 %v3689, %v3685
    %v3826 = vpack.c.b16 %v3690, %v3686
    %v3827 = vpack.c.b16 %v3691, %v3687
    %v3828 = vpack.c.b16 %v3696, %v3692
    %v3829 = vpack.c.b16 %v3697, %v3693
    %v3830 = vpack.c.b16 %v3698, %v3694
    %v3831 = vpack.c.b16 %v3699, %v3695
    %v3832 = vpack.c.b16 %v3704, %v3700
    %v3833 = vpack.c.b16 %v3705, %v3701
    %v3834 = vpack.c.b16 %v3706, %v3702
    %v3835 = vpack.c.b16 %v3707, %v3703
    %3964 = vmatpush.bf16.msra.mxu0 %v3736
    %3965 = vmatpush.bf16.msra.mxu0 %v3732
    %3966 = vmatpush.bf16.msra.mxu0 %v3728
    %3967 = vmatpush.bf16.msra.mxu0 %v3724
    %3968 = vmatpush.bf16.msra.mxu0 %v3720
    %3969 = vmatpush.bf16.msra.mxu0 %v3716
    %3970 = vmatpush.bf16.msra.mxu0 %v3712
    %3971 = vmatpush.bf16.msra.mxu0 %v3708
    %3972 = vmatmul.bf16.gmra.mxu0 %v3320
    %v3973 = vpop.f32.mrf.mxu0
    %v3974 = vadd.f32 0.0, %v3973
    %v3975 = vpop.f32.mrf.mxu0
    %3976 = vdwg.mxu0
    %3977 = vmatpush.bf16.msra.mxu0 %v3768
    %3978 = vmatpush.bf16.msra.mxu0 %v3764
    %3979 = vmatpush.bf16.msra.mxu0 %v3760
    %3980 = vmatpush.bf16.msra.mxu0 %v3756
    %3981 = vmatpush.bf16.msra.mxu0 %v3752
    %3982 = vmatpush.bf16.msra.mxu0 %v3748
    %3983 = vmatpush.bf16.msra.mxu0 %v3744
    %3984 = vmatpush.bf16.msra.mxu0 %v3740
    %3985 = vmatmul.bf16.gmra.mxu0 %v3321
    %v3986 = vpop.f32.mrf.mxu0
    %v3987 = vadd.f32 %v3974, %v3986
    %v3988 = vpop.f32.mrf.mxu0
    %3989 = vdwg.mxu0
    %3990 = vmatpush.bf16.msra.mxu0 %v3800
    %3991 = vmatpush.bf16.msra.mxu0 %v3796
    %3992 = vmatpush.bf16.msra.mxu0 %v3792
    %3993 = vmatpush.bf16.msra.mxu0 %v3788
    %3994 = vmatpush.bf16.msra.mxu0 %v3784
    %3995 = vmatpush.bf16.msra.mxu0 %v3780
    %3996 = vmatpush.bf16.msra.mxu0 %v3776
    %3997 = vmatpush.bf16.msra.mxu0 %v3772
    %3998 = vmatmul.bf16.gmra.mxu0 %v3322
    %v3999 = vpop.f32.mrf.mxu0
    %v4000 = vadd.f32 %v3987, %v3999
    %v4001 = vpop.f32.mrf.mxu0
    %4002 = vdwg.mxu0
    %4003 = vmatpush.bf16.msra.mxu0 %v3832
    %4004 = vmatpush.bf16.msra.mxu0 %v3828
    %4005 = vmatpush.bf16.msra.mxu0 %v3824
    %4006 = vmatpush.bf16.msra.mxu0 %v3820
    %4007 = vmatpush.bf16.msra.mxu0 %v3816
    %4008 = vmatpush.bf16.msra.mxu0 %v3812
    %4009 = vmatpush.bf16.msra.mxu0 %v3808
    %4010 = vmatpush.bf16.msra.mxu0 %v3804
    %4011 = vmatmul.bf16.gmra.mxu0 %v3323
    %v4012 = vpop.f32.mrf.mxu0
    %v4013 = vadd.f32 %v4000, %v4012
    %v4014 = vpop.f32.mrf.mxu0
    %4015 = vdwg.mxu0
    %4016 = vmatpush.bf16.msra.mxu0 %v3737
    %4017 = vmatpush.bf16.msra.mxu0 %v3733
    %4018 = vmatpush.bf16.msra.mxu0 %v3729
    %4019 = vmatpush.bf16.msra.mxu0 %v3725
    %4020 = vmatpush.bf16.msra.mxu0 %v3721
    %4021 = vmatpush.bf16.msra.mxu0 %v3717
    %4022 = vmatpush.bf16.msra.mxu0 %v3713
    %4023 = vmatpush.bf16.msra.mxu0 %v3709
    %4024 = vmatmul.bf16.gmra.mxu0 %v3320
    %v4025 = vpop.f32.mrf.mxu0
    %v4026 = vadd.f32 0.0, %v4025
    %v4027 = vpop.f32.mrf.mxu0
    %4028 = vdwg.mxu0
    %4029 = vmatpush.bf16.msra.mxu0 %v3769
    %4030 = vmatpush.bf16.msra.mxu0 %v3765
    %4031 = vmatpush.bf16.msra.mxu0 %v3761
    %4032 = vmatpush.bf16.msra.mxu0 %v3757
    %4033 = vmatpush.bf16.msra.mxu0 %v3753
    %4034 = vmatpush.bf16.msra.mxu0 %v3749
    %4035 = vmatpush.bf16.msra.mxu0 %v3745
    %4036 = vmatpush.bf16.msra.mxu0 %v3741
    %4037 = vmatmul.bf16.gmra.mxu0 %v3321
    %v4038 = vpop.f32.mrf.mxu0
    %v4039 = vadd.f32 %v4026, %v4038
    %v4040 = vpop.f32.mrf.mxu0
    %4041 = vdwg.mxu0
    %4042 = vmatpush.bf16.msra.mxu0 %v3801
    %4043 = vmatpush.bf16.msra.mxu0 %v3797
    %4044 = vmatpush.bf16.msra.mxu0 %v3793
    %4045 = vmatpush.bf16.msra.mxu0 %v3789
    %4046 = vmatpush.bf16.msra.mxu0 %v3785
    %4047 = vmatpush.bf16.msra.mxu0 %v3781
    %4048 = vmatpush.bf16.msra.mxu0 %v3777
    %4049 = vmatpush.bf16.msra.mxu0 %v3773
    %4050 = vmatmul.bf16.gmra.mxu0 %v3322
    %v4051 = vpop.f32.mrf.mxu0
    %v4052 = vadd.f32 %v4039, %v4051
    %v4053 = vpop.f32.mrf.mxu0
    %4054 = vdwg.mxu0
    %4055 = vmatpush.bf16.msra.mxu0 %v3833
    %4056 = vmatpush.bf16.msra.mxu0 %v3829
    %4057 = vmatpush.bf16.msra.mxu0 %v3825
    %4058 = vmatpush.bf16.msra.mxu0 %v3821
    %4059 = vmatpush.bf16.msra.mxu0 %v3817
    %4060 = vmatpush.bf16.msra.mxu0 %v3813
    %4061 = vmatpush.bf16.msra.mxu0 %v3809
    %4062 = vmatpush.bf16.msra.mxu0 %v3805
    %4063 = vmatmul.bf16.gmra.mxu0 %v3323
    %v4064 = vpop.f32.mrf.mxu0
    %v4065 = vadd.f32 %v4052, %v4064
    %v4066 = vpop.f32.mrf.mxu0
    %4067 = vdwg.mxu0
    %4068 = vmatpush.bf16.msra.mxu0 %v3738
    %4069 = vmatpush.bf16.msra.mxu0 %v3734
    %4070 = vmatpush.bf16.msra.mxu0 %v3730
    %4071 = vmatpush.bf16.msra.mxu0 %v3726
    %4072 = vmatpush.bf16.msra.mxu0 %v3722
    %4073 = vmatpush.bf16.msra.mxu0 %v3718
    %4074 = vmatpush.bf16.msra.mxu0 %v3714
    %4075 = vmatpush.bf16.msra.mxu0 %v3710
    %4076 = vmatmul.bf16.gmra.mxu0 %v3320
    %v4077 = vpop.f32.mrf.mxu0
    %v4078 = vadd.f32 0.0, %v4077
    %v4079 = vpop.f32.mrf.mxu0
    %4080 = vdwg.mxu0
    %4081 = vmatpush.bf16.msra.mxu0 %v3770
    %4082 = vmatpush.bf16.msra.mxu0 %v3766
    %4083 = vmatpush.bf16.msra.mxu0 %v3762
    %4084 = vmatpush.bf16.msra.mxu0 %v3758
    %4085 = vmatpush.bf16.msra.mxu0 %v3754
    %4086 = vmatpush.bf16.msra.mxu0 %v3750
    %4087 = vmatpush.bf16.msra.mxu0 %v3746
    %4088 = vmatpush.bf16.msra.mxu0 %v3742
    %4089 = vmatmul.bf16.gmra.mxu0 %v3321
    %v4090 = vpop.f32.mrf.mxu0
    %v4091 = vadd.f32 %v4078, %v4090
    %v4092 = vpop.f32.mrf.mxu0
    %4093 = vdwg.mxu0
    %4094 = vmatpush.bf16.msra.mxu0 %v3802
    %4095 = vmatpush.bf16.msra.mxu0 %v3798
    %4096 = vmatpush.bf16.msra.mxu0 %v3794
    %4097 = vmatpush.bf16.msra.mxu0 %v3790
    %4098 = vmatpush.bf16.msra.mxu0 %v3786
    %4099 = vmatpush.bf16.msra.mxu0 %v3782
    %4100 = vmatpush.bf16.msra.mxu0 %v3778
    %4101 = vmatpush.bf16.msra.mxu0 %v3774
    %4102 = vmatmul.bf16.gmra.mxu0 %v3322
    %v4103 = vpop.f32.mrf.mxu0
    %v4104 = vadd.f32 %v4091, %v4103
    %v4105 = vpop.f32.mrf.mxu0
    %4106 = vdwg.mxu0
    %4107 = vmatpush.bf16.msra.mxu0 %v3834
    %4108 = vmatpush.bf16.msra.mxu0 %v3830
    %4109 = vmatpush.bf16.msra.mxu0 %v3826
    %4110 = vmatpush.bf16.msra.mxu0 %v3822
    %4111 = vmatpush.bf16.msra.mxu0 %v3818
    %4112 = vmatpush.bf16.msra.mxu0 %v3814
    %4113 = vmatpush.bf16.msra.mxu0 %v3810
    %4114 = vmatpush.bf16.msra.mxu0 %v3806
    %4115 = vmatmul.bf16.gmra.mxu0 %v3323
    %v4116 = vpop.f32.mrf.mxu0
    %v4117 = vadd.f32 %v4104, %v4116
    %v4118 = vpop.f32.mrf.mxu0
    %4119 = vdwg.mxu0
    %4120 = vmatpush.bf16.msra.mxu0 %v3739
    %4121 = vmatpush.bf16.msra.mxu0 %v3735
    %4122 = vmatpush.bf16.msra.mxu0 %v3731
    %4123 = vmatpush.bf16.msra.mxu0 %v3727
    %4124 = vmatpush.bf16.msra.mxu0 %v3723
    %4125 = vmatpush.bf16.msra.mxu0 %v3719
    %4126 = vmatpush.bf16.msra.mxu0 %v3715
    %4127 = vmatpush.bf16.msra.mxu0 %v3711
    %4128 = vmatmul.bf16.gmra.mxu0 %v3320
    %v4129 = vpop.f32.mrf.mxu0
    %v4130 = vadd.f32 0.0, %v4129
    %v4131 = vpop.f32.mrf.mxu0
    %4132 = vdwg.mxu0
    %4133 = vmatpush.bf16.msra.mxu0 %v3771
    %4134 = vmatpush.bf16.msra.mxu0 %v3767
    %4135 = vmatpush.bf16.msra.mxu0 %v3763
    %4136 = vmatpush.bf16.msra.mxu0 %v3759
    %4137 = vmatpush.bf16.msra.mxu0 %v3755
    %4138 = vmatpush.bf16.msra.mxu0 %v3751
    %4139 = vmatpush.bf16.msra.mxu0 %v3747
    %4140 = vmatpush.bf16.msra.mxu0 %v3743
    %4141 = vmatmul.bf16.gmra.mxu0 %v3321
    %v4142 = vpop.f32.mrf.mxu0
    %v4143 = vadd.f32 %v4130, %v4142
    %v4144 = vpop.f32.mrf.mxu0
    %4145 = vdwg.mxu0
    %4146 = vmatpush.bf16.msra.mxu0 %v3803
    %4147 = vmatpush.bf16.msra.mxu0 %v3799
    %4148 = vmatpush.bf16.msra.mxu0 %v3795
    %4149 = vmatpush.bf16.msra.mxu0 %v3791
    %4150 = vmatpush.bf16.msra.mxu0 %v3787
    %4151 = vmatpush.bf16.msra.mxu0 %v3783
    %4152 = vmatpush.bf16.msra.mxu0 %v3779
    %4153 = vmatpush.bf16.msra.mxu0 %v3775
    %4154 = vmatmul.bf16.gmra.mxu0 %v3322
    %v4155 = vpop.f32.mrf.mxu0
    %v4156 = vadd.f32 %v4143, %v4155
    %v4157 = vpop.f32.mrf.mxu0
    %4158 = vdwg.mxu0
    %4159 = vmatpush.bf16.msra.mxu0 %v3835
    %4160 = vmatpush.bf16.msra.mxu0 %v3831
    %4161 = vmatpush.bf16.msra.mxu0 %v3827
    %4162 = vmatpush.bf16.msra.mxu0 %v3823
    %4163 = vmatpush.bf16.msra.mxu0 %v3819
    %4164 = vmatpush.bf16.msra.mxu0 %v3815
    %4165 = vmatpush.bf16.msra.mxu0 %v3811
    %4166 = vmatpush.bf16.msra.mxu0 %v3807
    %4167 = vmatmul.bf16.gmra.mxu0 %v3323
    %v4168 = vpop.f32.mrf.mxu0
    %v4169 = vadd.f32 %v4156, %v4168
    %v4170 = vpop.f32.mrf.mxu0
    %4171 = vdwg.mxu0
    %v4172 = vpack.c.bf16 %v4065, %v4013
    %v4173 = vpack.c.bf16 %v4169, %v4117
    %v4176 = vunpack.c.l.b16 %v628
    %v4177 = vunpack.c.h.b16 %v628
    %v4178 = vunpack.c.l.b16 %v629
    %v4179 = vunpack.c.h.b16 %v629
    %v4180 = vpack.c.b16 %v4176, %v4176
    %v4181 = vpack.c.b16 %v4177, %v4177
    %v4182 = vpack.c.b16 %v4178, %v4178
    %v4183 = vpack.c.b16 %v4179, %v4179
    %v4185 = vpack.i.b16 %v4180, %v4180
    %v4187 = vperm.slane %v4185, 0
    %v4189 = vpack.i.b16 %v4181, %v4181
    %v4191 = vperm.slane %v4189, 0
    %v4193 = vpack.i.b16 %v4182, %v4182
    %v4195 = vperm.slane %v4193, 0
    %v4197 = vpack.i.b16 %v4183, %v4183
    %v4199 = vperm.slane %v4197, 0
    %v4200 = vunpack.c.l.bf16 %v4172
    %v4201 = vunpack.c.h.bf16 %v4172
    %v4202 = vunpack.c.l.bf16 %v4173
    %v4203 = vunpack.c.h.bf16 %v4173
    %v4204 = vunpack.c.l.bf16 %v4187
    %v4205 = vunpack.c.l.bf16 %v4191
    %v4206 = vunpack.c.l.bf16 %v4195
    %v4207 = vunpack.c.l.bf16 %v4199
    %v4208 = vadd.f32 %v4200, %v4204
    %v4209 = vadd.f32 %v4201, %v4205
    %v4210 = vadd.f32 %v4202, %v4206
    %v4211 = vadd.f32 %v4203, %v4207
    %v4212 = vpack.c.bf16 %v4209, %v4208
    %v4213 = vpack.c.bf16 %v4211, %v4210
    %v4214 = vunpack.c.l.bf16 %v4212
    %v4215 = vunpack.c.h.bf16 %v4212
    %v4216 = vunpack.c.l.bf16 %v4213
    %v4217 = vunpack.c.h.bf16 %v4213
    %v4218 = vmul.f32 %v4214, 0.20019531
    %v4219 = vmul.f32 %v4215, 0.20019531
    %v4220 = vmul.f32 %v4216, 0.20019531
    %v4221 = vmul.f32 %v4217, 0.20019531
    %v4222 = vpack.c.bf16 %v4219, %v4218
    %v4223 = vpack.c.bf16 %v4221, %v4220
    %v4224 = vunpack.c.l.bf16 %v4222
    %v4225 = vunpack.c.h.bf16 %v4222
    %v4226 = vunpack.c.l.bf16 %v4223
    %v4227 = vunpack.c.h.bf16 %v4223
    %v4228 = vmax.f32 %v4214, %v4224
    %v4229 = vmax.f32 %v4215, %v4225
    %v4230 = vmax.f32 %v4216, %v4226
    %v4231 = vmax.f32 %v4217, %v4227
    %v4232 = vpack.c.bf16 %v4228, %v4228
    %v4233 = vpack.c.bf16 %v4229, %v4229
    %v4234 = vpack.c.bf16 %v4230, %v4230
    %v4235 = vpack.c.bf16 %v4231, %v4231
    %v4364 = vunpack.c.l.b16 %v630
    %v4365 = vunpack.c.h.b16 %v630
    %v4366 = vunpack.c.l.b16 %v631
    %v4367 = vunpack.c.h.b16 %v631
    %v4368 = vunpack.c.l.b16 %v632
    %v4369 = vunpack.c.h.b16 %v632
    %v4370 = vunpack.c.l.b16 %v633
    %v4371 = vunpack.c.h.b16 %v633
    %v4372 = vunpack.c.l.b16 %v634
    %v4373 = vunpack.c.h.b16 %v634
    %v4374 = vunpack.c.l.b16 %v635
    %v4375 = vunpack.c.h.b16 %v635
    %v4376 = vunpack.c.l.b16 %v636
    %v4377 = vunpack.c.h.b16 %v636
    %v4378 = vunpack.c.l.b16 %v637
    %v4379 = vunpack.c.h.b16 %v637
    %v4380 = vunpack.c.l.b16 %v638
    %v4381 = vunpack.c.h.b16 %v638
    %v4382 = vunpack.c.l.b16 %v639
    %v4383 = vunpack.c.h.b16 %v639
    %v4384 = vunpack.c.l.b16 %v640
    %v4385 = vunpack.c.h.b16 %v640
    %v4386 = vunpack.c.l.b16 %v641
    %v4387 = vunpack.c.h.b16 %v641
    %v4388 = vunpack.c.l.b16 %v642
    %v4389 = vunpack.c.h.b16 %v642
    %v4390 = vunpack.c.l.b16 %v643
    %v4391 = vunpack.c.h.b16 %v643
    %v4392 = vunpack.c.l.b16 %v644
    %v4393 = vunpack.c.h.b16 %v644
    %v4394 = vunpack.c.l.b16 %v645
    %v4395 = vunpack.c.h.b16 %v645
    %v4396 = vunpack.c.l.b16 %v646
    %v4397 = vunpack.c.h.b16 %v646
    %v4398 = vunpack.c.l.b16 %v647
    %v4399 = vunpack.c.h.b16 %v647
    %v4400 = vunpack.c.l.b16 %v648
    %v4401 = vunpack.c.h.b16 %v648
    %v4402 = vunpack.c.l.b16 %v649
    %v4403 = vunpack.c.h.b16 %v649
    %v4404 = vunpack.c.l.b16 %v650
    %v4405 = vunpack.c.h.b16 %v650
    %v4406 = vunpack.c.l.b16 %v651
    %v4407 = vunpack.c.h.b16 %v651
    %v4408 = vunpack.c.l.b16 %v652
    %v4409 = vunpack.c.h.b16 %v652
    %v4410 = vunpack.c.l.b16 %v653
    %v4411 = vunpack.c.h.b16 %v653
    %v4412 = vunpack.c.l.b16 %v654
    %v4413 = vunpack.c.h.b16 %v654
    %v4414 = vunpack.c.l.b16 %v655
    %v4415 = vunpack.c.h.b16 %v655
    %v4416 = vunpack.c.l.b16 %v656
    %v4417 = vunpack.c.h.b16 %v656
    %v4418 = vunpack.c.l.b16 %v657
    %v4419 = vunpack.c.h.b16 %v657
    %v4420 = vunpack.c.l.b16 %v658
    %v4421 = vunpack.c.h.b16 %v658
    %v4422 = vunpack.c.l.b16 %v659
    %v4423 = vunpack.c.h.b16 %v659
    %v4424 = vunpack.c.l.b16 %v660
    %v4425 = vunpack.c.h.b16 %v660
    %v4426 = vunpack.c.l.b16 %v661
    %v4427 = vunpack.c.h.b16 %v661
    %v4428 = vunpack.c.l.b16 %v662
    %v4429 = vunpack.c.h.b16 %v662
    %v4430 = vunpack.c.l.b16 %v663
    %v4431 = vunpack.c.h.b16 %v663
    %v4432 = vunpack.c.l.b16 %v664
    %v4433 = vunpack.c.h.b16 %v664
    %v4434 = vunpack.c.l.b16 %v665
    %v4435 = vunpack.c.h.b16 %v665
    %v4436 = vunpack.c.l.b16 %v666
    %v4437 = vunpack.c.h.b16 %v666
    %v4438 = vunpack.c.l.b16 %v667
    %v4439 = vunpack.c.h.b16 %v667
    %v4440 = vunpack.c.l.b16 %v668
    %v4441 = vunpack.c.h.b16 %v668
    %v4442 = vunpack.c.l.b16 %v669
    %v4443 = vunpack.c.h.b16 %v669
    %v4444 = vunpack.c.l.b16 %v670
    %v4445 = vunpack.c.h.b16 %v670
    %v4446 = vunpack.c.l.b16 %v671
    %v4447 = vunpack.c.h.b16 %v671
    %v4448 = vunpack.c.l.b16 %v672
    %v4449 = vunpack.c.h.b16 %v672
    %v4450 = vunpack.c.l.b16 %v673
    %v4451 = vunpack.c.h.b16 %v673
    %v4452 = vunpack.c.l.b16 %v674
    %v4453 = vunpack.c.h.b16 %v674
    %v4454 = vunpack.c.l.b16 %v675
    %v4455 = vunpack.c.h.b16 %v675
    %v4456 = vunpack.c.l.b16 %v676
    %v4457 = vunpack.c.h.b16 %v676
    %v4458 = vunpack.c.l.b16 %v677
    %v4459 = vunpack.c.h.b16 %v677
    %v4460 = vunpack.c.l.b16 %v678
    %v4461 = vunpack.c.h.b16 %v678
    %v4462 = vunpack.c.l.b16 %v679
    %v4463 = vunpack.c.h.b16 %v679
    %v4464 = vunpack.c.l.b16 %v680
    %v4465 = vunpack.c.h.b16 %v680
    %v4466 = vunpack.c.l.b16 %v681
    %v4467 = vunpack.c.h.b16 %v681
    %v4468 = vunpack.c.l.b16 %v682
    %v4469 = vunpack.c.h.b16 %v682
    %v4470 = vunpack.c.l.b16 %v683
    %v4471 = vunpack.c.h.b16 %v683
    %v4472 = vunpack.c.l.b16 %v684
    %v4473 = vunpack.c.h.b16 %v684
    %v4474 = vunpack.c.l.b16 %v685
    %v4475 = vunpack.c.h.b16 %v685
    %v4476 = vunpack.c.l.b16 %v686
    %v4477 = vunpack.c.h.b16 %v686
    %v4478 = vunpack.c.l.b16 %v687
    %v4479 = vunpack.c.h.b16 %v687
    %v4480 = vunpack.c.l.b16 %v688
    %v4481 = vunpack.c.h.b16 %v688
    %v4482 = vunpack.c.l.b16 %v689
    %v4483 = vunpack.c.h.b16 %v689
    %v4484 = vunpack.c.l.b16 %v690
    %v4485 = vunpack.c.h.b16 %v690
    %v4486 = vunpack.c.l.b16 %v691
    %v4487 = vunpack.c.h.b16 %v691
    %v4488 = vunpack.c.l.b16 %v692
    %v4489 = vunpack.c.h.b16 %v692
    %v4490 = vunpack.c.l.b16 %v693
    %v4491 = vunpack.c.h.b16 %v693
    %v4492 = vunpack.c.l.b16 %v694
    %v4493 = vunpack.c.h.b16 %v694
    %v4494 = vunpack.c.l.b16 %v695
    %v4495 = vunpack.c.h.b16 %v695
    %v4496 = vunpack.c.l.b16 %v696
    %v4497 = vunpack.c.h.b16 %v696
    %v4498 = vunpack.c.l.b16 %v697
    %v4499 = vunpack.c.h.b16 %v697
    %v4500 = vunpack.c.l.b16 %v698
    %v4501 = vunpack.c.h.b16 %v698
    %v4502 = vunpack.c.l.b16 %v699
    %v4503 = vunpack.c.h.b16 %v699
    %v4504 = vunpack.c.l.b16 %v700
    %v4505 = vunpack.c.h.b16 %v700
    %v4506 = vunpack.c.l.b16 %v701
    %v4507 = vunpack.c.h.b16 %v701
    %v4508 = vunpack.c.l.b16 %v702
    %v4509 = vunpack.c.h.b16 %v702
    %v4510 = vunpack.c.l.b16 %v703
    %v4511 = vunpack.c.h.b16 %v703
    %v4512 = vunpack.c.l.b16 %v704
    %v4513 = vunpack.c.h.b16 %v704
    %v4514 = vunpack.c.l.b16 %v705
    %v4515 = vunpack.c.h.b16 %v705
    %v4516 = vunpack.c.l.b16 %v706
    %v4517 = vunpack.c.h.b16 %v706
    %v4518 = vunpack.c.l.b16 %v707
    %v4519 = vunpack.c.h.b16 %v707
    %v4520 = vunpack.c.l.b16 %v708
    %v4521 = vunpack.c.h.b16 %v708
    %v4522 = vunpack.c.l.b16 %v709
    %v4523 = vunpack.c.h.b16 %v709
    %v4524 = vunpack.c.l.b16 %v710
    %v4525 = vunpack.c.h.b16 %v710
    %v4526 = vunpack.c.l.b16 %v711
    %v4527 = vunpack.c.h.b16 %v711
    %v4528 = vunpack.c.l.b16 %v712
    %v4529 = vunpack.c.h.b16 %v712
    %v4530 = vunpack.c.l.b16 %v713
    %v4531 = vunpack.c.h.b16 %v713
    %v4532 = vunpack.c.l.b16 %v714
    %v4533 = vunpack.c.h.b16 %v714
    %v4534 = vunpack.c.l.b16 %v715
    %v4535 = vunpack.c.h.b16 %v715
    %v4536 = vunpack.c.l.b16 %v716
    %v4537 = vunpack.c.h.b16 %v716
    %v4538 = vunpack.c.l.b16 %v717
    %v4539 = vunpack.c.h.b16 %v717
    %v4540 = vunpack.c.l.b16 %v718
    %v4541 = vunpack.c.h.b16 %v718
    %v4542 = vunpack.c.l.b16 %v719
    %v4543 = vunpack.c.h.b16 %v719
    %v4544 = vunpack.c.l.b16 %v720
    %v4545 = vunpack.c.h.b16 %v720
    %v4546 = vunpack.c.l.b16 %v721
    %v4547 = vunpack.c.h.b16 %v721
    %v4548 = vunpack.c.l.b16 %v722
    %v4549 = vunpack.c.h.b16 %v722
    %v4550 = vunpack.c.l.b16 %v723
    %v4551 = vunpack.c.h.b16 %v723
    %v4552 = vunpack.c.l.b16 %v724
    %v4553 = vunpack.c.h.b16 %v724
    %v4554 = vunpack.c.l.b16 %v725
    %v4555 = vunpack.c.h.b16 %v725
    %v4556 = vunpack.c.l.b16 %v726
    %v4557 = vunpack.c.h.b16 %v726
    %v4558 = vunpack.c.l.b16 %v727
    %v4559 = vunpack.c.h.b16 %v727
    %v4560 = vunpack.c.l.b16 %v728
    %v4561 = vunpack.c.h.b16 %v728
    %v4562 = vunpack.c.l.b16 %v729
    %v4563 = vunpack.c.h.b16 %v729
    %v4564 = vunpack.c.l.b16 %v730
    %v4565 = vunpack.c.h.b16 %v730
    %v4566 = vunpack.c.l.b16 %v731
    %v4567 = vunpack.c.h.b16 %v731
    %v4568 = vunpack.c.l.b16 %v732
    %v4569 = vunpack.c.h.b16 %v732
    %v4570 = vunpack.c.l.b16 %v733
    %v4571 = vunpack.c.h.b16 %v733
    %v4572 = vunpack.c.l.b16 %v734
    %v4573 = vunpack.c.h.b16 %v734
    %v4574 = vunpack.c.l.b16 %v735
    %v4575 = vunpack.c.h.b16 %v735
    %v4576 = vunpack.c.l.b16 %v736
    %v4577 = vunpack.c.h.b16 %v736
    %v4578 = vunpack.c.l.b16 %v737
    %v4579 = vunpack.c.h.b16 %v737
    %v4580 = vunpack.c.l.b16 %v738
    %v4581 = vunpack.c.h.b16 %v738
    %v4582 = vunpack.c.l.b16 %v739
    %v4583 = vunpack.c.h.b16 %v739
    %v4584 = vunpack.c.l.b16 %v740
    %v4585 = vunpack.c.h.b16 %v740
    %v4586 = vunpack.c.l.b16 %v741
    %v4587 = vunpack.c.h.b16 %v741
    %v4588 = vunpack.c.l.b16 %v742
    %v4589 = vunpack.c.h.b16 %v742
    %v4590 = vunpack.c.l.b16 %v743
    %v4591 = vunpack.c.h.b16 %v743
    %v4592 = vunpack.c.l.b16 %v744
    %v4593 = vunpack.c.h.b16 %v744
    %v4594 = vunpack.c.l.b16 %v745
    %v4595 = vunpack.c.h.b16 %v745
    %v4596 = vunpack.c.l.b16 %v746
    %v4597 = vunpack.c.h.b16 %v746
    %v4598 = vunpack.c.l.b16 %v747
    %v4599 = vunpack.c.h.b16 %v747
    %v4600 = vunpack.c.l.b16 %v748
    %v4601 = vunpack.c.h.b16 %v748
    %v4602 = vunpack.c.l.b16 %v749
    %v4603 = vunpack.c.h.b16 %v749
    %v4604 = vunpack.c.l.b16 %v750
    %v4605 = vunpack.c.h.b16 %v750
    %v4606 = vunpack.c.l.b16 %v751
    %v4607 = vunpack.c.h.b16 %v751
    %v4608 = vunpack.c.l.b16 %v752
    %v4609 = vunpack.c.h.b16 %v752
    %v4610 = vunpack.c.l.b16 %v753
    %v4611 = vunpack.c.h.b16 %v753
    %v4612 = vunpack.c.l.b16 %v754
    %v4613 = vunpack.c.h.b16 %v754
    %v4614 = vunpack.c.l.b16 %v755
    %v4615 = vunpack.c.h.b16 %v755
    %v4616 = vunpack.c.l.b16 %v756
    %v4617 = vunpack.c.h.b16 %v756
    %v4618 = vunpack.c.l.b16 %v757
    %v4619 = vunpack.c.h.b16 %v757
    %v4620 = vpack.c.b16 %v4368, %v4364
    %v4621 = vpack.c.b16 %v4369, %v4365
    %v4622 = vpack.c.b16 %v4370, %v4366
    %v4623 = vpack.c.b16 %v4371, %v4367
    %v4624 = vpack.c.b16 %v4376, %v4372
    %v4625 = vpack.c.b16 %v4377, %v4373
    %v4626 = vpack.c.b16 %v4378, %v4374
    %v4627 = vpack.c.b16 %v4379, %v4375
    %v4628 = vpack.c.b16 %v4384, %v4380
    %v4629 = vpack.c.b16 %v4385, %v4381
    %v4630 = vpack.c.b16 %v4386, %v4382
    %v4631 = vpack.c.b16 %v4387, %v4383
    %v4632 = vpack.c.b16 %v4392, %v4388
    %v4633 = vpack.c.b16 %v4393, %v4389
    %v4634 = vpack.c.b16 %v4394, %v4390
    %v4635 = vpack.c.b16 %v4395, %v4391
    %v4636 = vpack.c.b16 %v4400, %v4396
    %v4637 = vpack.c.b16 %v4401, %v4397
    %v4638 = vpack.c.b16 %v4402, %v4398
    %v4639 = vpack.c.b16 %v4403, %v4399
    %v4640 = vpack.c.b16 %v4408, %v4404
    %v4641 = vpack.c.b16 %v4409, %v4405
    %v4642 = vpack.c.b16 %v4410, %v4406
    %v4643 = vpack.c.b16 %v4411, %v4407
    %v4644 = vpack.c.b16 %v4416, %v4412
    %v4645 = vpack.c.b16 %v4417, %v4413
    %v4646 = vpack.c.b16 %v4418, %v4414
    %v4647 = vpack.c.b16 %v4419, %v4415
    %v4648 = vpack.c.b16 %v4424, %v4420
    %v4649 = vpack.c.b16 %v4425, %v4421
    %v4650 = vpack.c.b16 %v4426, %v4422
    %v4651 = vpack.c.b16 %v4427, %v4423
    %v4652 = vpack.c.b16 %v4432, %v4428
    %v4653 = vpack.c.b16 %v4433, %v4429
    %v4654 = vpack.c.b16 %v4434, %v4430
    %v4655 = vpack.c.b16 %v4435, %v4431
    %v4656 = vpack.c.b16 %v4440, %v4436
    %v4657 = vpack.c.b16 %v4441, %v4437
    %v4658 = vpack.c.b16 %v4442, %v4438
    %v4659 = vpack.c.b16 %v4443, %v4439
    %v4660 = vpack.c.b16 %v4448, %v4444
    %v4661 = vpack.c.b16 %v4449, %v4445
    %v4662 = vpack.c.b16 %v4450, %v4446
    %v4663 = vpack.c.b16 %v4451, %v4447
    %v4664 = vpack.c.b16 %v4456, %v4452
    %v4665 = vpack.c.b16 %v4457, %v4453
    %v4666 = vpack.c.b16 %v4458, %v4454
    %v4667 = vpack.c.b16 %v4459, %v4455
    %v4668 = vpack.c.b16 %v4464, %v4460
    %v4669 = vpack.c.b16 %v4465, %v4461
    %v4670 = vpack.c.b16 %v4466, %v4462
    %v4671 = vpack.c.b16 %v4467, %v4463
    %v4672 = vpack.c.b16 %v4472, %v4468
    %v4673 = vpack.c.b16 %v4473, %v4469
    %v4674 = vpack.c.b16 %v4474, %v4470
    %v4675 = vpack.c.b16 %v4475, %v4471
    %v4676 = vpack.c.b16 %v4480, %v4476
    %v4677 = vpack.c.b16 %v4481, %v4477
    %v4678 = vpack.c.b16 %v4482, %v4478
    %v4679 = vpack.c.b16 %v4483, %v4479
    %v4680 = vpack.c.b16 %v4488, %v4484
    %v4681 = vpack.c.b16 %v4489, %v4485
    %v4682 = vpack.c.b16 %v4490, %v4486
    %v4683 = vpack.c.b16 %v4491, %v4487
    %v4684 = vpack.c.b16 %v4496, %v4492
    %v4685 = vpack.c.b16 %v4497, %v4493
    %v4686 = vpack.c.b16 %v4498, %v4494
    %v4687 = vpack.c.b16 %v4499, %v4495
    %v4688 = vpack.c.b16 %v4504, %v4500
    %v4689 = vpack.c.b16 %v4505, %v4501
    %v4690 = vpack.c.b16 %v4506, %v4502
    %v4691 = vpack.c.b16 %v4507, %v4503
    %v4692 = vpack.c.b16 %v4512, %v4508
    %v4693 = vpack.c.b16 %v4513, %v4509
    %v4694 = vpack.c.b16 %v4514, %v4510
    %v4695 = vpack.c.b16 %v4515, %v4511
    %v4696 = vpack.c.b16 %v4520, %v4516
    %v4697 = vpack.c.b16 %v4521, %v4517
    %v4698 = vpack.c.b16 %v4522, %v4518
    %v4699 = vpack.c.b16 %v4523, %v4519
    %v4700 = vpack.c.b16 %v4528, %v4524
    %v4701 = vpack.c.b16 %v4529, %v4525
    %v4702 = vpack.c.b16 %v4530, %v4526
    %v4703 = vpack.c.b16 %v4531, %v4527
    %v4704 = vpack.c.b16 %v4536, %v4532
    %v4705 = vpack.c.b16 %v4537, %v4533
    %v4706 = vpack.c.b16 %v4538, %v4534
    %v4707 = vpack.c.b16 %v4539, %v4535
    %v4708 = vpack.c.b16 %v4544, %v4540
    %v4709 = vpack.c.b16 %v4545, %v4541
    %v4710 = vpack.c.b16 %v4546, %v4542
    %v4711 = vpack.c.b16 %v4547, %v4543
    %v4712 = vpack.c.b16 %v4552, %v4548
    %v4713 = vpack.c.b16 %v4553, %v4549
    %v4714 = vpack.c.b16 %v4554, %v4550
    %v4715 = vpack.c.b16 %v4555, %v4551
    %v4716 = vpack.c.b16 %v4560, %v4556
    %v4717 = vpack.c.b16 %v4561, %v4557
    %v4718 = vpack.c.b16 %v4562, %v4558
    %v4719 = vpack.c.b16 %v4563, %v4559
    %v4720 = vpack.c.b16 %v4568, %v4564
    %v4721 = vpack.c.b16 %v4569, %v4565
    %v4722 = vpack.c.b16 %v4570, %v4566
    %v4723 = vpack.c.b16 %v4571, %v4567
    %v4724 = vpack.c.b16 %v4576, %v4572
    %v4725 = vpack.c.b16 %v4577, %v4573
    %v4726 = vpack.c.b16 %v4578, %v4574
    %v4727 = vpack.c.b16 %v4579, %v4575
    %v4728 = vpack.c.b16 %v4584, %v4580
    %v4729 = vpack.c.b16 %v4585, %v4581
    %v4730 = vpack.c.b16 %v4586, %v4582
    %v4731 = vpack.c.b16 %v4587, %v4583
    %v4732 = vpack.c.b16 %v4592, %v4588
    %v4733 = vpack.c.b16 %v4593, %v4589
    %v4734 = vpack.c.b16 %v4594, %v4590
    %v4735 = vpack.c.b16 %v4595, %v4591
    %v4736 = vpack.c.b16 %v4600, %v4596
    %v4737 = vpack.c.b16 %v4601, %v4597
    %v4738 = vpack.c.b16 %v4602, %v4598
    %v4739 = vpack.c.b16 %v4603, %v4599
    %v4740 = vpack.c.b16 %v4608, %v4604
    %v4741 = vpack.c.b16 %v4609, %v4605
    %v4742 = vpack.c.b16 %v4610, %v4606
    %v4743 = vpack.c.b16 %v4611, %v4607
    %v4744 = vpack.c.b16 %v4616, %v4612
    %v4745 = vpack.c.b16 %v4617, %v4613
    %v4746 = vpack.c.b16 %v4618, %v4614
    %v4747 = vpack.c.b16 %v4619, %v4615
    %4876 = vmatpush.bf16.msra.mxu0 %v4648
    %4877 = vmatpush.bf16.msra.mxu0 %v4644
    %4878 = vmatpush.bf16.msra.mxu0 %v4640
    %4879 = vmatpush.bf16.msra.mxu0 %v4636
    %4880 = vmatpush.bf16.msra.mxu0 %v4632
    %4881 = vmatpush.bf16.msra.mxu0 %v4628
    %4882 = vmatpush.bf16.msra.mxu0 %v4624
    %4883 = vmatpush.bf16.msra.mxu0 %v4620
    %4884 = vmatmul.bf16.gmra.mxu0 %v4232
    %v4885 = vpop.f32.mrf.mxu0
    %v4886 = vadd.f32 0.0, %v4885
    %v4887 = vpop.f32.mrf.mxu0
    %4888 = vdwg.mxu0
    %4889 = vmatpush.bf16.msra.mxu0 %v4680
    %4890 = vmatpush.bf16.msra.mxu0 %v4676
    %4891 = vmatpush.bf16.msra.mxu0 %v4672
    %4892 = vmatpush.bf16.msra.mxu0 %v4668
    %4893 = vmatpush.bf16.msra.mxu0 %v4664
    %4894 = vmatpush.bf16.msra.mxu0 %v4660
    %4895 = vmatpush.bf16.msra.mxu0 %v4656
    %4896 = vmatpush.bf16.msra.mxu0 %v4652
    %4897 = vmatmul.bf16.gmra.mxu0 %v4233
    %v4898 = vpop.f32.mrf.mxu0
    %v4899 = vadd.f32 %v4886, %v4898
    %v4900 = vpop.f32.mrf.mxu0
    %4901 = vdwg.mxu0
    %4902 = vmatpush.bf16.msra.mxu0 %v4712
    %4903 = vmatpush.bf16.msra.mxu0 %v4708
    %4904 = vmatpush.bf16.msra.mxu0 %v4704
    %4905 = vmatpush.bf16.msra.mxu0 %v4700
    %4906 = vmatpush.bf16.msra.mxu0 %v4696
    %4907 = vmatpush.bf16.msra.mxu0 %v4692
    %4908 = vmatpush.bf16.msra.mxu0 %v4688
    %4909 = vmatpush.bf16.msra.mxu0 %v4684
    %4910 = vmatmul.bf16.gmra.mxu0 %v4234
    %v4911 = vpop.f32.mrf.mxu0
    %v4912 = vadd.f32 %v4899, %v4911
    %v4913 = vpop.f32.mrf.mxu0
    %4914 = vdwg.mxu0
    %4915 = vmatpush.bf16.msra.mxu0 %v4744
    %4916 = vmatpush.bf16.msra.mxu0 %v4740
    %4917 = vmatpush.bf16.msra.mxu0 %v4736
    %4918 = vmatpush.bf16.msra.mxu0 %v4732
    %4919 = vmatpush.bf16.msra.mxu0 %v4728
    %4920 = vmatpush.bf16.msra.mxu0 %v4724
    %4921 = vmatpush.bf16.msra.mxu0 %v4720
    %4922 = vmatpush.bf16.msra.mxu0 %v4716
    %4923 = vmatmul.bf16.gmra.mxu0 %v4235
    %v4924 = vpop.f32.mrf.mxu0
    %v4925 = vadd.f32 %v4912, %v4924
    %v4926 = vpop.f32.mrf.mxu0
    %4927 = vdwg.mxu0
    %4928 = vmatpush.bf16.msra.mxu0 %v4649
    %4929 = vmatpush.bf16.msra.mxu0 %v4645
    %4930 = vmatpush.bf16.msra.mxu0 %v4641
    %4931 = vmatpush.bf16.msra.mxu0 %v4637
    %4932 = vmatpush.bf16.msra.mxu0 %v4633
    %4933 = vmatpush.bf16.msra.mxu0 %v4629
    %4934 = vmatpush.bf16.msra.mxu0 %v4625
    %4935 = vmatpush.bf16.msra.mxu0 %v4621
    %4936 = vmatmul.bf16.gmra.mxu0 %v4232
    %v4937 = vpop.f32.mrf.mxu0
    %v4938 = vadd.f32 0.0, %v4937
    %v4939 = vpop.f32.mrf.mxu0
    %4940 = vdwg.mxu0
    %4941 = vmatpush.bf16.msra.mxu0 %v4681
    %4942 = vmatpush.bf16.msra.mxu0 %v4677
    %4943 = vmatpush.bf16.msra.mxu0 %v4673
    %4944 = vmatpush.bf16.msra.mxu0 %v4669
    %4945 = vmatpush.bf16.msra.mxu0 %v4665
    %4946 = vmatpush.bf16.msra.mxu0 %v4661
    %4947 = vmatpush.bf16.msra.mxu0 %v4657
    %4948 = vmatpush.bf16.msra.mxu0 %v4653
    %4949 = vmatmul.bf16.gmra.mxu0 %v4233
    %v4950 = vpop.f32.mrf.mxu0
    %v4951 = vadd.f32 %v4938, %v4950
    %v4952 = vpop.f32.mrf.mxu0
    %4953 = vdwg.mxu0
    %4954 = vmatpush.bf16.msra.mxu0 %v4713
    %4955 = vmatpush.bf16.msra.mxu0 %v4709
    %4956 = vmatpush.bf16.msra.mxu0 %v4705
    %4957 = vmatpush.bf16.msra.mxu0 %v4701
    %4958 = vmatpush.bf16.msra.mxu0 %v4697
    %4959 = vmatpush.bf16.msra.mxu0 %v4693
    %4960 = vmatpush.bf16.msra.mxu0 %v4689
    %4961 = vmatpush.bf16.msra.mxu0 %v4685
    %4962 = vmatmul.bf16.gmra.mxu0 %v4234
    %v4963 = vpop.f32.mrf.mxu0
    %v4964 = vadd.f32 %v4951, %v4963
    %v4965 = vpop.f32.mrf.mxu0
    %4966 = vdwg.mxu0
    %4967 = vmatpush.bf16.msra.mxu0 %v4745
    %4968 = vmatpush.bf16.msra.mxu0 %v4741
    %4969 = vmatpush.bf16.msra.mxu0 %v4737
    %4970 = vmatpush.bf16.msra.mxu0 %v4733
    %4971 = vmatpush.bf16.msra.mxu0 %v4729
    %4972 = vmatpush.bf16.msra.mxu0 %v4725
    %4973 = vmatpush.bf16.msra.mxu0 %v4721
    %4974 = vmatpush.bf16.msra.mxu0 %v4717
    %4975 = vmatmul.bf16.gmra.mxu0 %v4235
    %v4976 = vpop.f32.mrf.mxu0
    %v4977 = vadd.f32 %v4964, %v4976
    %v4978 = vpop.f32.mrf.mxu0
    %4979 = vdwg.mxu0
    %4980 = vmatpush.bf16.msra.mxu0 %v4650
    %4981 = vmatpush.bf16.msra.mxu0 %v4646
    %4982 = vmatpush.bf16.msra.mxu0 %v4642
    %4983 = vmatpush.bf16.msra.mxu0 %v4638
    %4984 = vmatpush.bf16.msra.mxu0 %v4634
    %4985 = vmatpush.bf16.msra.mxu0 %v4630
    %4986 = vmatpush.bf16.msra.mxu0 %v4626
    %4987 = vmatpush.bf16.msra.mxu0 %v4622
    %4988 = vmatmul.bf16.gmra.mxu0 %v4232
    %v4989 = vpop.f32.mrf.mxu0
    %v4990 = vadd.f32 0.0, %v4989
    %v4991 = vpop.f32.mrf.mxu0
    %4992 = vdwg.mxu0
    %4993 = vmatpush.bf16.msra.mxu0 %v4682
    %4994 = vmatpush.bf16.msra.mxu0 %v4678
    %4995 = vmatpush.bf16.msra.mxu0 %v4674
    %4996 = vmatpush.bf16.msra.mxu0 %v4670
    %4997 = vmatpush.bf16.msra.mxu0 %v4666
    %4998 = vmatpush.bf16.msra.mxu0 %v4662
    %4999 = vmatpush.bf16.msra.mxu0 %v4658
    %5000 = vmatpush.bf16.msra.mxu0 %v4654
    %5001 = vmatmul.bf16.gmra.mxu0 %v4233
    %v5002 = vpop.f32.mrf.mxu0
    %v5003 = vadd.f32 %v4990, %v5002
    %v5004 = vpop.f32.mrf.mxu0
    %5005 = vdwg.mxu0
    %5006 = vmatpush.bf16.msra.mxu0 %v4714
    %5007 = vmatpush.bf16.msra.mxu0 %v4710
    %5008 = vmatpush.bf16.msra.mxu0 %v4706
    %5009 = vmatpush.bf16.msra.mxu0 %v4702
    %5010 = vmatpush.bf16.msra.mxu0 %v4698
    %5011 = vmatpush.bf16.msra.mxu0 %v4694
    %5012 = vmatpush.bf16.msra.mxu0 %v4690
    %5013 = vmatpush.bf16.msra.mxu0 %v4686
    %5014 = vmatmul.bf16.gmra.mxu0 %v4234
    %v5015 = vpop.f32.mrf.mxu0
    %v5016 = vadd.f32 %v5003, %v5015
    %v5017 = vpop.f32.mrf.mxu0
    %5018 = vdwg.mxu0
    %5019 = vmatpush.bf16.msra.mxu0 %v4746
    %5020 = vmatpush.bf16.msra.mxu0 %v4742
    %5021 = vmatpush.bf16.msra.mxu0 %v4738
    %5022 = vmatpush.bf16.msra.mxu0 %v4734
    %5023 = vmatpush.bf16.msra.mxu0 %v4730
    %5024 = vmatpush.bf16.msra.mxu0 %v4726
    %5025 = vmatpush.bf16.msra.mxu0 %v4722
    %5026 = vmatpush.bf16.msra.mxu0 %v4718
    %5027 = vmatmul.bf16.gmra.mxu0 %v4235
    %v5028 = vpop.f32.mrf.mxu0
    %v5029 = vadd.f32 %v5016, %v5028
    %v5030 = vpop.f32.mrf.mxu0
    %5031 = vdwg.mxu0
    %5032 = vmatpush.bf16.msra.mxu0 %v4651
    %5033 = vmatpush.bf16.msra.mxu0 %v4647
    %5034 = vmatpush.bf16.msra.mxu0 %v4643
    %5035 = vmatpush.bf16.msra.mxu0 %v4639
    %5036 = vmatpush.bf16.msra.mxu0 %v4635
    %5037 = vmatpush.bf16.msra.mxu0 %v4631
    %5038 = vmatpush.bf16.msra.mxu0 %v4627
    %5039 = vmatpush.bf16.msra.mxu0 %v4623
    %5040 = vmatmul.bf16.gmra.mxu0 %v4232
    %v5041 = vpop.f32.mrf.mxu0
    %v5042 = vadd.f32 0.0, %v5041
    %v5043 = vpop.f32.mrf.mxu0
    %5044 = vdwg.mxu0
    %5045 = vmatpush.bf16.msra.mxu0 %v4683
    %5046 = vmatpush.bf16.msra.mxu0 %v4679
    %5047 = vmatpush.bf16.msra.mxu0 %v4675
    %5048 = vmatpush.bf16.msra.mxu0 %v4671
    %5049 = vmatpush.bf16.msra.mxu0 %v4667
    %5050 = vmatpush.bf16.msra.mxu0 %v4663
    %5051 = vmatpush.bf16.msra.mxu0 %v4659
    %5052 = vmatpush.bf16.msra.mxu0 %v4655
    %5053 = vmatmul.bf16.gmra.mxu0 %v4233
    %v5054 = vpop.f32.mrf.mxu0
    %v5055 = vadd.f32 %v5042, %v5054
    %v5056 = vpop.f32.mrf.mxu0
    %5057 = vdwg.mxu0
    %5058 = vmatpush.bf16.msra.mxu0 %v4715
    %5059 = vmatpush.bf16.msra.mxu0 %v4711
    %5060 = vmatpush.bf16.msra.mxu0 %v4707
    %5061 = vmatpush.bf16.msra.mxu0 %v4703
    %5062 = vmatpush.bf16.msra.mxu0 %v4699
    %5063 = vmatpush.bf16.msra.mxu0 %v4695
    %5064 = vmatpush.bf16.msra.mxu0 %v4691
    %5065 = vmatpush.bf16.msra.mxu0 %v4687
    %5066 = vmatmul.bf16.gmra.mxu0 %v4234
    %v5067 = vpop.f32.mrf.mxu0
    %v5068 = vadd.f32 %v5055, %v5067
    %v5069 = vpop.f32.mrf.mxu0
    %5070 = vdwg.mxu0
    %5071 = vmatpush.bf16.msra.mxu0 %v4747
    %5072 = vmatpush.bf16.msra.mxu0 %v4743
    %5073 = vmatpush.bf16.msra.mxu0 %v4739
    %5074 = vmatpush.bf16.msra.mxu0 %v4735
    %5075 = vmatpush.bf16.msra.mxu0 %v4731
    %5076 = vmatpush.bf16.msra.mxu0 %v4727
    %5077 = vmatpush.bf16.msra.mxu0 %v4723
    %5078 = vmatpush.bf16.msra.mxu0 %v4719
    %5079 = vmatmul.bf16.gmra.mxu0 %v4235
    %v5080 = vpop.f32.mrf.mxu0
    %v5081 = vadd.f32 %v5068, %v5080
    %v5082 = vpop.f32.mrf.mxu0
    %5083 = vdwg.mxu0
    %v5084 = vpack.c.bf16 %v4977, %v4925
    %v5085 = vpack.c.bf16 %v5081, %v5029
    %v5088 = vunpack.c.l.b16 %v768
    %v5089 = vunpack.c.h.b16 %v768
    %v5090 = vunpack.c.l.b16 %v769
    %v5091 = vunpack.c.h.b16 %v769
    %v5092 = vpack.c.b16 %v5088, %v5088
    %v5093 = vpack.c.b16 %v5089, %v5089
    %v5094 = vpack.c.b16 %v5090, %v5090
    %v5095 = vpack.c.b16 %v5091, %v5091
    %v5097 = vpack.i.b16 %v5092, %v5092
    %v5099 = vperm.slane %v5097, 0
    %v5101 = vpack.i.b16 %v5093, %v5093
    %v5103 = vperm.slane %v5101, 0
    %v5105 = vpack.i.b16 %v5094, %v5094
    %v5107 = vperm.slane %v5105, 0
    %v5109 = vpack.i.b16 %v5095, %v5095
    %v5111 = vperm.slane %v5109, 0
    %v5112 = vunpack.c.l.bf16 %v5084
    %v5113 = vunpack.c.h.bf16 %v5084
    %v5114 = vunpack.c.l.bf16 %v5085
    %v5115 = vunpack.c.h.bf16 %v5085
    %v5116 = vunpack.c.l.bf16 %v5099
    %v5117 = vunpack.c.l.bf16 %v5103
    %v5118 = vunpack.c.l.bf16 %v5107
    %v5119 = vunpack.c.l.bf16 %v5111
    %v5120 = vadd.f32 %v5112, %v5116
    %v5121 = vadd.f32 %v5113, %v5117
    %v5122 = vadd.f32 %v5114, %v5118
    %v5123 = vadd.f32 %v5115, %v5119
    %v5124 = vpack.c.bf16 %v5121, %v5120
    %v5125 = vpack.c.bf16 %v5123, %v5122
    %v5126 = vunpack.c.l.bf16 %v5124
    %v5127 = vunpack.c.h.bf16 %v5124
    %v5128 = vunpack.c.l.bf16 %v5125
    %v5129 = vunpack.c.h.bf16 %v5125
    %v5130 = vmul.f32 %v5126, 0.20019531
    %v5131 = vmul.f32 %v5127, 0.20019531
    %v5132 = vmul.f32 %v5128, 0.20019531
    %v5133 = vmul.f32 %v5129, 0.20019531
    %v5134 = vpack.c.bf16 %v5131, %v5130
    %v5135 = vpack.c.bf16 %v5133, %v5132
    %v5136 = vunpack.c.l.bf16 %v5134
    %v5137 = vunpack.c.h.bf16 %v5134
    %v5138 = vunpack.c.l.bf16 %v5135
    %v5139 = vunpack.c.h.bf16 %v5135
    %v5140 = vmax.f32 %v5126, %v5136
    %v5141 = vmax.f32 %v5127, %v5137
    %v5142 = vmax.f32 %v5128, %v5138
    %v5143 = vmax.f32 %v5129, %v5139
    %v5144 = vpack.c.bf16 %v5141, %v5140
    %v5145 = vpack.c.bf16 %v5143, %v5142
    %v5146 = vunpack.c.l.bf16 %v5144
    %v5147 = vunpack.c.h.bf16 %v5144
    %v5148 = vunpack.c.l.bf16 %v5145
    %v5149 = vunpack.c.h.bf16 %v5145
    %v5151 = vperm.slane %v770, 0
    %v5152 = vperm.slane %v770, 1
    %v5153 = vperm.slane %v770, 2
    %v5154 = vperm.slane %v770, 3
    %v5159 = vmul.f32 %v5146, %v5151
    %v5160 = vmul.f32 %v5147, %v5152
    %v5161 = vmul.f32 %v5148, %v5153
    %v5162 = vmul.f32 %v5149, %v5154
    %v5163 = vadd.f32 %v5159, %v5160
    %v5164 = vadd.f32 %v5163, %v5161
    %v5165 = vadd.f32 %v5164, %v5162
    %5166 = vadd.xlane.f32.xlu0 %v5165
    %v5167 = vpop.xlane.xlu0 %5166
    %v5169 = vperm.slane %v771, 0
    %v5171 = vadd.f32 %v5167, %v5169
    %vm5172 = vcmask 7168
    %5173 = vst.msk [vmem:[%s13] sm:$0xff] %vm5172, %v5171
    // Predicated region
    $region70: #{discriminator_forward.1} parent=1 // pred_check
      _
    $region71: #{discriminator_forward.1} parent=1 // pred_check_branch
      %5175 = sbr.rel (0) target = $region73
    $region72: #{discriminator_forward.1} parent=1 // pred_region
      _
    $region73: #{discriminator_forward.1} parent=1 // pred_fallthru
      _
    // Predicated region
    $region74: #{discriminator_forward.1} parent=1 // pred_check
      _
    $region75: #{discriminator_forward.1} parent=1 // pred_check_branch
      %5177 = sbr.rel (0) target = $region77
    $region76: #{discriminator_forward.1} parent=1 // pred_region
      _
    $region77: #{discriminator_forward.1} parent=1 // pred_fallthru
      _
    %5178 = vsyncpa [#allocation4], 1
    %5179 = vsyncpa [#allocation6], 1
    %5180 = vsyncpa [#allocation9], 1

</llo_original>
